<compile_context>
chip_gen: v6e
topology: v6e:2x2x1
jax: 0.10.0
libtpu: 0.0.40
codegen_flags: <defaults>
</compile_context>

<pallas_src>
import functools

import jax
import jax.numpy as jnp
from jax.experimental import pallas as pl
from jax.experimental.pallas import tpu as pltpu


def _round_up(n, m):
    return ((n + m - 1) // m) * m


def _tanh_dtype():
    """bf16 tanh on chips with a bf16 EUP (v6e/v7x); f32 elsewhere (v5e)."""
    try:
        kind = jax.devices()[0].device_kind.lower()
    except Exception:
        return jnp.float32
    if ("v6" in kind) or ("v7" in kind) or ("tpu7" in kind):
        return jnp.bfloat16
    return jnp.float32


def mlp_kernel(x_ref,
               w1_ref, b1_ref,
               w2_ref, b2_ref,
               w3_ref, b3_ref,
               w4d_ref, b4d_ref,
               o_ref, *, tanh_dtype):
    x = x_ref[...]
    if x.dtype != jnp.bfloat16:          # no-op when the producer sends bf16
        x = x.astype(jnp.bfloat16)

    # Layer 1: (tb,1000) @ (1000,512), bf16 operands, f32 accumulation.
    h = jnp.dot(x, w1_ref[...], preferred_element_type=jnp.float32) + b1_ref[...]
    h = jnp.tanh(h.astype(tanh_dtype)).astype(jnp.bfloat16)
    # Layer 2: (tb,512) @ (512,128)
    h = jnp.dot(h, w2_ref[...], preferred_element_type=jnp.float32) + b2_ref[...]
    h = jnp.tanh(h.astype(tanh_dtype)).astype(jnp.bfloat16)
    # Layer 3: (tb,128) @ (128,64)
    h = jnp.dot(h, w3_ref[...], preferred_element_type=jnp.float32) + b3_ref[...]
    h = jnp.tanh(h.astype(tanh_dtype)).astype(jnp.bfloat16)
    # Layer 4 folded with the 2-class softmax: d = logit1 - logit0.
    d = jnp.dot(h, w4d_ref[...], preferred_element_type=jnp.float32) + b4d_ref[...]
    p1 = jax.nn.sigmoid(d)               # (tb, 1) f32, safe for large |d|
    o_ref[:, 0:1] = 1.0 - p1
    o_ref[:, 1:2] = p1


def filter_forward(x, params):
    """x: (B, 1000) float32 or bfloat16. Returns (B, 2) float32 probabilities."""
    B, F = x.shape
    # Batch tile: multiple of 8 sublanes, up to 512 rows per grid step
    # (128-row tiles sit at ~half the HBM roofline due to per-step overhead).
    tb = min(512, _round_up(B, 8))
    grid = (pl.cdiv(B, tb),)
    kernel = functools.partial(mlp_kernel, tanh_dtype=_tanh_dtype())

    const = lambda i: (0, 0)  # weights/biases: same block every grid step
    weight_args = (params["w1"], params["b1"],
                   params["w2"], params["b2"],
                   params["w3"], params["b3"],
                   params["w4d"], params["b4d"])

    def build_and_call(single_buffer_weights):
        kw = {"pipeline_mode": pl.Buffered(1)} if single_buffer_weights else {}
        in_specs = [pl.BlockSpec((tb, F), lambda i: (i, 0))]
        in_specs += [pl.BlockSpec(w.shape, const, **kw) for w in weight_args]
        return pl.pallas_call(
            kernel,
            out_shape=jax.ShapeDtypeStruct((B, 2), jnp.float32),
            grid=grid,
            in_specs=in_specs,
            out_specs=pl.BlockSpec((tb, 2), lambda i: (i, 0)),
            # NOTE: on v7x megacore the batch split only pays off with >= 2
            # grid steps per core; with a single step it is a no-op.
            compiler_params=pltpu.CompilerParams(
                dimension_semantics=("parallel",)),
        )(x, *weight_args)

    try:
        # Constant-index weight/bias blocks: a single pipeline buffer suffices
        # and frees ~1.2 MiB of VMEM.
        return build_and_call(True)
    except Exception:
        # Fallback for JAX builds without BlockSpec pipeline_mode / Buffered(1).
        return build_and_call(False)


def init_params(key):
    """nn.Linear-style init; weights stored as (in, out) bf16, biases f32."""
    dims = [1000, 512, 128, 64, 2]
    params = {}
    keys = jax.random.split(key, 2 * (len(dims) - 1))
    for i in range(len(dims) - 1):
        fan_in, fan_out = dims[i], dims[i + 1]
        bound = 1.0 / float(fan_in) ** 0.5
        w = jax.random.uniform(keys[2 * i], (fan_in, fan_out), jnp.float32,
                               -bound, bound)
        b = jax.random.uniform(keys[2 * i + 1], (1, fan_out), jnp.float32,
                               -bound, bound)
        params[f"w{i+1}"] = w.astype(jnp.bfloat16)
        params[f"b{i+1}"] = b                      # biases stay f32 (tiny)
    # 2-class softmax == sigmoid of the logit difference: precompute the
    # folded last-layer column (64, 1) and bias difference (1, 1) once.
    w4 = params["w4"].astype(jnp.float32)
    params["w4d"] = (w4[:, 1:2] - w4[:, 0:1]).astype(jnp.bfloat16)
    params["b4d"] = params["b4"][:, 1:2] - params["b4"][:, 0:1]
    return params


def reference_forward(x, params, tanh_dtype=jnp.float32):
    """Pure-JAX reference: bf16 weights / f32 accumulate, full 2-class softmax."""
    def layer(h, w, b):
        return jnp.dot(h.astype(jnp.bfloat16), w,
                       preferred_element_type=jnp.float32) + b

    h = jnp.tanh(layer(x, params["w1"], params["b1"]).astype(tanh_dtype))
    h = jnp.tanh(layer(h, params["w2"], params["b2"]).astype(tanh_dtype))
    h = jnp.tanh(layer(h, params["w3"], params["b3"]).astype(tanh_dtype))
    logits = layer(h, params["w4"], params["b4"])
    return jax.nn.softmax(logits, axis=-1)


if __name__ == "__main__":
    key = jax.random.PRNGKey(0)
    pkey, xkey = jax.random.split(key)
    params = init_params(pkey)

    B = 8
    # Producer emits bf16 so the kernel's x stream is 2 KB/row instead of 4.
    x = jax.random.normal(xkey, (B, 1000), jnp.float32).astype(jnp.bfloat16)

    out = jax.block_until_ready(filter_forward(x, params))
    ref = reference_forward(x, params, tanh_dtype=_tanh_dtype())

    assert out.shape == (B, 2)
    # Tolerance reflects bf16 weights/activations (and bf16 tanh on v6e/v7x);
    # the reference shares that precision regime.
    assert jnp.allclose(out, ref, atol=2e-2, rtol=2e-2), "mismatch vs reference"
    # softmax rows sum to 1 (exact by construction: p0 = 1 - p1)
    assert jnp.allclose(jnp.sum(out, axis=-1), 1.0, atol=1e-5)

    print("KERNEL_OK")
</pallas_src>

<mosaic_0001>
module attributes {stable_mosaic.version = 11 : i64} {
  func.func @mlp_kernel(%arg0: i32, %arg1: memref<8x1000xbf16, #tpu.memory_space<vmem>>, %arg2: memref<1000x512xbf16, #tpu.memory_space<vmem>>, %arg3: memref<1x512xf32, #tpu.memory_space<vmem>>, %arg4: memref<512x128xbf16, #tpu.memory_space<vmem>>, %arg5: memref<1x128xf32, #tpu.memory_space<vmem>>, %arg6: memref<128x64xbf16, #tpu.memory_space<vmem>>, %arg7: memref<1x64xf32, #tpu.memory_space<vmem>>, %arg8: memref<64x1xbf16, #tpu.memory_space<vmem>>, %arg9: memref<1x1xf32, #tpu.memory_space<vmem>>, %arg10: memref<8x2xf32, #tpu.memory_space<vmem>>) attributes {dimension_semantics = [#tpu.dimension_semantics<parallel>], iteration_bounds = array<i64: 1>, scalar_prefetch = 0 : i64, scratch_operands = 0 : i64, tpu.core_type = #tpu.core_type<tc>, window_params = [{transform_indices = @transform_0, window_bounds = array<i64: 8, 1000>}, {pipeline_mode = #tpu.pipeline_mode<synchronous>, transform_indices = @transform_1, window_bounds = array<i64: 1000, 512>}, {pipeline_mode = #tpu.pipeline_mode<synchronous>, transform_indices = @transform_2, window_bounds = array<i64: 1, 512>}, {pipeline_mode = #tpu.pipeline_mode<synchronous>, transform_indices = @transform_3, window_bounds = array<i64: 512, 128>}, {pipeline_mode = #tpu.pipeline_mode<synchronous>, transform_indices = @transform_4, window_bounds = array<i64: 1, 128>}, {pipeline_mode = #tpu.pipeline_mode<synchronous>, transform_indices = @transform_5, window_bounds = array<i64: 128, 64>}, {pipeline_mode = #tpu.pipeline_mode<synchronous>, transform_indices = @transform_6, window_bounds = array<i64: 1, 64>}, {pipeline_mode = #tpu.pipeline_mode<synchronous>, transform_indices = @transform_7, window_bounds = array<i64: 64, 1>}, {pipeline_mode = #tpu.pipeline_mode<synchronous>, transform_indices = @transform_8, window_bounds = array<i64: 1, 1>}, {transform_indices = @transform_9, window_bounds = array<i64: 8, 2>}]} {
    %c0 = arith.constant 0 : index
    %c0_0 = arith.constant 0 : index
    %0 = vector.load %arg1[%c0, %c0_0] : memref<8x1000xbf16, #tpu.memory_space<vmem>>, vector<8x1000xbf16>
    %c0_1 = arith.constant 0 : index
    %c0_2 = arith.constant 0 : index
    %1 = vector.load %arg2[%c0_1, %c0_2] : memref<1000x512xbf16, #tpu.memory_space<vmem>>, vector<1000x512xbf16>
    %cst = arith.constant dense<0.000000e+00> : vector<8x512xf32>
    %2 = tpu.matmul %0, %1, %cst {dimension_numbers = #tpu.dot_dimension_numbers<[1], [0], [0], [1], [0, 0, 1, 1], [], []>} : vector<8x1000xbf16>, vector<1000x512xbf16>, vector<8x512xf32> -> vector<8x512xf32>
    %c0_3 = arith.constant 0 : index
    %c0_4 = arith.constant 0 : index
    %3 = vector.load %arg3[%c0_3, %c0_4] : memref<1x512xf32, #tpu.memory_space<vmem>>, vector<1x512xf32>
    %4 = vector.broadcast %3 : vector<1x512xf32> to vector<8x512xf32>
    %5 = arith.addf %2, %4 : vector<8x512xf32>
    %6 = math.tanh %5 : vector<8x512xf32>
    %7 = arith.truncf %6 : vector<8x512xf32> to vector<8x512xbf16>
    %c0_5 = arith.constant 0 : index
    %c0_6 = arith.constant 0 : index
    %8 = vector.load %arg4[%c0_5, %c0_6] : memref<512x128xbf16, #tpu.memory_space<vmem>>, vector<512x128xbf16>
    %cst_7 = arith.constant dense<0.000000e+00> : vector<8x128xf32>
    %9 = tpu.matmul %7, %8, %cst_7 {dimension_numbers = #tpu.dot_dimension_numbers<[1], [0], [0], [1], [0, 0, 1, 1], [], []>} : vector<8x512xbf16>, vector<512x128xbf16>, vector<8x128xf32> -> vector<8x128xf32>
    %c0_8 = arith.constant 0 : index
    %c0_9 = arith.constant 0 : index
    %10 = vector.load %arg5[%c0_8, %c0_9] : memref<1x128xf32, #tpu.memory_space<vmem>>, vector<1x128xf32>
    %11 = vector.broadcast %10 : vector<1x128xf32> to vector<8x128xf32>
    %12 = arith.addf %9, %11 : vector<8x128xf32>
    %13 = math.tanh %12 : vector<8x128xf32>
    %14 = arith.truncf %13 : vector<8x128xf32> to vector<8x128xbf16>
    %c0_10 = arith.constant 0 : index
    %c0_11 = arith.constant 0 : index
    %15 = vector.load %arg6[%c0_10, %c0_11] : memref<128x64xbf16, #tpu.memory_space<vmem>>, vector<128x64xbf16>
    %cst_12 = arith.constant dense<0.000000e+00> : vector<8x64xf32>
    %16 = tpu.matmul %14, %15, %cst_12 {dimension_numbers = #tpu.dot_dimension_numbers<[1], [0], [0], [1], [0, 0, 1, 1], [], []>} : vector<8x128xbf16>, vector<128x64xbf16>, vector<8x64xf32> -> vector<8x64xf32>
    %c0_13 = arith.constant 0 : index
    %c0_14 = arith.constant 0 : index
    %17 = vector.load %arg7[%c0_13, %c0_14] : memref<1x64xf32, #tpu.memory_space<vmem>>, vector<1x64xf32>
    %18 = vector.broadcast %17 : vector<1x64xf32> to vector<8x64xf32>
    %19 = arith.addf %16, %18 : vector<8x64xf32>
    %20 = math.tanh %19 : vector<8x64xf32>
    %21 = arith.truncf %20 : vector<8x64xf32> to vector<8x64xbf16>
    %c0_15 = arith.constant 0 : index
    %c0_16 = arith.constant 0 : index
    %22 = vector.load %arg8[%c0_15, %c0_16] : memref<64x1xbf16, #tpu.memory_space<vmem>>, vector<64x1xbf16>
    %cst_17 = arith.constant dense<0.000000e+00> : vector<8x1xf32>
    %23 = tpu.matmul %21, %22, %cst_17 {dimension_numbers = #tpu.dot_dimension_numbers<[1], [0], [0], [1], [0, 0, 1, 1], [], []>} : vector<8x64xbf16>, vector<64x1xbf16>, vector<8x1xf32> -> vector<8x1xf32>
    %c0_18 = arith.constant 0 : index
    %c0_19 = arith.constant 0 : index
    %24 = vector.load %arg9[%c0_18, %c0_19] : memref<1x1xf32, #tpu.memory_space<vmem>>, vector<1x1xf32>
    %25 = vector.broadcast %24 : vector<1x1xf32> to vector<8x1xf32>
    %26 = arith.addf %23, %25 : vector<8x1xf32>
    %27 = arith.negf %26 : vector<8x1xf32>
    %28 = math.exp %27 : vector<8x1xf32>
    %cst_20 = arith.constant 1.000000e+00 : f32
    %29 = vector.broadcast %cst_20 : f32 to vector<8x1xf32>
    %30 = arith.addf %29, %28 : vector<8x1xf32>
    %31 = arith.divf %29, %30 : vector<8x1xf32>
    %cst_21 = arith.constant 1.000000e+00 : f32
    %32 = vector.broadcast %cst_21 : f32 to vector<8x1xf32>
    %33 = arith.subf %32, %31 : vector<8x1xf32>
    %c0_22 = arith.constant 0 : index
    %c0_23 = arith.constant 0 : index
    %34 = vector.load %arg10[%c0_22, %c0_23] : memref<8x2xf32, #tpu.memory_space<vmem>>, vector<8x1xf32>
    tpu.vector_store %arg10[%c0_22, %c0_23], %33 {strides = array<i32>} : memref<8x2xf32, #tpu.memory_space<vmem>>, vector<8x1xf32>,
    %c0_24 = arith.constant 0 : index
    %c1 = arith.constant 1 : index
    %35 = vector.load %arg10[%c0_24, %c1] : memref<8x2xf32, #tpu.memory_space<vmem>>, vector<8x1xf32>
    tpu.vector_store %arg10[%c0_24, %c1], %31 {strides = array<i32>} : memref<8x2xf32, #tpu.memory_space<vmem>>, vector<8x1xf32>,
    return
  }
  func.func @transform_0(%arg0: i32) -> (i32, i32) {
    %c0_i32 = arith.constant 0 : i32
    %c0_i32_0 = arith.constant 0 : i32
    return %arg0, %c0_i32 : i32, i32
  }
  func.func @transform_1(%arg0: i32) -> (i32, i32) {
    %c0_i32 = arith.constant 0 : i32
    %c0_i32_0 = arith.constant 0 : i32
    %c0_i32_1 = arith.constant 0 : i32
    return %c0_i32, %c0_i32_0 : i32, i32
  }
  func.func @transform_2(%arg0: i32) -> (i32, i32) {
    %c0_i32 = arith.constant 0 : i32
    %c0_i32_0 = arith.constant 0 : i32
    %c0_i32_1 = arith.constant 0 : i32
    return %c0_i32, %c0_i32_0 : i32, i32
  }
  func.func @transform_3(%arg0: i32) -> (i32, i32) {
    %c0_i32 = arith.constant 0 : i32
    %c0_i32_0 = arith.constant 0 : i32
    %c0_i32_1 = arith.constant 0 : i32
    return %c0_i32, %c0_i32_0 : i32, i32
  }
  func.func @transform_4(%arg0: i32) -> (i32, i32) {
    %c0_i32 = arith.constant 0 : i32
    %c0_i32_0 = arith.constant 0 : i32
    %c0_i32_1 = arith.constant 0 : i32
    return %c0_i32, %c0_i32_0 : i32, i32
  }
  func.func @transform_5(%arg0: i32) -> (i32, i32) {
    %c0_i32 = arith.constant 0 : i32
    %c0_i32_0 = arith.constant 0 : i32
    %c0_i32_1 = arith.constant 0 : i32
    return %c0_i32, %c0_i32_0 : i32, i32
  }
  func.func @transform_6(%arg0: i32) -> (i32, i32) {
    %c0_i32 = arith.constant 0 : i32
    %c0_i32_0 = arith.constant 0 : i32
    %c0_i32_1 = arith.constant 0 : i32
    return %c0_i32, %c0_i32_0 : i32, i32
  }
  func.func @transform_7(%arg0: i32) -> (i32, i32) {
    %c0_i32 = arith.constant 0 : i32
    %c0_i32_0 = arith.constant 0 : i32
    %c0_i32_1 = arith.constant 0 : i32
    return %c0_i32, %c0_i32_0 : i32, i32
  }
  func.func @transform_8(%arg0: i32) -> (i32, i32) {
    %c0_i32 = arith.constant 0 : i32
    %c0_i32_0 = arith.constant 0 : i32
    %c0_i32_1 = arith.constant 0 : i32
    return %c0_i32, %c0_i32_0 : i32, i32
  }
  func.func @transform_9(%arg0: i32) -> (i32, i32) {
    %c0_i32 = arith.constant 0 : i32
    %c0_i32_0 = arith.constant 0 : i32
    return %arg0, %c0_i32 : i32, i32
  }
}

module attributes {stable_mosaic.version = 11 : i64} {
  func.func @mlp_kernel(%arg0: i32, %arg1: memref<8x1000xbf16, #tpu.memory_space<vmem>>, %arg2: memref<1000x512xbf16, #tpu.memory_space<vmem>>, %arg3: memref<1x512xf32, #tpu.memory_space<vmem>>, %arg4: memref<512x128xbf16, #tpu.memory_space<vmem>>, %arg5: memref<1x128xf32, #tpu.memory_space<vmem>>, %arg6: memref<128x64xbf16, #tpu.memory_space<vmem>>, %arg7: memref<1x64xf32, #tpu.memory_space<vmem>>, %arg8: memref<64x1xbf16, #tpu.memory_space<vmem>>, %arg9: memref<1x1xf32, #tpu.memory_space<vmem>>, %arg10: memref<8x2xf32, #tpu.memory_space<vmem>>) attributes {dimension_semantics = [#tpu.dimension_semantics<parallel>], iteration_bounds = array<i64: 1>, scalar_prefetch = 0 : i64, scratch_operands = 0 : i64, tpu.core_type = #tpu.core_type<tc>, window_params = [{transform_indices = @transform_0, window_bounds = array<i64: 8, 1000>}, {pipeline_mode = #tpu.pipeline_mode<synchronous>, transform_indices = @transform_1, window_bounds = array<i64: 1000, 512>}, {pipeline_mode = #tpu.pipeline_mode<synchronous>, transform_indices = @transform_2, window_bounds = array<i64: 1, 512>}, {pipeline_mode = #tpu.pipeline_mode<synchronous>, transform_indices = @transform_3, window_bounds = array<i64: 512, 128>}, {pipeline_mode = #tpu.pipeline_mode<synchronous>, transform_indices = @transform_4, window_bounds = array<i64: 1, 128>}, {pipeline_mode = #tpu.pipeline_mode<synchronous>, transform_indices = @transform_5, window_bounds = array<i64: 128, 64>}, {pipeline_mode = #tpu.pipeline_mode<synchronous>, transform_indices = @transform_6, window_bounds = array<i64: 1, 64>}, {pipeline_mode = #tpu.pipeline_mode<synchronous>, transform_indices = @transform_7, window_bounds = array<i64: 64, 1>}, {pipeline_mode = #tpu.pipeline_mode<synchronous>, transform_indices = @transform_8, window_bounds = array<i64: 1, 1>}, {transform_indices = @transform_9, window_bounds = array<i64: 8, 2>}]} {
    %c0 = arith.constant 0 : index
    %c0_0 = arith.constant 0 : index
    %0 = vector.load %arg1[%c0, %c0_0] : memref<8x1000xbf16, #tpu.memory_space<vmem>>, vector<8x1000xbf16>
    %c0_1 = arith.constant 0 : index
    %c0_2 = arith.constant 0 : index
    %1 = vector.load %arg2[%c0_1, %c0_2] : memref<1000x512xbf16, #tpu.memory_space<vmem>>, vector<1000x512xbf16>
    %cst = arith.constant dense<0.000000e+00> : vector<8x512xf32>
    %2 = tpu.matmul %0, %1, %cst {dimension_numbers = #tpu.dot_dimension_numbers<[1], [0], [0], [1], [0, 0, 1, 1], [], []>} : vector<8x1000xbf16>, vector<1000x512xbf16>, vector<8x512xf32> -> vector<8x512xf32>
    %c0_3 = arith.constant 0 : index
    %c0_4 = arith.constant 0 : index
    %3 = vector.load %arg3[%c0_3, %c0_4] : memref<1x512xf32, #tpu.memory_space<vmem>>, vector<1x512xf32>
    %4 = vector.broadcast %3 : vector<1x512xf32> to vector<8x512xf32>
    %5 = arith.addf %2, %4 : vector<8x512xf32>
    %6 = math.tanh %5 : vector<8x512xf32>
    %7 = arith.truncf %6 : vector<8x512xf32> to vector<8x512xbf16>
    %c0_5 = arith.constant 0 : index
    %c0_6 = arith.constant 0 : index
    %8 = vector.load %arg4[%c0_5, %c0_6] : memref<512x128xbf16, #tpu.memory_space<vmem>>, vector<512x128xbf16>
    %cst_7 = arith.constant dense<0.000000e+00> : vector<8x128xf32>
    %9 = tpu.matmul %7, %8, %cst_7 {dimension_numbers = #tpu.dot_dimension_numbers<[1], [0], [0], [1], [0, 0, 1, 1], [], []>} : vector<8x512xbf16>, vector<512x128xbf16>, vector<8x128xf32> -> vector<8x128xf32>
    %c0_8 = arith.constant 0 : index
    %c0_9 = arith.constant 0 : index
    %10 = vector.load %arg5[%c0_8, %c0_9] : memref<1x128xf32, #tpu.memory_space<vmem>>, vector<1x128xf32>
    %11 = vector.broadcast %10 : vector<1x128xf32> to vector<8x128xf32>
    %12 = arith.addf %9, %11 : vector<8x128xf32>
    %13 = math.tanh %12 : vector<8x128xf32>
    %14 = arith.truncf %13 : vector<8x128xf32> to vector<8x128xbf16>
    %c0_10 = arith.constant 0 : index
    %c0_11 = arith.constant 0 : index
    %15 = vector.load %arg6[%c0_10, %c0_11] : memref<128x64xbf16, #tpu.memory_space<vmem>>, vector<128x64xbf16>
    %cst_12 = arith.constant dense<0.000000e+00> : vector<8x64xf32>
    %16 = tpu.matmul %14, %15, %cst_12 {dimension_numbers = #tpu.dot_dimension_numbers<[1], [0], [0], [1], [0, 0, 1, 1], [], []>} : vector<8x128xbf16>, vector<128x64xbf16>, vector<8x64xf32> -> vector<8x64xf32>
    %c0_13 = arith.constant 0 : index
    %c0_14 = arith.constant 0 : index
    %17 = vector.load %arg7[%c0_13, %c0_14] : memref<1x64xf32, #tpu.memory_space<vmem>>, vector<1x64xf32>
    %18 = vector.broadcast %17 : vector<1x64xf32> to vector<8x64xf32>
    %19 = arith.addf %16, %18 : vector<8x64xf32>
    %20 = math.tanh %19 : vector<8x64xf32>
    %21 = arith.truncf %20 : vector<8x64xf32> to vector<8x64xbf16>
    %c0_15 = arith.constant 0 : index
    %c0_16 = arith.constant 0 : index
    %22 = vector.load %arg8[%c0_15, %c0_16] : memref<64x1xbf16, #tpu.memory_space<vmem>>, vector<64x1xbf16>
    %cst_17 = arith.constant dense<0.000000e+00> : vector<8x1xf32>
    %23 = tpu.matmul %21, %22, %cst_17 {dimension_numbers = #tpu.dot_dimension_numbers<[1], [0], [0], [1], [0, 0, 1, 1], [], []>} : vector<8x64xbf16>, vector<64x1xbf16>, vector<8x1xf32> -> vector<8x1xf32>
    %c0_18 = arith.constant 0 : index
    %c0_19 = arith.constant 0 : index
    %24 = vector.load %arg9[%c0_18, %c0_19] : memref<1x1xf32, #tpu.memory_space<vmem>>, vector<1x1xf32>
    %25 = vector.broadcast %24 : vector<1x1xf32> to vector<8x1xf32>
    %26 = arith.addf %23, %25 : vector<8x1xf32>
    %27 = arith.negf %26 : vector<8x1xf32>
    %28 = math.exp %27 : vector<8x1xf32>
    %cst_20 = arith.constant 1.000000e+00 : f32
    %29 = vector.broadcast %cst_20 : f32 to vector<8x1xf32>
    %30 = arith.addf %29, %28 : vector<8x1xf32>
    %31 = arith.divf %29, %30 : vector<8x1xf32>
    %cst_21 = arith.constant 1.000000e+00 : f32
    %32 = vector.broadcast %cst_21 : f32 to vector<8x1xf32>
    %33 = arith.subf %32, %31 : vector<8x1xf32>
    %c0_22 = arith.constant 0 : index
    %c0_23 = arith.constant 0 : index
    %34 = vector.load %arg10[%c0_22, %c0_23] : memref<8x2xf32, #tpu.memory_space<vmem>>, vector<8x1xf32>
    tpu.vector_store %arg10[%c0_22, %c0_23], %33 {strides = array<i32>} : memref<8x2xf32, #tpu.memory_space<vmem>>, vector<8x1xf32>,
    %c0_24 = arith.constant 0 : index
    %c1 = arith.constant 1 : index
    %35 = vector.load %arg10[%c0_24, %c1] : memref<8x2xf32, #tpu.memory_space<vmem>>, vector<8x1xf32>
    tpu.vector_store %arg10[%c0_24, %c1], %31 {strides = array<i32>} : memref<8x2xf32, #tpu.memory_space<vmem>>, vector<8x1xf32>,
    return
  }
  func.func @transform_0(%arg0: i32) -> (i32, i32) {
    %c0_i32 = arith.constant 0 : i32
    %c0_i32_0 = arith.constant 0 : i32
    return %arg0, %c0_i32 : i32, i32
  }
  func.func @transform_1(%arg0: i32) -> (i32, i32) {
    %c0_i32 = arith.constant 0 : i32
    %c0_i32_0 = arith.constant 0 : i32
    %c0_i32_1 = arith.constant 0 : i32
    return %c0_i32, %c0_i32_0 : i32, i32
  }
  func.func @transform_2(%arg0: i32) -> (i32, i32) {
    %c0_i32 = arith.constant 0 : i32
    %c0_i32_0 = arith.constant 0 : i32
    %c0_i32_1 = arith.constant 0 : i32
    return %c0_i32, %c0_i32_0 : i32, i32
  }
  func.func @transform_3(%arg0: i32) -> (i32, i32) {
    %c0_i32 = arith.constant 0 : i32
    %c0_i32_0 = arith.constant 0 : i32
    %c0_i32_1 = arith.constant 0 : i32
    return %c0_i32, %c0_i32_0 : i32, i32
  }
  func.func @transform_4(%arg0: i32) -> (i32, i32) {
    %c0_i32 = arith.constant 0 : i32
    %c0_i32_0 = arith.constant 0 : i32
    %c0_i32_1 = arith.constant 0 : i32
    return %c0_i32, %c0_i32_0 : i32, i32
  }
  func.func @transform_5(%arg0: i32) -> (i32, i32) {
    %c0_i32 = arith.constant 0 : i32
    %c0_i32_0 = arith.constant 0 : i32
    %c0_i32_1 = arith.constant 0 : i32
    return %c0_i32, %c0_i32_0 : i32, i32
  }
  func.func @transform_6(%arg0: i32) -> (i32, i32) {
    %c0_i32 = arith.constant 0 : i32
    %c0_i32_0 = arith.constant 0 : i32
    %c0_i32_1 = arith.constant 0 : i32
    return %c0_i32, %c0_i32_0 : i32, i32
  }
  func.func @transform_7(%arg0: i32) -> (i32, i32) {
    %c0_i32 = arith.constant 0 : i32
    %c0_i32_0 = arith.constant 0 : i32
    %c0_i32_1 = arith.constant 0 : i32
    return %c0_i32, %c0_i32_0 : i32, i32
  }
  func.func @transform_8(%arg0: i32) -> (i32, i32) {
    %c0_i32 = arith.constant 0 : i32
    %c0_i32_0 = arith.constant 0 : i32
    %c0_i32_1 = arith.constant 0 : i32
    return %c0_i32, %c0_i32_0 : i32, i32
  }
  func.func @transform_9(%arg0: i32) -> (i32, i32) {
    %c0_i32 = arith.constant 0 : i32
    %c0_i32_0 = arith.constant 0 : i32
    return %arg0, %c0_i32 : i32, i32
  }
}

</mosaic_0001>

<llo_original>
// kernel: tpu_custom_call.1
$region0: #{tpu_custom_call.1}
  #allocation0 [shape = 'u32[]', space=smem, size = 0x4, offset = 0x4, fixed_abs, tag = 'smem constant byte address 0x4 - core index']
  #allocation1 [shape = 'u32[144,128]{1,0:T(1,128)}', space=vmem, size = 0x12000, scoped, tag = 'internal scratch']
  #allocation2 [shape = 'f32[1,1]{1,0:T(1,128)S(1)}', space=vmem, size = 0x200, scoped, tag = 'scoped memory for tpu_custom_call.1']
  %s0 = inlined_call_operand.vmem [shape: bf16[8,1000], index: 0, kind: input, shape index: {}]
  %s1 = inlined_call_operand.hbm [shape: bf16[1000,512], index: 1, kind: input, shape index: {}]
  %s2 = inlined_call_operand.vmem [shape: f32[1,512], index: 2, kind: input, shape index: {}]
  %s3 = inlined_call_operand.hbm [shape: bf16[512,128], index: 3, kind: input, shape index: {}]
  %s4 = inlined_call_operand.vmem [shape: f32[1,128], index: 4, kind: input, shape index: {}]
  %s5 = inlined_call_operand.vmem [shape: bf16[128,64], index: 5, kind: input, shape index: {}]
  %s6 = inlined_call_operand.vmem [shape: f32[1,64], index: 6, kind: input, shape index: {}]
  %s7 = inlined_call_operand.vmem [shape: bf16[64,1], index: 7, kind: input, shape index: {}]
  %s8 = inlined_call_operand.<no memory space> [shape: f32[1,1], index: 8, kind: input, shape index: {}]
  %s9 = inlined_call_operand.vmem [shape: f32[8,2], index: 9, kind: output, shape index: {}]
  %s10 = sld [smem:[#allocation0]]
  $region54: #{tpu_custom_call.1} parent=0
    _
  %s12 = ssub.s32 1, %s10
  %s13 = scalar_select 0, %s12, %s10
  %v14 = vstv %s8
  %15 = vst [vmem:[#allocation2] sm:$0x1] %v14
  $region1: #{tpu_custom_call.1} parent=0
    #allocation3 [shape = 'u8[1024000]{0}', space=vmem, size = 0xfa000, scoped, tag = 'input window, operand 1, single buffered']
    #allocation4 [shape = 's32[1]{0}', space=sflag, size = 0x4, scoped, tag = 'scoped memory for tpu_custom_call.1']
    #allocation5 [shape = 'u8[131072]{0}', space=vmem, size = 0x20000, scoped, tag = 'input window, operand 3, single buffered']
    #allocation6 [shape = 's32[1]{0}', space=sflag, size = 0x4, scoped, tag = 'scoped memory for tpu_custom_call.1']
    %16 = vsyncpa [#allocation4], 0
    %17 = vsyncpa [#allocation6], 0
    // Predicated region
    $region2: #{tpu_custom_call.1} parent=1 // pred_check
      _
    $region3: #{tpu_custom_call.1} parent=1 // pred_check_branch
      %19 = sbr.rel (0) target = $region5
    $region4: #{tpu_custom_call.1} parent=1 // pred_region
      _
    $region5: #{tpu_custom_call.1} parent=1 // pred_fallthru
      _
    // Predicated region
    $region6: #{tpu_custom_call.1} parent=1 // pred_check
      _
    $region7: #{tpu_custom_call.1} parent=1 // pred_check_branch
      %21 = sbr.rel (0) target = $region9
    $region8: #{tpu_custom_call.1} parent=1 // pred_region
      %s23 = ssub.s32 32000, 32000
      %24 = vsyncadd [#allocation4], %s23
      %s25 = sshll.u32 [#allocation3], 4
      %s26 = int_to_ptr.vmem [resolvable:$true] %s25
      %31 = dma.hbm_to_vmem [thread:$0]  %s1, 32000, %s26, [#allocation4], 256, 256, 16
    $region9: #{tpu_custom_call.1} parent=1 // pred_fallthru
      _
    // Predicated region
    $region10: #{tpu_custom_call.1} parent=1 // pred_check
      _
    $region11: #{tpu_custom_call.1} parent=1 // pred_check_branch
      %33 = sbr.rel (0) target = $region13
    $region12: #{tpu_custom_call.1} parent=1 // pred_region
      _
    $region13: #{tpu_custom_call.1} parent=1 // pred_fallthru
      _
    // Predicated region
    $region14: #{tpu_custom_call.1} parent=1 // pred_check
      _
    $region15: #{tpu_custom_call.1} parent=1 // pred_check_branch
      %35 = sbr.rel (0) target = $region17
    $region16: #{tpu_custom_call.1} parent=1 // pred_region
      %s37 = ssub.s32 4096, 4096
      %38 = vsyncadd [#allocation6], %s37
      %s39 = sshll.u32 [#allocation5], 4
      %s40 = int_to_ptr.vmem [resolvable:$true] %s39
      %45 = dma.hbm_to_vmem [thread:$0]  %s3, 4096, %s40, [#allocation6], 64, 64, 4
    $region17: #{tpu_custom_call.1} parent=1 // pred_fallthru
      _
    // Predicated region
    $region18: #{tpu_custom_call.1} parent=1 // pred_check
      _
    $region19: #{tpu_custom_call.1} parent=1 // pred_check_branch
      %47 = sbr.rel (0) target = $region21
    $region20: #{tpu_custom_call.1} parent=1 // pred_region
      _
    $region21: #{tpu_custom_call.1} parent=1 // pred_fallthru
      _
    // Predicated region
    $region22: #{tpu_custom_call.1} parent=1 // pred_check
      _
    $region23: #{tpu_custom_call.1} parent=1 // pred_check_branch
      %49 = sbr.rel (0) target = $region25
    $region24: #{tpu_custom_call.1} parent=1 // pred_region
      _
    $region25: #{tpu_custom_call.1} parent=1 // pred_fallthru
      _
    // Predicated region
    $region26: #{tpu_custom_call.1} parent=1 // pred_check
      _
    $region27: #{tpu_custom_call.1} parent=1 // pred_check_branch
      %51 = sbr.rel (0) target = $region29
    $region28: #{tpu_custom_call.1} parent=1 // pred_region
      _
    $region29: #{tpu_custom_call.1} parent=1 // pred_fallthru
      _
    // Predicated region
    $region30: #{tpu_custom_call.1} parent=1 // pred_check
      _
    $region31: #{tpu_custom_call.1} parent=1 // pred_check_branch
      %53 = sbr.rel (0) target = $region33
    $region32: #{tpu_custom_call.1} parent=1 // pred_region
      _
    $region33: #{tpu_custom_call.1} parent=1 // pred_fallthru
      _
    // Predicated region
    $region34: #{tpu_custom_call.1} parent=1 // pred_check
      _
    $region35: #{tpu_custom_call.1} parent=1 // pred_check_branch
      %55 = sbr.rel (0) target = $region37
    $region36: #{tpu_custom_call.1} parent=1 // pred_region
      _
    $region37: #{tpu_custom_call.1} parent=1 // pred_fallthru
      _
    // Predicated region
    $region38: #{tpu_custom_call.1} parent=1 // pred_check
      _
    $region39: #{tpu_custom_call.1} parent=1 // pred_check_branch
      %57 = sbr.rel (0) target = $region41
    $region40: #{tpu_custom_call.1} parent=1 // pred_region
      %58 = dma.done [#allocation4], 32000
    $region41: #{tpu_custom_call.1} parent=1 // pred_fallthru
      _
    // Predicated region
    $region42: #{tpu_custom_call.1} parent=1 // pred_check
      _
    $region43: #{tpu_custom_call.1} parent=1 // pred_check_branch
      %60 = sbr.rel (0) target = $region45
    $region44: #{tpu_custom_call.1} parent=1 // pred_region
      %61 = dma.done [#allocation6], 4096
    $region45: #{tpu_custom_call.1} parent=1 // pred_fallthru
      _
    %v63 = vld [vmem:[%s0] sm:$0xff]
    %v64 = vld [vmem:[%s0 + $0x8] sm:$0xff]
    %v65 = vld [vmem:[%s0 + $0x10] sm:$0xff]
    %v66 = vld [vmem:[%s0 + $0x18] sm:$0xff]
    %v67 = vld [vmem:[#allocation3] sm:$0xff]
    %v68 = vld [vmem:[#allocation3 + $0x8] sm:$0xff]
    %v69 = vld [vmem:[#allocation3 + $0x10] sm:$0xff]
    %v70 = vld [vmem:[#allocation3 + $0x18] sm:$0xff]
    %v71 = vld [vmem:[#allocation3 + $0x20] sm:$0xff]
    %v72 = vld [vmem:[#allocation3 + $0x28] sm:$0xff]
    %v73 = vld [vmem:[#allocation3 + $0x30] sm:$0xff]
    %v74 = vld [vmem:[#allocation3 + $0x38] sm:$0xff]
    %v75 = vld [vmem:[#allocation3 + $0x40] sm:$0xff]
    %v76 = vld [vmem:[#allocation3 + $0x48] sm:$0xff]
    %v77 = vld [vmem:[#allocation3 + $0x50] sm:$0xff]
    %v78 = vld [vmem:[#allocation3 + $0x58] sm:$0xff]
    %v79 = vld [vmem:[#allocation3 + $0x60] sm:$0xff]
    %v80 = vld [vmem:[#allocation3 + $0x68] sm:$0xff]
    %v81 = vld [vmem:[#allocation3 + $0x70] sm:$0xff]
    %v82 = vld [vmem:[#allocation3 + $0x78] sm:$0xff]
    %v83 = vld [vmem:[#allocation3 + $0x80] sm:$0xff]
    %v84 = vld [vmem:[#allocation3 + $0x88] sm:$0xff]
    %v85 = vld [vmem:[#allocation3 + $0x90] sm:$0xff]
    %v86 = vld [vmem:[#allocation3 + $0x98] sm:$0xff]
    %v87 = vld [vmem:[#allocation3 + $0xa0] sm:$0xff]
    %v88 = vld [vmem:[#allocation3 + $0xa8] sm:$0xff]
    %v89 = vld [vmem:[#allocation3 + $0xb0] sm:$0xff]
    %v90 = vld [vmem:[#allocation3 + $0xb8] sm:$0xff]
    %v91 = vld [vmem:[#allocation3 + $0xc0] sm:$0xff]
    %v92 = vld [vmem:[#allocation3 + $0xc8] sm:$0xff]
    %v93 = vld [vmem:[#allocation3 + $0xd0] sm:$0xff]
    %v94 = vld [vmem:[#allocation3 + $0xd8] sm:$0xff]
    %v95 = vld [vmem:[#allocation3 + $0xe0] sm:$0xff]
    %v96 = vld [vmem:[#allocation3 + $0xe8] sm:$0xff]
    %v97 = vld [vmem:[#allocation3 + $0xf0] sm:$0xff]
    %v98 = vld [vmem:[#allocation3 + $0xf8] sm:$0xff]
    %v99 = vld [vmem:[#allocation3 + $0x100] sm:$0xff]
    %v100 = vld [vmem:[#allocation3 + $0x108] sm:$0xff]
    %v101 = vld [vmem:[#allocation3 + $0x110] sm:$0xff]
    %v102 = vld [vmem:[#allocation3 + $0x118] sm:$0xff]
    %v103 = vld [vmem:[#allocation3 + $0x120] sm:$0xff]
    %v104 = vld [vmem:[#allocation3 + $0x128] sm:$0xff]
    %v105 = vld [vmem:[#allocation3 + $0x130] sm:$0xff]
    %v106 = vld [vmem:[#allocation3 + $0x138] sm:$0xff]
    %v107 = vld [vmem:[#allocation3 + $0x140] sm:$0xff]
    %v108 = vld [vmem:[#allocation3 + $0x148] sm:$0xff]
    %v109 = vld [vmem:[#allocation3 + $0x150] sm:$0xff]
    %v110 = vld [vmem:[#allocation3 + $0x158] sm:$0xff]
    %v111 = vld [vmem:[#allocation3 + $0x160] sm:$0xff]
    %v112 = vld [vmem:[#allocation3 + $0x168] sm:$0xff]
    %v113 = vld [vmem:[#allocation3 + $0x170] sm:$0xff]
    %v114 = vld [vmem:[#allocation3 + $0x178] sm:$0xff]
    %v115 = vld [vmem:[#allocation3 + $0x180] sm:$0xff]
    %v116 = vld [vmem:[#allocation3 + $0x188] sm:$0xff]
    %v117 = vld [vmem:[#allocation3 + $0x190] sm:$0xff]
    %v118 = vld [vmem:[#allocation3 + $0x198] sm:$0xff]
    %v119 = vld [vmem:[#allocation3 + $0x1a0] sm:$0xff]
    %v120 = vld [vmem:[#allocation3 + $0x1a8] sm:$0xff]
    %v121 = vld [vmem:[#allocation3 + $0x1b0] sm:$0xff]
    %v122 = vld [vmem:[#allocation3 + $0x1b8] sm:$0xff]
    %v123 = vld [vmem:[#allocation3 + $0x1c0] sm:$0xff]
    %v124 = vld [vmem:[#allocation3 + $0x1c8] sm:$0xff]
    %v125 = vld [vmem:[#allocation3 + $0x1d0] sm:$0xff]
    %v126 = vld [vmem:[#allocation3 + $0x1d8] sm:$0xff]
    %v127 = vld [vmem:[#allocation3 + $0x1e0] sm:$0xff]
    %v128 = vld [vmem:[#allocation3 + $0x1e8] sm:$0xff]
    %v129 = vld [vmem:[#allocation3 + $0x1f0] sm:$0xff]
    %v130 = vld [vmem:[#allocation3 + $0x1f8] sm:$0xff]
    %v131 = vld [vmem:[#allocation3 + $0x200] sm:$0xff]
    %v132 = vld [vmem:[#allocation3 + $0x208] sm:$0xff]
    %v133 = vld [vmem:[#allocation3 + $0x210] sm:$0xff]
    %v134 = vld [vmem:[#allocation3 + $0x218] sm:$0xff]
    %v135 = vld [vmem:[#allocation3 + $0x220] sm:$0xff]
    %v136 = vld [vmem:[#allocation3 + $0x228] sm:$0xff]
    %v137 = vld [vmem:[#allocation3 + $0x230] sm:$0xff]
    %v138 = vld [vmem:[#allocation3 + $0x238] sm:$0xff]
    %v139 = vld [vmem:[#allocation3 + $0x240] sm:$0xff]
    %v140 = vld [vmem:[#allocation3 + $0x248] sm:$0xff]
    %v141 = vld [vmem:[#allocation3 + $0x250] sm:$0xff]
    %v142 = vld [vmem:[#allocation3 + $0x258] sm:$0xff]
    %v143 = vld [vmem:[#allocation3 + $0x260] sm:$0xff]
    %v144 = vld [vmem:[#allocation3 + $0x268] sm:$0xff]
    %v145 = vld [vmem:[#allocation3 + $0x270] sm:$0xff]
    %v146 = vld [vmem:[#allocation3 + $0x278] sm:$0xff]
    %v147 = vld [vmem:[#allocation3 + $0x280] sm:$0xff]
    %v148 = vld [vmem:[#allocation3 + $0x288] sm:$0xff]
    %v149 = vld [vmem:[#allocation3 + $0x290] sm:$0xff]
    %v150 = vld [vmem:[#allocation3 + $0x298] sm:$0xff]
    %v151 = vld [vmem:[#allocation3 + $0x2a0] sm:$0xff]
    %v152 = vld [vmem:[#allocation3 + $0x2a8] sm:$0xff]
    %v153 = vld [vmem:[#allocation3 + $0x2b0] sm:$0xff]
    %v154 = vld [vmem:[#allocation3 + $0x2b8] sm:$0xff]
    %v155 = vld [vmem:[#allocation3 + $0x2c0] sm:$0xff]
    %v156 = vld [vmem:[#allocation3 + $0x2c8] sm:$0xff]
    %v157 = vld [vmem:[#allocation3 + $0x2d0] sm:$0xff]
    %v158 = vld [vmem:[#allocation3 + $0x2d8] sm:$0xff]
    %v159 = vld [vmem:[#allocation3 + $0x2e0] sm:$0xff]
    %v160 = vld [vmem:[#allocation3 + $0x2e8] sm:$0xff]
    %v161 = vld [vmem:[#allocation3 + $0x2f0] sm:$0xff]
    %v162 = vld [vmem:[#allocation3 + $0x2f8] sm:$0xff]
    %v163 = vld [vmem:[#allocation3 + $0x300] sm:$0xff]
    %v164 = vld [vmem:[#allocation3 + $0x308] sm:$0xff]
    %v165 = vld [vmem:[#allocation3 + $0x310] sm:$0xff]
    %v166 = vld [vmem:[#allocation3 + $0x318] sm:$0xff]
    %v167 = vld [vmem:[#allocation3 + $0x320] sm:$0xff]
    %v168 = vld [vmem:[#allocation3 + $0x328] sm:$0xff]
    %v169 = vld [vmem:[#allocation3 + $0x330] sm:$0xff]
    %v170 = vld [vmem:[#allocation3 + $0x338] sm:$0xff]
    %v171 = vld [vmem:[#allocation3 + $0x340] sm:$0xff]
    %v172 = vld [vmem:[#allocation3 + $0x348] sm:$0xff]
    %v173 = vld [vmem:[#allocation3 + $0x350] sm:$0xff]
    %v174 = vld [vmem:[#allocation3 + $0x358] sm:$0xff]
    %v175 = vld [vmem:[#allocation3 + $0x360] sm:$0xff]
    %v176 = vld [vmem:[#allocation3 + $0x368] sm:$0xff]
    %v177 = vld [vmem:[#allocation3 + $0x370] sm:$0xff]
    %v178 = vld [vmem:[#allocation3 + $0x378] sm:$0xff]
    %v179 = vld [vmem:[#allocation3 + $0x380] sm:$0xff]
    %v180 = vld [vmem:[#allocation3 + $0x388] sm:$0xff]
    %v181 = vld [vmem:[#allocation3 + $0x390] sm:$0xff]
    %v182 = vld [vmem:[#allocation3 + $0x398] sm:$0xff]
    %v183 = vld [vmem:[#allocation3 + $0x3a0] sm:$0xff]
    %v184 = vld [vmem:[#allocation3 + $0x3a8] sm:$0xff]
    %v185 = vld [vmem:[#allocation3 + $0x3b0] sm:$0xff]
    %v186 = vld [vmem:[#allocation3 + $0x3b8] sm:$0xff]
    %v187 = vld [vmem:[#allocation3 + $0x3c0] sm:$0xff]
    %v188 = vld [vmem:[#allocation3 + $0x3c8] sm:$0xff]
    %v189 = vld [vmem:[#allocation3 + $0x3d0] sm:$0xff]
    %v190 = vld [vmem:[#allocation3 + $0x3d8] sm:$0xff]
    %v191 = vld [vmem:[#allocation3 + $0x3e0] sm:$0xff]
    %v192 = vld [vmem:[#allocation3 + $0x3e8] sm:$0xff]
    %v193 = vld [vmem:[#allocation3 + $0x3f0] sm:$0xff]
    %v194 = vld [vmem:[#allocation3 + $0x3f8] sm:$0xff]
    %v195 = vld [vmem:[#allocation3 + $0x400] sm:$0xff]
    %v196 = vld [vmem:[#allocation3 + $0x408] sm:$0xff]
    %v197 = vld [vmem:[#allocation3 + $0x410] sm:$0xff]
    %v198 = vld [vmem:[#allocation3 + $0x418] sm:$0xff]
    %v199 = vld [vmem:[#allocation3 + $0x420] sm:$0xff]
    %v200 = vld [vmem:[#allocation3 + $0x428] sm:$0xff]
    %v201 = vld [vmem:[#allocation3 + $0x430] sm:$0xff]
    %v202 = vld [vmem:[#allocation3 + $0x438] sm:$0xff]
    %v203 = vld [vmem:[#allocation3 + $0x440] sm:$0xff]
    %v204 = vld [vmem:[#allocation3 + $0x448] sm:$0xff]
    %v205 = vld [vmem:[#allocation3 + $0x450] sm:$0xff]
    %v206 = vld [vmem:[#allocation3 + $0x458] sm:$0xff]
    %v207 = vld [vmem:[#allocation3 + $0x460] sm:$0xff]
    %v208 = vld [vmem:[#allocation3 + $0x468] sm:$0xff]
    %v209 = vld [vmem:[#allocation3 + $0x470] sm:$0xff]
    %v210 = vld [vmem:[#allocation3 + $0x478] sm:$0xff]
    %v211 = vld [vmem:[#allocation3 + $0x480] sm:$0xff]
    %v212 = vld [vmem:[#allocation3 + $0x488] sm:$0xff]
    %v213 = vld [vmem:[#allocation3 + $0x490] sm:$0xff]
    %v214 = vld [vmem:[#allocation3 + $0x498] sm:$0xff]
    %v215 = vld [vmem:[#allocation3 + $0x4a0] sm:$0xff]
    %v216 = vld [vmem:[#allocation3 + $0x4a8] sm:$0xff]
    %v217 = vld [vmem:[#allocation3 + $0x4b0] sm:$0xff]
    %v218 = vld [vmem:[#allocation3 + $0x4b8] sm:$0xff]
    %v219 = vld [vmem:[#allocation3 + $0x4c0] sm:$0xff]
    %v220 = vld [vmem:[#allocation3 + $0x4c8] sm:$0xff]
    %v221 = vld [vmem:[#allocation3 + $0x4d0] sm:$0xff]
    %v222 = vld [vmem:[#allocation3 + $0x4d8] sm:$0xff]
    %v223 = vld [vmem:[#allocation3 + $0x4e0] sm:$0xff]
    %v224 = vld [vmem:[#allocation3 + $0x4e8] sm:$0xff]
    %v225 = vld [vmem:[#allocation3 + $0x4f0] sm:$0xff]
    %v226 = vld [vmem:[#allocation3 + $0x4f8] sm:$0xff]
    %v227 = vld [vmem:[#allocation3 + $0x500] sm:$0xff]
    %v228 = vld [vmem:[#allocation3 + $0x508] sm:$0xff]
    %v229 = vld [vmem:[#allocation3 + $0x510] sm:$0xff]
    %v230 = vld [vmem:[#allocation3 + $0x518] sm:$0xff]
    %v231 = vld [vmem:[#allocation3 + $0x520] sm:$0xff]
    %v232 = vld [vmem:[#allocation3 + $0x528] sm:$0xff]
    %v233 = vld [vmem:[#allocation3 + $0x530] sm:$0xff]
    %v234 = vld [vmem:[#allocation3 + $0x538] sm:$0xff]
    %v235 = vld [vmem:[#allocation3 + $0x540] sm:$0xff]
    %v236 = vld [vmem:[#allocation3 + $0x548] sm:$0xff]
    %v237 = vld [vmem:[#allocation3 + $0x550] sm:$0xff]
    %v238 = vld [vmem:[#allocation3 + $0x558] sm:$0xff]
    %v239 = vld [vmem:[#allocation3 + $0x560] sm:$0xff]
    %v240 = vld [vmem:[#allocation3 + $0x568] sm:$0xff]
    %v241 = vld [vmem:[#allocation3 + $0x570] sm:$0xff]
    %v242 = vld [vmem:[#allocation3 + $0x578] sm:$0xff]
    %v243 = vld [vmem:[#allocation3 + $0x580] sm:$0xff]
    %v244 = vld [vmem:[#allocation3 + $0x588] sm:$0xff]
    %v245 = vld [vmem:[#allocation3 + $0x590] sm:$0xff]
    %v246 = vld [vmem:[#allocation3 + $0x598] sm:$0xff]
    %v247 = vld [vmem:[#allocation3 + $0x5a0] sm:$0xff]
    %v248 = vld [vmem:[#allocation3 + $0x5a8] sm:$0xff]
    %v249 = vld [vmem:[#allocation3 + $0x5b0] sm:$0xff]
    %v250 = vld [vmem:[#allocation3 + $0x5b8] sm:$0xff]
    %v251 = vld [vmem:[#allocation3 + $0x5c0] sm:$0xff]
    %v252 = vld [vmem:[#allocation3 + $0x5c8] sm:$0xff]
    %v253 = vld [vmem:[#allocation3 + $0x5d0] sm:$0xff]
    %v254 = vld [vmem:[#allocation3 + $0x5d8] sm:$0xff]
    %v255 = vld [vmem:[#allocation3 + $0x5e0] sm:$0xff]
    %v256 = vld [vmem:[#allocation3 + $0x5e8] sm:$0xff]
    %v257 = vld [vmem:[#allocation3 + $0x5f0] sm:$0xff]
    %v258 = vld [vmem:[#allocation3 + $0x5f8] sm:$0xff]
    %v259 = vld [vmem:[#allocation3 + $0x600] sm:$0xff]
    %v260 = vld [vmem:[#allocation3 + $0x608] sm:$0xff]
    %v261 = vld [vmem:[#allocation3 + $0x610] sm:$0xff]
    %v262 = vld [vmem:[#allocation3 + $0x618] sm:$0xff]
    %v263 = vld [vmem:[#allocation3 + $0x620] sm:$0xff]
    %v264 = vld [vmem:[#allocation3 + $0x628] sm:$0xff]
    %v265 = vld [vmem:[#allocation3 + $0x630] sm:$0xff]
    %v266 = vld [vmem:[#allocation3 + $0x638] sm:$0xff]
    %v267 = vld [vmem:[#allocation3 + $0x640] sm:$0xff]
    %v268 = vld [vmem:[#allocation3 + $0x648] sm:$0xff]
    %v269 = vld [vmem:[#allocation3 + $0x650] sm:$0xff]
    %v270 = vld [vmem:[#allocation3 + $0x658] sm:$0xff]
    %v271 = vld [vmem:[#allocation3 + $0x660] sm:$0xff]
    %v272 = vld [vmem:[#allocation3 + $0x668] sm:$0xff]
    %v273 = vld [vmem:[#allocation3 + $0x670] sm:$0xff]
    %v274 = vld [vmem:[#allocation3 + $0x678] sm:$0xff]
    %v275 = vld [vmem:[#allocation3 + $0x680] sm:$0xff]
    %v276 = vld [vmem:[#allocation3 + $0x688] sm:$0xff]
    %v277 = vld [vmem:[#allocation3 + $0x690] sm:$0xff]
    %v278 = vld [vmem:[#allocation3 + $0x698] sm:$0xff]
    %v279 = vld [vmem:[#allocation3 + $0x6a0] sm:$0xff]
    %v280 = vld [vmem:[#allocation3 + $0x6a8] sm:$0xff]
    %v281 = vld [vmem:[#allocation3 + $0x6b0] sm:$0xff]
    %v282 = vld [vmem:[#allocation3 + $0x6b8] sm:$0xff]
    %v283 = vld [vmem:[#allocation3 + $0x6c0] sm:$0xff]
    %v284 = vld [vmem:[#allocation3 + $0x6c8] sm:$0xff]
    %v285 = vld [vmem:[#allocation3 + $0x6d0] sm:$0xff]
    %v286 = vld [vmem:[#allocation3 + $0x6d8] sm:$0xff]
    %v287 = vld [vmem:[#allocation3 + $0x6e0] sm:$0xff]
    %v288 = vld [vmem:[#allocation3 + $0x6e8] sm:$0xff]
    %v289 = vld [vmem:[#allocation3 + $0x6f0] sm:$0xff]
    %v290 = vld [vmem:[#allocation3 + $0x6f8] sm:$0xff]
    %v291 = vld [vmem:[#allocation3 + $0x700] sm:$0xff]
    %v292 = vld [vmem:[#allocation3 + $0x708] sm:$0xff]
    %v293 = vld [vmem:[#allocation3 + $0x710] sm:$0xff]
    %v294 = vld [vmem:[#allocation3 + $0x718] sm:$0xff]
    %v295 = vld [vmem:[#allocation3 + $0x720] sm:$0xff]
    %v296 = vld [vmem:[#allocation3 + $0x728] sm:$0xff]
    %v297 = vld [vmem:[#allocation3 + $0x730] sm:$0xff]
    %v298 = vld [vmem:[#allocation3 + $0x738] sm:$0xff]
    %v299 = vld [vmem:[#allocation3 + $0x740] sm:$0xff]
    %v300 = vld [vmem:[#allocation3 + $0x748] sm:$0xff]
    %v301 = vld [vmem:[#allocation3 + $0x750] sm:$0xff]
    %v302 = vld [vmem:[#allocation3 + $0x758] sm:$0xff]
    %v303 = vld [vmem:[#allocation3 + $0x760] sm:$0xff]
    %v304 = vld [vmem:[#allocation3 + $0x768] sm:$0xff]
    %v305 = vld [vmem:[#allocation3 + $0x770] sm:$0xff]
    %v306 = vld [vmem:[#allocation3 + $0x778] sm:$0xff]
    %v307 = vld [vmem:[#allocation3 + $0x780] sm:$0xff]
    %v308 = vld [vmem:[#allocation3 + $0x788] sm:$0xff]
    %v309 = vld [vmem:[#allocation3 + $0x790] sm:$0xff]
    %v310 = vld [vmem:[#allocation3 + $0x798] sm:$0xff]
    %v311 = vld [vmem:[#allocation3 + $0x7a0] sm:$0xff]
    %v312 = vld [vmem:[#allocation3 + $0x7a8] sm:$0xff]
    %v313 = vld [vmem:[#allocation3 + $0x7b0] sm:$0xff]
    %v314 = vld [vmem:[#allocation3 + $0x7b8] sm:$0xff]
    %v315 = vld [vmem:[#allocation3 + $0x7c0] sm:$0xff]
    %v316 = vld [vmem:[#allocation3 + $0x7c8] sm:$0xff]
    %v317 = vld [vmem:[%s2] sm:$0xf]
    %v319 = vlaneseq
    %v320 = vshrl.u32 %v319, 7
    %v321 = vsub.s32 0, %v320
    %v322 = vrot.slane %v317, %v321
    %v323 = vlaneseq
    %v324 = vshrl.u32 %v323, 7
    %v325 = vsub.s32 1, %v324
    %v326 = vrot.slane %v317, %v325
    %v327 = vlaneseq
    %v328 = vshrl.u32 %v327, 7
    %v329 = vsub.s32 2, %v328
    %v330 = vrot.slane %v317, %v329
    %v331 = vlaneseq
    %v332 = vshrl.u32 %v331, 7
    %v333 = vsub.s32 3, %v332
    %v334 = vrot.slane %v317, %v333
    %v343 = vunpack.c.l.b16 %v63
    %v344 = vunpack.c.h.b16 %v63
    %v345 = vunpack.c.l.b16 %v64
    %v346 = vunpack.c.h.b16 %v64
    %v347 = vunpack.c.l.b16 %v65
    %v348 = vunpack.c.h.b16 %v65
    %v349 = vunpack.c.l.b16 %v66
    %v350 = vunpack.c.h.b16 %v66
    %v351 = vpack.c.b16 %v343, %v343
    %v352 = vpack.c.b16 %v344, %v344
    %v353 = vpack.c.b16 %v345, %v345
    %v354 = vpack.c.b16 %v346, %v346
    %v355 = vpack.c.b16 %v347, %v347
    %v356 = vpack.c.b16 %v348, %v348
    %v357 = vpack.c.b16 %v349, %v349
    %v358 = vpack.c.b16 %v350, %v350
    %v616 = vunpack.c.l.b16 %v67
    %v617 = vunpack.c.h.b16 %v67
    %v618 = vunpack.c.l.b16 %v68
    %v619 = vunpack.c.h.b16 %v68
    %v620 = vunpack.c.l.b16 %v69
    %v621 = vunpack.c.h.b16 %v69
    %v622 = vunpack.c.l.b16 %v70
    %v623 = vunpack.c.h.b16 %v70
    %v624 = vunpack.c.l.b16 %v71
    %v625 = vunpack.c.h.b16 %v71
    %v626 = vunpack.c.l.b16 %v72
    %v627 = vunpack.c.h.b16 %v72
    %v628 = vunpack.c.l.b16 %v73
    %v629 = vunpack.c.h.b16 %v73
    %v630 = vunpack.c.l.b16 %v74
    %v631 = vunpack.c.h.b16 %v74
    %v632 = vunpack.c.l.b16 %v75
    %v633 = vunpack.c.h.b16 %v75
    %v634 = vunpack.c.l.b16 %v76
    %v635 = vunpack.c.h.b16 %v76
    %v636 = vunpack.c.l.b16 %v77
    %v637 = vunpack.c.h.b16 %v77
    %v638 = vunpack.c.l.b16 %v78
    %v639 = vunpack.c.h.b16 %v78
    %v640 = vunpack.c.l.b16 %v79
    %v641 = vunpack.c.h.b16 %v79
    %v642 = vunpack.c.l.b16 %v80
    %v643 = vunpack.c.h.b16 %v80
    %v644 = vunpack.c.l.b16 %v81
    %v645 = vunpack.c.h.b16 %v81
    %v646 = vunpack.c.l.b16 %v82
    %v647 = vunpack.c.h.b16 %v82
    %v648 = vunpack.c.l.b16 %v83
    %v649 = vunpack.c.h.b16 %v83
    %v650 = vunpack.c.l.b16 %v84
    %v651 = vunpack.c.h.b16 %v84
    %v652 = vunpack.c.l.b16 %v85
    %v653 = vunpack.c.h.b16 %v85
    %v654 = vunpack.c.l.b16 %v86
    %v655 = vunpack.c.h.b16 %v86
    %v656 = vunpack.c.l.b16 %v87
    %v657 = vunpack.c.h.b16 %v87
    %v658 = vunpack.c.l.b16 %v88
    %v659 = vunpack.c.h.b16 %v88
    %v660 = vunpack.c.l.b16 %v89
    %v661 = vunpack.c.h.b16 %v89
    %v662 = vunpack.c.l.b16 %v90
    %v663 = vunpack.c.h.b16 %v90
    %v664 = vunpack.c.l.b16 %v91
    %v665 = vunpack.c.h.b16 %v91
    %v666 = vunpack.c.l.b16 %v92
    %v667 = vunpack.c.h.b16 %v92
    %v668 = vunpack.c.l.b16 %v93
    %v669 = vunpack.c.h.b16 %v93
    %v670 = vunpack.c.l.b16 %v94
    %v671 = vunpack.c.h.b16 %v94
    %v672 = vunpack.c.l.b16 %v95
    %v673 = vunpack.c.h.b16 %v95
    %v674 = vunpack.c.l.b16 %v96
    %v675 = vunpack.c.h.b16 %v96
    %v676 = vunpack.c.l.b16 %v97
    %v677 = vunpack.c.h.b16 %v97
    %v678 = vunpack.c.l.b16 %v98
    %v679 = vunpack.c.h.b16 %v98
    %v680 = vunpack.c.l.b16 %v99
    %v681 = vunpack.c.h.b16 %v99
    %v682 = vunpack.c.l.b16 %v100
    %v683 = vunpack.c.h.b16 %v100
    %v684 = vunpack.c.l.b16 %v101
    %v685 = vunpack.c.h.b16 %v101
    %v686 = vunpack.c.l.b16 %v102
    %v687 = vunpack.c.h.b16 %v102
    %v688 = vunpack.c.l.b16 %v103
    %v689 = vunpack.c.h.b16 %v103
    %v690 = vunpack.c.l.b16 %v104
    %v691 = vunpack.c.h.b16 %v104
    %v692 = vunpack.c.l.b16 %v105
    %v693 = vunpack.c.h.b16 %v105
    %v694 = vunpack.c.l.b16 %v106
    %v695 = vunpack.c.h.b16 %v106
    %v696 = vunpack.c.l.b16 %v107
    %v697 = vunpack.c.h.b16 %v107
    %v698 = vunpack.c.l.b16 %v108
    %v699 = vunpack.c.h.b16 %v108
    %v700 = vunpack.c.l.b16 %v109
    %v701 = vunpack.c.h.b16 %v109
    %v702 = vunpack.c.l.b16 %v110
    %v703 = vunpack.c.h.b16 %v110
    %v704 = vunpack.c.l.b16 %v111
    %v705 = vunpack.c.h.b16 %v111
    %v706 = vunpack.c.l.b16 %v112
    %v707 = vunpack.c.h.b16 %v112
    %v708 = vunpack.c.l.b16 %v113
    %v709 = vunpack.c.h.b16 %v113
    %v710 = vunpack.c.l.b16 %v114
    %v711 = vunpack.c.h.b16 %v114
    %v712 = vunpack.c.l.b16 %v115
    %v713 = vunpack.c.h.b16 %v115
    %v714 = vunpack.c.l.b16 %v116
    %v715 = vunpack.c.h.b16 %v116
    %v716 = vunpack.c.l.b16 %v117
    %v717 = vunpack.c.h.b16 %v117
    %v718 = vunpack.c.l.b16 %v118
    %v719 = vunpack.c.h.b16 %v118
    %v720 = vunpack.c.l.b16 %v119
    %v721 = vunpack.c.h.b16 %v119
    %v722 = vunpack.c.l.b16 %v120
    %v723 = vunpack.c.h.b16 %v120
    %v724 = vunpack.c.l.b16 %v121
    %v725 = vunpack.c.h.b16 %v121
    %v726 = vunpack.c.l.b16 %v122
    %v727 = vunpack.c.h.b16 %v122
    %v728 = vunpack.c.l.b16 %v123
    %v729 = vunpack.c.h.b16 %v123
    %v730 = vunpack.c.l.b16 %v124
    %v731 = vunpack.c.h.b16 %v124
    %v732 = vunpack.c.l.b16 %v125
    %v733 = vunpack.c.h.b16 %v125
    %v734 = vunpack.c.l.b16 %v126
    %v735 = vunpack.c.h.b16 %v126
    %v736 = vunpack.c.l.b16 %v127
    %v737 = vunpack.c.h.b16 %v127
    %v738 = vunpack.c.l.b16 %v128
    %v739 = vunpack.c.h.b16 %v128
    %v740 = vunpack.c.l.b16 %v129
    %v741 = vunpack.c.h.b16 %v129
    %v742 = vunpack.c.l.b16 %v130
    %v743 = vunpack.c.h.b16 %v130
    %v744 = vunpack.c.l.b16 %v131
    %v745 = vunpack.c.h.b16 %v131
    %v746 = vunpack.c.l.b16 %v132
    %v747 = vunpack.c.h.b16 %v132
    %v748 = vunpack.c.l.b16 %v133
    %v749 = vunpack.c.h.b16 %v133
    %v750 = vunpack.c.l.b16 %v134
    %v751 = vunpack.c.h.b16 %v134
    %v752 = vunpack.c.l.b16 %v135
    %v753 = vunpack.c.h.b16 %v135
    %v754 = vunpack.c.l.b16 %v136
    %v755 = vunpack.c.h.b16 %v136
    %v756 = vunpack.c.l.b16 %v137
    %v757 = vunpack.c.h.b16 %v137
    %v758 = vunpack.c.l.b16 %v138
    %v759 = vunpack.c.h.b16 %v138
    %v760 = vunpack.c.l.b16 %v139
    %v761 = vunpack.c.h.b16 %v139
    %v762 = vunpack.c.l.b16 %v140
    %v763 = vunpack.c.h.b16 %v140
    %v764 = vunpack.c.l.b16 %v141
    %v765 = vunpack.c.h.b16 %v141
    %v766 = vunpack.c.l.b16 %v142
    %v767 = vunpack.c.h.b16 %v142
    %v768 = vunpack.c.l.b16 %v143
    %v769 = vunpack.c.h.b16 %v143
    %v770 = vunpack.c.l.b16 %v144
    %v771 = vunpack.c.h.b16 %v144
    %v772 = vunpack.c.l.b16 %v145
    %v773 = vunpack.c.h.b16 %v145
    %v774 = vunpack.c.l.b16 %v146
    %v775 = vunpack.c.h.b16 %v146
    %v776 = vunpack.c.l.b16 %v147
    %v777 = vunpack.c.h.b16 %v147
    %v778 = vunpack.c.l.b16 %v148
    %v779 = vunpack.c.h.b16 %v148
    %v780 = vunpack.c.l.b16 %v149
    %v781 = vunpack.c.h.b16 %v149
    %v782 = vunpack.c.l.b16 %v150
    %v783 = vunpack.c.h.b16 %v150
    %v784 = vunpack.c.l.b16 %v151
    %v785 = vunpack.c.h.b16 %v151
    %v786 = vunpack.c.l.b16 %v152
    %v787 = vunpack.c.h.b16 %v152
    %v788 = vunpack.c.l.b16 %v153
    %v789 = vunpack.c.h.b16 %v153
    %v790 = vunpack.c.l.b16 %v154
    %v791 = vunpack.c.h.b16 %v154
    %v792 = vunpack.c.l.b16 %v155
    %v793 = vunpack.c.h.b16 %v155
    %v794 = vunpack.c.l.b16 %v156
    %v795 = vunpack.c.h.b16 %v156
    %v796 = vunpack.c.l.b16 %v157
    %v797 = vunpack.c.h.b16 %v157
    %v798 = vunpack.c.l.b16 %v158
    %v799 = vunpack.c.h.b16 %v158
    %v800 = vunpack.c.l.b16 %v159
    %v801 = vunpack.c.h.b16 %v159
    %v802 = vunpack.c.l.b16 %v160
    %v803 = vunpack.c.h.b16 %v160
    %v804 = vunpack.c.l.b16 %v161
    %v805 = vunpack.c.h.b16 %v161
    %v806 = vunpack.c.l.b16 %v162
    %v807 = vunpack.c.h.b16 %v162
    %v808 = vunpack.c.l.b16 %v163
    %v809 = vunpack.c.h.b16 %v163
    %v810 = vunpack.c.l.b16 %v164
    %v811 = vunpack.c.h.b16 %v164
    %v812 = vunpack.c.l.b16 %v165
    %v813 = vunpack.c.h.b16 %v165
    %v814 = vunpack.c.l.b16 %v166
    %v815 = vunpack.c.h.b16 %v166
    %v816 = vunpack.c.l.b16 %v167
    %v817 = vunpack.c.h.b16 %v167
    %v818 = vunpack.c.l.b16 %v168
    %v819 = vunpack.c.h.b16 %v168
    %v820 = vunpack.c.l.b16 %v169
    %v821 = vunpack.c.h.b16 %v169
    %v822 = vunpack.c.l.b16 %v170
    %v823 = vunpack.c.h.b16 %v170
    %v824 = vunpack.c.l.b16 %v171
    %v825 = vunpack.c.h.b16 %v171
    %v826 = vunpack.c.l.b16 %v172
    %v827 = vunpack.c.h.b16 %v172
    %v828 = vunpack.c.l.b16 %v173
    %v829 = vunpack.c.h.b16 %v173
    %v830 = vunpack.c.l.b16 %v174
    %v831 = vunpack.c.h.b16 %v174
    %v832 = vunpack.c.l.b16 %v175
    %v833 = vunpack.c.h.b16 %v175
    %v834 = vunpack.c.l.b16 %v176
    %v835 = vunpack.c.h.b16 %v176
    %v836 = vunpack.c.l.b16 %v177
    %v837 = vunpack.c.h.b16 %v177
    %v838 = vunpack.c.l.b16 %v178
    %v839 = vunpack.c.h.b16 %v178
    %v840 = vunpack.c.l.b16 %v179
    %v841 = vunpack.c.h.b16 %v179
    %v842 = vunpack.c.l.b16 %v180
    %v843 = vunpack.c.h.b16 %v180
    %v844 = vunpack.c.l.b16 %v181
    %v845 = vunpack.c.h.b16 %v181
    %v846 = vunpack.c.l.b16 %v182
    %v847 = vunpack.c.h.b16 %v182
    %v848 = vunpack.c.l.b16 %v183
    %v849 = vunpack.c.h.b16 %v183
    %v850 = vunpack.c.l.b16 %v184
    %v851 = vunpack.c.h.b16 %v184
    %v852 = vunpack.c.l.b16 %v185
    %v853 = vunpack.c.h.b16 %v185
    %v854 = vunpack.c.l.b16 %v186
    %v855 = vunpack.c.h.b16 %v186
    %v856 = vunpack.c.l.b16 %v187
    %v857 = vunpack.c.h.b16 %v187
    %v858 = vunpack.c.l.b16 %v188
    %v859 = vunpack.c.h.b16 %v188
    %v860 = vunpack.c.l.b16 %v189
    %v861 = vunpack.c.h.b16 %v189
    %v862 = vunpack.c.l.b16 %v190
    %v863 = vunpack.c.h.b16 %v190
    %v864 = vunpack.c.l.b16 %v191
    %v865 = vunpack.c.h.b16 %v191
    %v866 = vunpack.c.l.b16 %v192
    %v867 = vunpack.c.h.b16 %v192
    %v868 = vunpack.c.l.b16 %v193
    %v869 = vunpack.c.h.b16 %v193
    %v870 = vunpack.c.l.b16 %v194
    %v871 = vunpack.c.h.b16 %v194
    %v872 = vunpack.c.l.b16 %v195
    %v873 = vunpack.c.h.b16 %v195
    %v874 = vunpack.c.l.b16 %v196
    %v875 = vunpack.c.h.b16 %v196
    %v876 = vunpack.c.l.b16 %v197
    %v877 = vunpack.c.h.b16 %v197
    %v878 = vunpack.c.l.b16 %v198
    %v879 = vunpack.c.h.b16 %v198
    %v880 = vunpack.c.l.b16 %v199
    %v881 = vunpack.c.h.b16 %v199
    %v882 = vunpack.c.l.b16 %v200
    %v883 = vunpack.c.h.b16 %v200
    %v884 = vunpack.c.l.b16 %v201
    %v885 = vunpack.c.h.b16 %v201
    %v886 = vunpack.c.l.b16 %v202
    %v887 = vunpack.c.h.b16 %v202
    %v888 = vunpack.c.l.b16 %v203
    %v889 = vunpack.c.h.b16 %v203
    %v890 = vunpack.c.l.b16 %v204
    %v891 = vunpack.c.h.b16 %v204
    %v892 = vunpack.c.l.b16 %v205
    %v893 = vunpack.c.h.b16 %v205
    %v894 = vunpack.c.l.b16 %v206
    %v895 = vunpack.c.h.b16 %v206
    %v896 = vunpack.c.l.b16 %v207
    %v897 = vunpack.c.h.b16 %v207
    %v898 = vunpack.c.l.b16 %v208
    %v899 = vunpack.c.h.b16 %v208
    %v900 = vunpack.c.l.b16 %v209
    %v901 = vunpack.c.h.b16 %v209
    %v902 = vunpack.c.l.b16 %v210
    %v903 = vunpack.c.h.b16 %v210
    %v904 = vunpack.c.l.b16 %v211
    %v905 = vunpack.c.h.b16 %v211
    %v906 = vunpack.c.l.b16 %v212
    %v907 = vunpack.c.h.b16 %v212
    %v908 = vunpack.c.l.b16 %v213
    %v909 = vunpack.c.h.b16 %v213
    %v910 = vunpack.c.l.b16 %v214
    %v911 = vunpack.c.h.b16 %v214
    %v912 = vunpack.c.l.b16 %v215
    %v913 = vunpack.c.h.b16 %v215
    %v914 = vunpack.c.l.b16 %v216
    %v915 = vunpack.c.h.b16 %v216
    %v916 = vunpack.c.l.b16 %v217
    %v917 = vunpack.c.h.b16 %v217
    %v918 = vunpack.c.l.b16 %v218
    %v919 = vunpack.c.h.b16 %v218
    %v920 = vunpack.c.l.b16 %v219
    %v921 = vunpack.c.h.b16 %v219
    %v922 = vunpack.c.l.b16 %v220
    %v923 = vunpack.c.h.b16 %v220
    %v924 = vunpack.c.l.b16 %v221
    %v925 = vunpack.c.h.b16 %v221
    %v926 = vunpack.c.l.b16 %v222
    %v927 = vunpack.c.h.b16 %v222
    %v928 = vunpack.c.l.b16 %v223
    %v929 = vunpack.c.h.b16 %v223
    %v930 = vunpack.c.l.b16 %v224
    %v931 = vunpack.c.h.b16 %v224
    %v932 = vunpack.c.l.b16 %v225
    %v933 = vunpack.c.h.b16 %v225
    %v934 = vunpack.c.l.b16 %v226
    %v935 = vunpack.c.h.b16 %v226
    %v936 = vunpack.c.l.b16 %v227
    %v937 = vunpack.c.h.b16 %v227
    %v938 = vunpack.c.l.b16 %v228
    %v939 = vunpack.c.h.b16 %v228
    %v940 = vunpack.c.l.b16 %v229
    %v941 = vunpack.c.h.b16 %v229
    %v942 = vunpack.c.l.b16 %v230
    %v943 = vunpack.c.h.b16 %v230
    %v944 = vunpack.c.l.b16 %v231
    %v945 = vunpack.c.h.b16 %v231
    %v946 = vunpack.c.l.b16 %v232
    %v947 = vunpack.c.h.b16 %v232
    %v948 = vunpack.c.l.b16 %v233
    %v949 = vunpack.c.h.b16 %v233
    %v950 = vunpack.c.l.b16 %v234
    %v951 = vunpack.c.h.b16 %v234
    %v952 = vunpack.c.l.b16 %v235
    %v953 = vunpack.c.h.b16 %v235
    %v954 = vunpack.c.l.b16 %v236
    %v955 = vunpack.c.h.b16 %v236
    %v956 = vunpack.c.l.b16 %v237
    %v957 = vunpack.c.h.b16 %v237
    %v958 = vunpack.c.l.b16 %v238
    %v959 = vunpack.c.h.b16 %v238
    %v960 = vunpack.c.l.b16 %v239
    %v961 = vunpack.c.h.b16 %v239
    %v962 = vunpack.c.l.b16 %v240
    %v963 = vunpack.c.h.b16 %v240
    %v964 = vunpack.c.l.b16 %v241
    %v965 = vunpack.c.h.b16 %v241
    %v966 = vunpack.c.l.b16 %v242
    %v967 = vunpack.c.h.b16 %v242
    %v968 = vunpack.c.l.b16 %v243
    %v969 = vunpack.c.h.b16 %v243
    %v970 = vunpack.c.l.b16 %v244
    %v971 = vunpack.c.h.b16 %v244
    %v972 = vunpack.c.l.b16 %v245
    %v973 = vunpack.c.h.b16 %v245
    %v974 = vunpack.c.l.b16 %v246
    %v975 = vunpack.c.h.b16 %v246
    %v976 = vunpack.c.l.b16 %v247
    %v977 = vunpack.c.h.b16 %v247
    %v978 = vunpack.c.l.b16 %v248
    %v979 = vunpack.c.h.b16 %v248
    %v980 = vunpack.c.l.b16 %v249
    %v981 = vunpack.c.h.b16 %v249
    %v982 = vunpack.c.l.b16 %v250
    %v983 = vunpack.c.h.b16 %v250
    %v984 = vunpack.c.l.b16 %v251
    %v985 = vunpack.c.h.b16 %v251
    %v986 = vunpack.c.l.b16 %v252
    %v987 = vunpack.c.h.b16 %v252
    %v988 = vunpack.c.l.b16 %v253
    %v989 = vunpack.c.h.b16 %v253
    %v990 = vunpack.c.l.b16 %v254
    %v991 = vunpack.c.h.b16 %v254
    %v992 = vunpack.c.l.b16 %v255
    %v993 = vunpack.c.h.b16 %v255
    %v994 = vunpack.c.l.b16 %v256
    %v995 = vunpack.c.h.b16 %v256
    %v996 = vunpack.c.l.b16 %v257
    %v997 = vunpack.c.h.b16 %v257
    %v998 = vunpack.c.l.b16 %v258
    %v999 = vunpack.c.h.b16 %v258
    %v1000 = vunpack.c.l.b16 %v259
    %v1001 = vunpack.c.h.b16 %v259
    %v1002 = vunpack.c.l.b16 %v260
    %v1003 = vunpack.c.h.b16 %v260
    %v1004 = vunpack.c.l.b16 %v261
    %v1005 = vunpack.c.h.b16 %v261
    %v1006 = vunpack.c.l.b16 %v262
    %v1007 = vunpack.c.h.b16 %v262
    %v1008 = vunpack.c.l.b16 %v263
    %v1009 = vunpack.c.h.b16 %v263
    %v1010 = vunpack.c.l.b16 %v264
    %v1011 = vunpack.c.h.b16 %v264
    %v1012 = vunpack.c.l.b16 %v265
    %v1013 = vunpack.c.h.b16 %v265
    %v1014 = vunpack.c.l.b16 %v266
    %v1015 = vunpack.c.h.b16 %v266
    %v1016 = vunpack.c.l.b16 %v267
    %v1017 = vunpack.c.h.b16 %v267
    %v1018 = vunpack.c.l.b16 %v268
    %v1019 = vunpack.c.h.b16 %v268
    %v1020 = vunpack.c.l.b16 %v269
    %v1021 = vunpack.c.h.b16 %v269
    %v1022 = vunpack.c.l.b16 %v270
    %v1023 = vunpack.c.h.b16 %v270
    %v1024 = vunpack.c.l.b16 %v271
    %v1025 = vunpack.c.h.b16 %v271
    %v1026 = vunpack.c.l.b16 %v272
    %v1027 = vunpack.c.h.b16 %v272
    %v1028 = vunpack.c.l.b16 %v273
    %v1029 = vunpack.c.h.b16 %v273
    %v1030 = vunpack.c.l.b16 %v274
    %v1031 = vunpack.c.h.b16 %v274
    %v1032 = vunpack.c.l.b16 %v275
    %v1033 = vunpack.c.h.b16 %v275
    %v1034 = vunpack.c.l.b16 %v276
    %v1035 = vunpack.c.h.b16 %v276
    %v1036 = vunpack.c.l.b16 %v277
    %v1037 = vunpack.c.h.b16 %v277
    %v1038 = vunpack.c.l.b16 %v278
    %v1039 = vunpack.c.h.b16 %v278
    %v1040 = vunpack.c.l.b16 %v279
    %v1041 = vunpack.c.h.b16 %v279
    %v1042 = vunpack.c.l.b16 %v280
    %v1043 = vunpack.c.h.b16 %v280
    %v1044 = vunpack.c.l.b16 %v281
    %v1045 = vunpack.c.h.b16 %v281
    %v1046 = vunpack.c.l.b16 %v282
    %v1047 = vunpack.c.h.b16 %v282
    %v1048 = vunpack.c.l.b16 %v283
    %v1049 = vunpack.c.h.b16 %v283
    %v1050 = vunpack.c.l.b16 %v284
    %v1051 = vunpack.c.h.b16 %v284
    %v1052 = vunpack.c.l.b16 %v285
    %v1053 = vunpack.c.h.b16 %v285
    %v1054 = vunpack.c.l.b16 %v286
    %v1055 = vunpack.c.h.b16 %v286
    %v1056 = vunpack.c.l.b16 %v287
    %v1057 = vunpack.c.h.b16 %v287
    %v1058 = vunpack.c.l.b16 %v288
    %v1059 = vunpack.c.h.b16 %v288
    %v1060 = vunpack.c.l.b16 %v289
    %v1061 = vunpack.c.h.b16 %v289
    %v1062 = vunpack.c.l.b16 %v290
    %v1063 = vunpack.c.h.b16 %v290
    %v1064 = vunpack.c.l.b16 %v291
    %v1065 = vunpack.c.h.b16 %v291
    %v1066 = vunpack.c.l.b16 %v292
    %v1067 = vunpack.c.h.b16 %v292
    %v1068 = vunpack.c.l.b16 %v293
    %v1069 = vunpack.c.h.b16 %v293
    %v1070 = vunpack.c.l.b16 %v294
    %v1071 = vunpack.c.h.b16 %v294
    %v1072 = vunpack.c.l.b16 %v295
    %v1073 = vunpack.c.h.b16 %v295
    %v1074 = vunpack.c.l.b16 %v296
    %v1075 = vunpack.c.h.b16 %v296
    %v1076 = vunpack.c.l.b16 %v297
    %v1077 = vunpack.c.h.b16 %v297
    %v1078 = vunpack.c.l.b16 %v298
    %v1079 = vunpack.c.h.b16 %v298
    %v1080 = vunpack.c.l.b16 %v299
    %v1081 = vunpack.c.h.b16 %v299
    %v1082 = vunpack.c.l.b16 %v300
    %v1083 = vunpack.c.h.b16 %v300
    %v1084 = vunpack.c.l.b16 %v301
    %v1085 = vunpack.c.h.b16 %v301
    %v1086 = vunpack.c.l.b16 %v302
    %v1087 = vunpack.c.h.b16 %v302
    %v1088 = vunpack.c.l.b16 %v303
    %v1089 = vunpack.c.h.b16 %v303
    %v1090 = vunpack.c.l.b16 %v304
    %v1091 = vunpack.c.h.b16 %v304
    %v1092 = vunpack.c.l.b16 %v305
    %v1093 = vunpack.c.h.b16 %v305
    %v1094 = vunpack.c.l.b16 %v306
    %v1095 = vunpack.c.h.b16 %v306
    %v1096 = vunpack.c.l.b16 %v307
    %v1097 = vunpack.c.h.b16 %v307
    %v1098 = vunpack.c.l.b16 %v308
    %v1099 = vunpack.c.h.b16 %v308
    %v1100 = vunpack.c.l.b16 %v309
    %v1101 = vunpack.c.h.b16 %v309
    %v1102 = vunpack.c.l.b16 %v310
    %v1103 = vunpack.c.h.b16 %v310
    %v1104 = vunpack.c.l.b16 %v311
    %v1105 = vunpack.c.h.b16 %v311
    %v1106 = vunpack.c.l.b16 %v312
    %v1107 = vunpack.c.h.b16 %v312
    %v1108 = vunpack.c.l.b16 %v313
    %v1109 = vunpack.c.h.b16 %v313
    %v1110 = vunpack.c.l.b16 %v314
    %v1111 = vunpack.c.h.b16 %v314
    %v1112 = vunpack.c.l.b16 %v315
    %v1113 = vunpack.c.h.b16 %v315
    %v1114 = vunpack.c.l.b16 %v316
    %v1115 = vunpack.c.h.b16 %v316
    %v1116 = vpack.c.b16 %v620, %v616
    %v1117 = vpack.c.b16 %v621, %v617
    %v1118 = vpack.c.b16 %v622, %v618
    %v1119 = vpack.c.b16 %v623, %v619
    %v1120 = vpack.c.b16 %v628, %v624
    %v1121 = vpack.c.b16 %v629, %v625
    %v1122 = vpack.c.b16 %v630, %v626
    %v1123 = vpack.c.b16 %v631, %v627
    %v1124 = vpack.c.b16 %v636, %v632
    %v1125 = vpack.c.b16 %v637, %v633
    %v1126 = vpack.c.b16 %v638, %v634
    %v1127 = vpack.c.b16 %v639, %v635
    %v1128 = vpack.c.b16 %v644, %v640
    %v1129 = vpack.c.b16 %v645, %v641
    %v1130 = vpack.c.b16 %v646, %v642
    %v1131 = vpack.c.b16 %v647, %v643
    %v1132 = vpack.c.b16 %v652, %v648
    %v1133 = vpack.c.b16 %v653, %v649
    %v1134 = vpack.c.b16 %v654, %v650
    %v1135 = vpack.c.b16 %v655, %v651
    %v1136 = vpack.c.b16 %v660, %v656
    %v1137 = vpack.c.b16 %v661, %v657
    %v1138 = vpack.c.b16 %v662, %v658
    %v1139 = vpack.c.b16 %v663, %v659
    %v1140 = vpack.c.b16 %v668, %v664
    %v1141 = vpack.c.b16 %v669, %v665
    %v1142 = vpack.c.b16 %v670, %v666
    %v1143 = vpack.c.b16 %v671, %v667
    %v1144 = vpack.c.b16 %v676, %v672
    %v1145 = vpack.c.b16 %v677, %v673
    %v1146 = vpack.c.b16 %v678, %v674
    %v1147 = vpack.c.b16 %v679, %v675
    %v1148 = vpack.c.b16 %v684, %v680
    %v1149 = vpack.c.b16 %v685, %v681
    %v1150 = vpack.c.b16 %v686, %v682
    %v1151 = vpack.c.b16 %v687, %v683
    %v1152 = vpack.c.b16 %v692, %v688
    %v1153 = vpack.c.b16 %v693, %v689
    %v1154 = vpack.c.b16 %v694, %v690
    %v1155 = vpack.c.b16 %v695, %v691
    %v1156 = vpack.c.b16 %v700, %v696
    %v1157 = vpack.c.b16 %v701, %v697
    %v1158 = vpack.c.b16 %v702, %v698
    %v1159 = vpack.c.b16 %v703, %v699
    %v1160 = vpack.c.b16 %v708, %v704
    %v1161 = vpack.c.b16 %v709, %v705
    %v1162 = vpack.c.b16 %v710, %v706
    %v1163 = vpack.c.b16 %v711, %v707
    %v1164 = vpack.c.b16 %v716, %v712
    %v1165 = vpack.c.b16 %v717, %v713
    %v1166 = vpack.c.b16 %v718, %v714
    %v1167 = vpack.c.b16 %v719, %v715
    %v1168 = vpack.c.b16 %v724, %v720
    %v1169 = vpack.c.b16 %v725, %v721
    %v1170 = vpack.c.b16 %v726, %v722
    %v1171 = vpack.c.b16 %v727, %v723
    %v1172 = vpack.c.b16 %v732, %v728
    %v1173 = vpack.c.b16 %v733, %v729
    %v1174 = vpack.c.b16 %v734, %v730
    %v1175 = vpack.c.b16 %v735, %v731
    %v1176 = vpack.c.b16 %v740, %v736
    %v1177 = vpack.c.b16 %v741, %v737
    %v1178 = vpack.c.b16 %v742, %v738
    %v1179 = vpack.c.b16 %v743, %v739
    %v1180 = vpack.c.b16 %v748, %v744
    %v1181 = vpack.c.b16 %v749, %v745
    %v1182 = vpack.c.b16 %v750, %v746
    %v1183 = vpack.c.b16 %v751, %v747
    %v1184 = vpack.c.b16 %v756, %v752
    %v1185 = vpack.c.b16 %v757, %v753
    %v1186 = vpack.c.b16 %v758, %v754
    %v1187 = vpack.c.b16 %v759, %v755
    %v1188 = vpack.c.b16 %v764, %v760
    %v1189 = vpack.c.b16 %v765, %v761
    %v1190 = vpack.c.b16 %v766, %v762
    %v1191 = vpack.c.b16 %v767, %v763
    %v1192 = vpack.c.b16 %v772, %v768
    %v1193 = vpack.c.b16 %v773, %v769
    %v1194 = vpack.c.b16 %v774, %v770
    %v1195 = vpack.c.b16 %v775, %v771
    %v1196 = vpack.c.b16 %v780, %v776
    %v1197 = vpack.c.b16 %v781, %v777
    %v1198 = vpack.c.b16 %v782, %v778
    %v1199 = vpack.c.b16 %v783, %v779
    %v1200 = vpack.c.b16 %v788, %v784
    %v1201 = vpack.c.b16 %v789, %v785
    %v1202 = vpack.c.b16 %v790, %v786
    %v1203 = vpack.c.b16 %v791, %v787
    %v1204 = vpack.c.b16 %v796, %v792
    %v1205 = vpack.c.b16 %v797, %v793
    %v1206 = vpack.c.b16 %v798, %v794
    %v1207 = vpack.c.b16 %v799, %v795
    %v1208 = vpack.c.b16 %v804, %v800
    %v1209 = vpack.c.b16 %v805, %v801
    %v1210 = vpack.c.b16 %v806, %v802
    %v1211 = vpack.c.b16 %v807, %v803
    %v1212 = vpack.c.b16 %v812, %v808
    %v1213 = vpack.c.b16 %v813, %v809
    %v1214 = vpack.c.b16 %v814, %v810
    %v1215 = vpack.c.b16 %v815, %v811
    %v1216 = vpack.c.b16 %v820, %v816
    %v1217 = vpack.c.b16 %v821, %v817
    %v1218 = vpack.c.b16 %v822, %v818
    %v1219 = vpack.c.b16 %v823, %v819
    %v1220 = vpack.c.b16 %v828, %v824
    %v1221 = vpack.c.b16 %v829, %v825
    %v1222 = vpack.c.b16 %v830, %v826
    %v1223 = vpack.c.b16 %v831, %v827
    %v1224 = vpack.c.b16 %v836, %v832
    %v1225 = vpack.c.b16 %v837, %v833
    %v1226 = vpack.c.b16 %v838, %v834
    %v1227 = vpack.c.b16 %v839, %v835
    %v1228 = vpack.c.b16 %v844, %v840
    %v1229 = vpack.c.b16 %v845, %v841
    %v1230 = vpack.c.b16 %v846, %v842
    %v1231 = vpack.c.b16 %v847, %v843
    %v1232 = vpack.c.b16 %v852, %v848
    %v1233 = vpack.c.b16 %v853, %v849
    %v1234 = vpack.c.b16 %v854, %v850
    %v1235 = vpack.c.b16 %v855, %v851
    %v1236 = vpack.c.b16 %v860, %v856
    %v1237 = vpack.c.b16 %v861, %v857
    %v1238 = vpack.c.b16 %v862, %v858
    %v1239 = vpack.c.b16 %v863, %v859
    %v1240 = vpack.c.b16 %v868, %v864
    %v1241 = vpack.c.b16 %v869, %v865
    %v1242 = vpack.c.b16 %v870, %v866
    %v1243 = vpack.c.b16 %v871, %v867
    %v1244 = vpack.c.b16 %v876, %v872
    %v1245 = vpack.c.b16 %v877, %v873
    %v1246 = vpack.c.b16 %v878, %v874
    %v1247 = vpack.c.b16 %v879, %v875
    %v1248 = vpack.c.b16 %v884, %v880
    %v1249 = vpack.c.b16 %v885, %v881
    %v1250 = vpack.c.b16 %v886, %v882
    %v1251 = vpack.c.b16 %v887, %v883
    %v1252 = vpack.c.b16 %v892, %v888
    %v1253 = vpack.c.b16 %v893, %v889
    %v1254 = vpack.c.b16 %v894, %v890
    %v1255 = vpack.c.b16 %v895, %v891
    %v1256 = vpack.c.b16 %v900, %v896
    %v1257 = vpack.c.b16 %v901, %v897
    %v1258 = vpack.c.b16 %v902, %v898
    %v1259 = vpack.c.b16 %v903, %v899
    %v1260 = vpack.c.b16 %v908, %v904
    %v1261 = vpack.c.b16 %v909, %v905
    %v1262 = vpack.c.b16 %v910, %v906
    %v1263 = vpack.c.b16 %v911, %v907
    %v1264 = vpack.c.b16 %v916, %v912
    %v1265 = vpack.c.b16 %v917, %v913
    %v1266 = vpack.c.b16 %v918, %v914
    %v1267 = vpack.c.b16 %v919, %v915
    %v1268 = vpack.c.b16 %v924, %v920
    %v1269 = vpack.c.b16 %v925, %v921
    %v1270 = vpack.c.b16 %v926, %v922
    %v1271 = vpack.c.b16 %v927, %v923
    %v1272 = vpack.c.b16 %v932, %v928
    %v1273 = vpack.c.b16 %v933, %v929
    %v1274 = vpack.c.b16 %v934, %v930
    %v1275 = vpack.c.b16 %v935, %v931
    %v1276 = vpack.c.b16 %v940, %v936
    %v1277 = vpack.c.b16 %v941, %v937
    %v1278 = vpack.c.b16 %v942, %v938
    %v1279 = vpack.c.b16 %v943, %v939
    %v1280 = vpack.c.b16 %v948, %v944
    %v1281 = vpack.c.b16 %v949, %v945
    %v1282 = vpack.c.b16 %v950, %v946
    %v1283 = vpack.c.b16 %v951, %v947
    %v1284 = vpack.c.b16 %v956, %v952
    %v1285 = vpack.c.b16 %v957, %v953
    %v1286 = vpack.c.b16 %v958, %v954
    %v1287 = vpack.c.b16 %v959, %v955
    %v1288 = vpack.c.b16 %v964, %v960
    %v1289 = vpack.c.b16 %v965, %v961
    %v1290 = vpack.c.b16 %v966, %v962
    %v1291 = vpack.c.b16 %v967, %v963
    %v1292 = vpack.c.b16 %v972, %v968
    %v1293 = vpack.c.b16 %v973, %v969
    %v1294 = vpack.c.b16 %v974, %v970
    %v1295 = vpack.c.b16 %v975, %v971
    %v1296 = vpack.c.b16 %v980, %v976
    %v1297 = vpack.c.b16 %v981, %v977
    %v1298 = vpack.c.b16 %v982, %v978
    %v1299 = vpack.c.b16 %v983, %v979
    %v1300 = vpack.c.b16 %v988, %v984
    %v1301 = vpack.c.b16 %v989, %v985
    %v1302 = vpack.c.b16 %v990, %v986
    %v1303 = vpack.c.b16 %v991, %v987
    %v1304 = vpack.c.b16 %v996, %v992
    %v1305 = vpack.c.b16 %v997, %v993
    %v1306 = vpack.c.b16 %v998, %v994
    %v1307 = vpack.c.b16 %v999, %v995
    %v1308 = vpack.c.b16 %v1004, %v1000
    %v1309 = vpack.c.b16 %v1005, %v1001
    %v1310 = vpack.c.b16 %v1006, %v1002
    %v1311 = vpack.c.b16 %v1007, %v1003
    %v1312 = vpack.c.b16 %v1012, %v1008
    %v1313 = vpack.c.b16 %v1013, %v1009
    %v1314 = vpack.c.b16 %v1014, %v1010
    %v1315 = vpack.c.b16 %v1015, %v1011
    %v1316 = vpack.c.b16 %v1020, %v1016
    %v1317 = vpack.c.b16 %v1021, %v1017
    %v1318 = vpack.c.b16 %v1022, %v1018
    %v1319 = vpack.c.b16 %v1023, %v1019
    %v1320 = vpack.c.b16 %v1028, %v1024
    %v1321 = vpack.c.b16 %v1029, %v1025
    %v1322 = vpack.c.b16 %v1030, %v1026
    %v1323 = vpack.c.b16 %v1031, %v1027
    %v1324 = vpack.c.b16 %v1036, %v1032
    %v1325 = vpack.c.b16 %v1037, %v1033
    %v1326 = vpack.c.b16 %v1038, %v1034
    %v1327 = vpack.c.b16 %v1039, %v1035
    %v1328 = vpack.c.b16 %v1044, %v1040
    %v1329 = vpack.c.b16 %v1045, %v1041
    %v1330 = vpack.c.b16 %v1046, %v1042
    %v1331 = vpack.c.b16 %v1047, %v1043
    %v1332 = vpack.c.b16 %v1052, %v1048
    %v1333 = vpack.c.b16 %v1053, %v1049
    %v1334 = vpack.c.b16 %v1054, %v1050
    %v1335 = vpack.c.b16 %v1055, %v1051
    %v1336 = vpack.c.b16 %v1060, %v1056
    %v1337 = vpack.c.b16 %v1061, %v1057
    %v1338 = vpack.c.b16 %v1062, %v1058
    %v1339 = vpack.c.b16 %v1063, %v1059
    %v1340 = vpack.c.b16 %v1068, %v1064
    %v1341 = vpack.c.b16 %v1069, %v1065
    %v1342 = vpack.c.b16 %v1070, %v1066
    %v1343 = vpack.c.b16 %v1071, %v1067
    %v1344 = vpack.c.b16 %v1076, %v1072
    %v1345 = vpack.c.b16 %v1077, %v1073
    %v1346 = vpack.c.b16 %v1078, %v1074
    %v1347 = vpack.c.b16 %v1079, %v1075
    %v1348 = vpack.c.b16 %v1084, %v1080
    %v1349 = vpack.c.b16 %v1085, %v1081
    %v1350 = vpack.c.b16 %v1086, %v1082
    %v1351 = vpack.c.b16 %v1087, %v1083
    %v1352 = vpack.c.b16 %v1092, %v1088
    %v1353 = vpack.c.b16 %v1093, %v1089
    %v1354 = vpack.c.b16 %v1094, %v1090
    %v1355 = vpack.c.b16 %v1095, %v1091
    %v1356 = vpack.c.b16 %v1100, %v1096
    %v1357 = vpack.c.b16 %v1101, %v1097
    %v1358 = vpack.c.b16 %v1102, %v1098
    %v1359 = vpack.c.b16 %v1103, %v1099
    %v1360 = vpack.c.b16 %v1108, %v1104
    %v1361 = vpack.c.b16 %v1109, %v1105
    %v1362 = vpack.c.b16 %v1110, %v1106
    %v1363 = vpack.c.b16 %v1111, %v1107
    %v1364 = vpack.c.b16 %v1112, %v1112
    %v1365 = vpack.c.b16 %v1113, %v1113
    %v1366 = vpack.c.b16 %v1114, %v1114
    %v1367 = vpack.c.b16 %v1115, %v1115
    %vm1616 = vcmask 850944
    %v1618 = vsel %vm1616, %v358, 0
    %vm1620 = vcmask 1043456
    %v1622 = vsel %vm1620, %v1364, 0
    %v1625 = vsel %vm1620, %v1365, 0
    %v1628 = vsel %vm1620, %v1366, 0
    %v1631 = vsel %vm1620, %v1367, 0
    %1633 = vmatprep.subr.bf16.mxu0 %v1145
    %1634 = vmatpush1.bf16.msra.mxu0 %v1144
    %1635 = vmatprep.subr.bf16.mxu0 %v1141
    %1636 = vmatpush1.bf16.msra.mxu0 %v1140
    %1637 = vmatprep.subr.bf16.mxu0 %v1137
    %1638 = vmatpush1.bf16.msra.mxu0 %v1136
    %1639 = vmatprep.subr.bf16.mxu0 %v1133
    %1640 = vmatpush1.bf16.msra.mxu0 %v1132
    %1641 = vmatprep.subr.bf16.mxu0 %v1129
    %1642 = vmatpush1.bf16.msra.mxu0 %v1128
    %1643 = vmatprep.subr.bf16.mxu0 %v1125
    %1644 = vmatpush1.bf16.msra.mxu0 %v1124
    %1645 = vmatprep.subr.bf16.mxu0 %v1121
    %1646 = vmatpush1.bf16.msra.mxu0 %v1120
    %1647 = vmatprep.subr.bf16.mxu0 %v1117
    %1648 = vmatpush1.bf16.msra.mxu0 %v1116
    %1649 = vmatprep.subr.bf16.mxu0 %v1177
    %1650 = vmatpush2.bf16.msra.mxu0 %v1176
    %1651 = vmatprep.subr.bf16.mxu0 %v1173
    %1652 = vmatpush2.bf16.msra.mxu0 %v1172
    %1653 = vmatprep.subr.bf16.mxu0 %v1169
    %1654 = vmatpush2.bf16.msra.mxu0 %v1168
    %1655 = vmatprep.subr.bf16.mxu0 %v1165
    %1656 = vmatpush2.bf16.msra.mxu0 %v1164
    %1657 = vmatprep.subr.bf16.mxu0 %v1161
    %1658 = vmatpush2.bf16.msra.mxu0 %v1160
    %1659 = vmatprep.subr.bf16.mxu0 %v1157
    %1660 = vmatpush2.bf16.msra.mxu0 %v1156
    %1661 = vmatprep.subr.bf16.mxu0 %v1153
    %1662 = vmatpush2.bf16.msra.mxu0 %v1152
    %1663 = vmatprep.subr.bf16.mxu0 %v1149
    %1664 = vmatpush2.bf16.msra.mxu0 %v1148
    %1665 = vmatprep.mubr.bf16.mxu0 %v352
    %1666 = vmatmul.mubr.bf16.gmra.mxu0 %v351
    %v1667 = vpop.f32.mrf.mxu0
    %v1668 = vadd.f32 %v322, %v1667
    %v1669 = vpop.f32.mrf.mxu0
    %v1670 = vadd.f32 %v326, %v1669
    %v1671 = vpop.f32.mrf.mxu0
    %v1672 = vpop.f32.mrf.mxu0
    %1673 = vdwg.mxu0
    %1674 = vmatprep.subr.bf16.mxu0 %v1209
    %1675 = vmatpush1.bf16.msra.mxu0 %v1208
    %1676 = vmatprep.subr.bf16.mxu0 %v1205
    %1677 = vmatpush1.bf16.msra.mxu0 %v1204
    %1678 = vmatprep.subr.bf16.mxu0 %v1201
    %1679 = vmatpush1.bf16.msra.mxu0 %v1200
    %1680 = vmatprep.subr.bf16.mxu0 %v1197
    %1681 = vmatpush1.bf16.msra.mxu0 %v1196
    %1682 = vmatprep.subr.bf16.mxu0 %v1193
    %1683 = vmatpush1.bf16.msra.mxu0 %v1192
    %1684 = vmatprep.subr.bf16.mxu0 %v1189
    %1685 = vmatpush1.bf16.msra.mxu0 %v1188
    %1686 = vmatprep.subr.bf16.mxu0 %v1185
    %1687 = vmatpush1.bf16.msra.mxu0 %v1184
    %1688 = vmatprep.subr.bf16.mxu0 %v1181
    %1689 = vmatpush1.bf16.msra.mxu0 %v1180
    %1690 = vmatprep.subr.bf16.mxu0 %v1241
    %1691 = vmatpush2.bf16.msra.mxu0 %v1240
    %1692 = vmatprep.subr.bf16.mxu0 %v1237
    %1693 = vmatpush2.bf16.msra.mxu0 %v1236
    %1694 = vmatprep.subr.bf16.mxu0 %v1233
    %1695 = vmatpush2.bf16.msra.mxu0 %v1232
    %1696 = vmatprep.subr.bf16.mxu0 %v1229
    %1697 = vmatpush2.bf16.msra.mxu0 %v1228
    %1698 = vmatprep.subr.bf16.mxu0 %v1225
    %1699 = vmatpush2.bf16.msra.mxu0 %v1224
    %1700 = vmatprep.subr.bf16.mxu0 %v1221
    %1701 = vmatpush2.bf16.msra.mxu0 %v1220
    %1702 = vmatprep.subr.bf16.mxu0 %v1217
    %1703 = vmatpush2.bf16.msra.mxu0 %v1216
    %1704 = vmatprep.subr.bf16.mxu0 %v1213
    %1705 = vmatpush2.bf16.msra.mxu0 %v1212
    %1706 = vmatprep.mubr.bf16.mxu0 %v354
    %1707 = vmatmul.mubr.bf16.gmra.mxu0 %v353
    %v1708 = vpop.f32.mrf.mxu0
    %v1709 = vadd.f32 %v1668, %v1708
    %v1710 = vpop.f32.mrf.mxu0
    %v1711 = vadd.f32 %v1670, %v1710
    %v1712 = vpop.f32.mrf.mxu0
    %v1713 = vpop.f32.mrf.mxu0
    %1714 = vdwg.mxu0
    %1715 = vmatprep.subr.bf16.mxu0 %v1273
    %1716 = vmatpush1.bf16.msra.mxu0 %v1272
    %1717 = vmatprep.subr.bf16.mxu0 %v1269
    %1718 = vmatpush1.bf16.msra.mxu0 %v1268
    %1719 = vmatprep.subr.bf16.mxu0 %v1265
    %1720 = vmatpush1.bf16.msra.mxu0 %v1264
    %1721 = vmatprep.subr.bf16.mxu0 %v1261
    %1722 = vmatpush1.bf16.msra.mxu0 %v1260
    %1723 = vmatprep.subr.bf16.mxu0 %v1257
    %1724 = vmatpush1.bf16.msra.mxu0 %v1256
    %1725 = vmatprep.subr.bf16.mxu0 %v1253
    %1726 = vmatpush1.bf16.msra.mxu0 %v1252
    %1727 = vmatprep.subr.bf16.mxu0 %v1249
    %1728 = vmatpush1.bf16.msra.mxu0 %v1248
    %1729 = vmatprep.subr.bf16.mxu0 %v1245
    %1730 = vmatpush1.bf16.msra.mxu0 %v1244
    %1731 = vmatprep.subr.bf16.mxu0 %v1305
    %1732 = vmatpush2.bf16.msra.mxu0 %v1304
    %1733 = vmatprep.subr.bf16.mxu0 %v1301
    %1734 = vmatpush2.bf16.msra.mxu0 %v1300
    %1735 = vmatprep.subr.bf16.mxu0 %v1297
    %1736 = vmatpush2.bf16.msra.mxu0 %v1296
    %1737 = vmatprep.subr.bf16.mxu0 %v1293
    %1738 = vmatpush2.bf16.msra.mxu0 %v1292
    %1739 = vmatprep.subr.bf16.mxu0 %v1289
    %1740 = vmatpush2.bf16.msra.mxu0 %v1288
    %1741 = vmatprep.subr.bf16.mxu0 %v1285
    %1742 = vmatpush2.bf16.msra.mxu0 %v1284
    %1743 = vmatprep.subr.bf16.mxu0 %v1281
    %1744 = vmatpush2.bf16.msra.mxu0 %v1280
    %1745 = vmatprep.subr.bf16.mxu0 %v1277
    %1746 = vmatpush2.bf16.msra.mxu0 %v1276
    %1747 = vmatprep.mubr.bf16.mxu0 %v356
    %1748 = vmatmul.mubr.bf16.gmra.mxu0 %v355
    %v1749 = vpop.f32.mrf.mxu0
    %v1750 = vadd.f32 %v1709, %v1749
    %v1751 = vpop.f32.mrf.mxu0
    %v1752 = vadd.f32 %v1711, %v1751
    %v1753 = vpop.f32.mrf.mxu0
    %v1754 = vpop.f32.mrf.mxu0
    %1755 = vdwg.mxu0
    %1756 = vmatprep.subr.bf16.mxu0 %v1337
    %1757 = vmatpush1.bf16.msra.mxu0 %v1336
    %1758 = vmatprep.subr.bf16.mxu0 %v1333
    %1759 = vmatpush1.bf16.msra.mxu0 %v1332
    %1760 = vmatprep.subr.bf16.mxu0 %v1329
    %1761 = vmatpush1.bf16.msra.mxu0 %v1328
    %1762 = vmatprep.subr.bf16.mxu0 %v1325
    %1763 = vmatpush1.bf16.msra.mxu0 %v1324
    %1764 = vmatprep.subr.bf16.mxu0 %v1321
    %1765 = vmatpush1.bf16.msra.mxu0 %v1320
    %1766 = vmatprep.subr.bf16.mxu0 %v1317
    %1767 = vmatpush1.bf16.msra.mxu0 %v1316
    %1768 = vmatprep.subr.bf16.mxu0 %v1313
    %1769 = vmatpush1.bf16.msra.mxu0 %v1312
    %1770 = vmatprep.subr.bf16.mxu0 %v1309
    %1771 = vmatpush1.bf16.msra.mxu0 %v1308
    %1772 = vmatprep.subr.bf16.mxu0 0
    %1773 = vmatpush2.bf16.msra.mxu0 0
    %1774 = vmatprep.subr.bf16.mxu0 %v1625
    %1775 = vmatpush2.bf16.msra.mxu0 %v1622
    %1776 = vmatprep.subr.bf16.mxu0 %v1361
    %1777 = vmatpush2.bf16.msra.mxu0 %v1360
    %1778 = vmatprep.subr.bf16.mxu0 %v1357
    %1779 = vmatpush2.bf16.msra.mxu0 %v1356
    %1780 = vmatprep.subr.bf16.mxu0 %v1353
    %1781 = vmatpush2.bf16.msra.mxu0 %v1352
    %1782 = vmatprep.subr.bf16.mxu0 %v1349
    %1783 = vmatpush2.bf16.msra.mxu0 %v1348
    %1784 = vmatprep.subr.bf16.mxu0 %v1345
    %1785 = vmatpush2.bf16.msra.mxu0 %v1344
    %1786 = vmatprep.subr.bf16.mxu0 %v1341
    %1787 = vmatpush2.bf16.msra.mxu0 %v1340
    %1788 = vmatprep.mubr.bf16.mxu0 %v1618
    %1789 = vmatmul.mubr.bf16.gmra.mxu0 %v357
    %v1790 = vpop.f32.mrf.mxu0
    %v1791 = vadd.f32 %v1750, %v1790
    %v1792 = vpop.f32.mrf.mxu0
    %v1793 = vadd.f32 %v1752, %v1792
    %v1794 = vpop.f32.mrf.mxu0
    %v1795 = vpop.f32.mrf.mxu0
    %1796 = vdwg.mxu0
    %1797 = vmatprep.subr.bf16.mxu0 %v1147
    %1798 = vmatpush1.bf16.msra.mxu0 %v1146
    %1799 = vmatprep.subr.bf16.mxu0 %v1143
    %1800 = vmatpush1.bf16.msra.mxu0 %v1142
    %1801 = vmatprep.subr.bf16.mxu0 %v1139
    %1802 = vmatpush1.bf16.msra.mxu0 %v1138
    %1803 = vmatprep.subr.bf16.mxu0 %v1135
    %1804 = vmatpush1.bf16.msra.mxu0 %v1134
    %1805 = vmatprep.subr.bf16.mxu0 %v1131
    %1806 = vmatpush1.bf16.msra.mxu0 %v1130
    %1807 = vmatprep.subr.bf16.mxu0 %v1127
    %1808 = vmatpush1.bf16.msra.mxu0 %v1126
    %1809 = vmatprep.subr.bf16.mxu0 %v1123
    %1810 = vmatpush1.bf16.msra.mxu0 %v1122
    %1811 = vmatprep.subr.bf16.mxu0 %v1119
    %1812 = vmatpush1.bf16.msra.mxu0 %v1118
    %1813 = vmatprep.subr.bf16.mxu0 %v1179
    %1814 = vmatpush2.bf16.msra.mxu0 %v1178
    %1815 = vmatprep.subr.bf16.mxu0 %v1175
    %1816 = vmatpush2.bf16.msra.mxu0 %v1174
    %1817 = vmatprep.subr.bf16.mxu0 %v1171
    %1818 = vmatpush2.bf16.msra.mxu0 %v1170
    %1819 = vmatprep.subr.bf16.mxu0 %v1167
    %1820 = vmatpush2.bf16.msra.mxu0 %v1166
    %1821 = vmatprep.subr.bf16.mxu0 %v1163
    %1822 = vmatpush2.bf16.msra.mxu0 %v1162
    %1823 = vmatprep.subr.bf16.mxu0 %v1159
    %1824 = vmatpush2.bf16.msra.mxu0 %v1158
    %1825 = vmatprep.subr.bf16.mxu0 %v1155
    %1826 = vmatpush2.bf16.msra.mxu0 %v1154
    %1827 = vmatprep.subr.bf16.mxu0 %v1151
    %1828 = vmatpush2.bf16.msra.mxu0 %v1150
    %1829 = vmatprep.mubr.bf16.mxu0 %v352
    %1830 = vmatmul.mubr.bf16.gmra.mxu0 %v351
    %v1831 = vpop.f32.mrf.mxu0
    %v1832 = vadd.f32 %v330, %v1831
    %v1833 = vpop.f32.mrf.mxu0
    %v1834 = vadd.f32 %v334, %v1833
    %v1835 = vpop.f32.mrf.mxu0
    %v1836 = vpop.f32.mrf.mxu0
    %1837 = vdwg.mxu0
    %1838 = vmatprep.subr.bf16.mxu0 %v1211
    %1839 = vmatpush1.bf16.msra.mxu0 %v1210
    %1840 = vmatprep.subr.bf16.mxu0 %v1207
    %1841 = vmatpush1.bf16.msra.mxu0 %v1206
    %1842 = vmatprep.subr.bf16.mxu0 %v1203
    %1843 = vmatpush1.bf16.msra.mxu0 %v1202
    %1844 = vmatprep.subr.bf16.mxu0 %v1199
    %1845 = vmatpush1.bf16.msra.mxu0 %v1198
    %1846 = vmatprep.subr.bf16.mxu0 %v1195
    %1847 = vmatpush1.bf16.msra.mxu0 %v1194
    %1848 = vmatprep.subr.bf16.mxu0 %v1191
    %1849 = vmatpush1.bf16.msra.mxu0 %v1190
    %1850 = vmatprep.subr.bf16.mxu0 %v1187
    %1851 = vmatpush1.bf16.msra.mxu0 %v1186
    %1852 = vmatprep.subr.bf16.mxu0 %v1183
    %1853 = vmatpush1.bf16.msra.mxu0 %v1182
    %1854 = vmatprep.subr.bf16.mxu0 %v1243
    %1855 = vmatpush2.bf16.msra.mxu0 %v1242
    %1856 = vmatprep.subr.bf16.mxu0 %v1239
    %1857 = vmatpush2.bf16.msra.mxu0 %v1238
    %1858 = vmatprep.subr.bf16.mxu0 %v1235
    %1859 = vmatpush2.bf16.msra.mxu0 %v1234
    %1860 = vmatprep.subr.bf16.mxu0 %v1231
    %1861 = vmatpush2.bf16.msra.mxu0 %v1230
    %1862 = vmatprep.subr.bf16.mxu0 %v1227
    %1863 = vmatpush2.bf16.msra.mxu0 %v1226
    %1864 = vmatprep.subr.bf16.mxu0 %v1223
    %1865 = vmatpush2.bf16.msra.mxu0 %v1222
    %1866 = vmatprep.subr.bf16.mxu0 %v1219
    %1867 = vmatpush2.bf16.msra.mxu0 %v1218
    %1868 = vmatprep.subr.bf16.mxu0 %v1215
    %1869 = vmatpush2.bf16.msra.mxu0 %v1214
    %1870 = vmatprep.mubr.bf16.mxu0 %v354
    %1871 = vmatmul.mubr.bf16.gmra.mxu0 %v353
    %v1872 = vpop.f32.mrf.mxu0
    %v1873 = vadd.f32 %v1832, %v1872
    %v1874 = vpop.f32.mrf.mxu0
    %v1875 = vadd.f32 %v1834, %v1874
    %v1876 = vpop.f32.mrf.mxu0
    %v1877 = vpop.f32.mrf.mxu0
    %1878 = vdwg.mxu0
    %1879 = vmatprep.subr.bf16.mxu0 %v1275
    %1880 = vmatpush1.bf16.msra.mxu0 %v1274
    %1881 = vmatprep.subr.bf16.mxu0 %v1271
    %1882 = vmatpush1.bf16.msra.mxu0 %v1270
    %1883 = vmatprep.subr.bf16.mxu0 %v1267
    %1884 = vmatpush1.bf16.msra.mxu0 %v1266
    %1885 = vmatprep.subr.bf16.mxu0 %v1263
    %1886 = vmatpush1.bf16.msra.mxu0 %v1262
    %1887 = vmatprep.subr.bf16.mxu0 %v1259
    %1888 = vmatpush1.bf16.msra.mxu0 %v1258
    %1889 = vmatprep.subr.bf16.mxu0 %v1255
    %1890 = vmatpush1.bf16.msra.mxu0 %v1254
    %1891 = vmatprep.subr.bf16.mxu0 %v1251
    %1892 = vmatpush1.bf16.msra.mxu0 %v1250
    %1893 = vmatprep.subr.bf16.mxu0 %v1247
    %1894 = vmatpush1.bf16.msra.mxu0 %v1246
    %1895 = vmatprep.subr.bf16.mxu0 %v1307
    %1896 = vmatpush2.bf16.msra.mxu0 %v1306
    %1897 = vmatprep.subr.bf16.mxu0 %v1303
    %1898 = vmatpush2.bf16.msra.mxu0 %v1302
    %1899 = vmatprep.subr.bf16.mxu0 %v1299
    %1900 = vmatpush2.bf16.msra.mxu0 %v1298
    %1901 = vmatprep.subr.bf16.mxu0 %v1295
    %1902 = vmatpush2.bf16.msra.mxu0 %v1294
    %1903 = vmatprep.subr.bf16.mxu0 %v1291
    %1904 = vmatpush2.bf16.msra.mxu0 %v1290
    %1905 = vmatprep.subr.bf16.mxu0 %v1287
    %1906 = vmatpush2.bf16.msra.mxu0 %v1286
    %1907 = vmatprep.subr.bf16.mxu0 %v1283
    %1908 = vmatpush2.bf16.msra.mxu0 %v1282
    %1909 = vmatprep.subr.bf16.mxu0 %v1279
    %1910 = vmatpush2.bf16.msra.mxu0 %v1278
    %1911 = vmatprep.mubr.bf16.mxu0 %v356
    %1912 = vmatmul.mubr.bf16.gmra.mxu0 %v355
    %v1913 = vpop.f32.mrf.mxu0
    %v1914 = vadd.f32 %v1873, %v1913
    %v1915 = vpop.f32.mrf.mxu0
    %v1916 = vadd.f32 %v1875, %v1915
    %v1917 = vpop.f32.mrf.mxu0
    %v1918 = vpop.f32.mrf.mxu0
    %1919 = vdwg.mxu0
    %1920 = vmatprep.subr.bf16.mxu0 %v1339
    %1921 = vmatpush1.bf16.msra.mxu0 %v1338
    %1922 = vmatprep.subr.bf16.mxu0 %v1335
    %1923 = vmatpush1.bf16.msra.mxu0 %v1334
    %1924 = vmatprep.subr.bf16.mxu0 %v1331
    %1925 = vmatpush1.bf16.msra.mxu0 %v1330
    %1926 = vmatprep.subr.bf16.mxu0 %v1327
    %1927 = vmatpush1.bf16.msra.mxu0 %v1326
    %1928 = vmatprep.subr.bf16.mxu0 %v1323
    %1929 = vmatpush1.bf16.msra.mxu0 %v1322
    %1930 = vmatprep.subr.bf16.mxu0 %v1319
    %1931 = vmatpush1.bf16.msra.mxu0 %v1318
    %1932 = vmatprep.subr.bf16.mxu0 %v1315
    %1933 = vmatpush1.bf16.msra.mxu0 %v1314
    %1934 = vmatprep.subr.bf16.mxu0 %v1311
    %1935 = vmatpush1.bf16.msra.mxu0 %v1310
    %1936 = vmatprep.subr.bf16.mxu0 0
    %1937 = vmatpush2.bf16.msra.mxu0 0
    %1938 = vmatprep.subr.bf16.mxu0 %v1631
    %1939 = vmatpush2.bf16.msra.mxu0 %v1628
    %1940 = vmatprep.subr.bf16.mxu0 %v1363
    %1941 = vmatpush2.bf16.msra.mxu0 %v1362
    %1942 = vmatprep.subr.bf16.mxu0 %v1359
    %1943 = vmatpush2.bf16.msra.mxu0 %v1358
    %1944 = vmatprep.subr.bf16.mxu0 %v1355
    %1945 = vmatpush2.bf16.msra.mxu0 %v1354
    %1946 = vmatprep.subr.bf16.mxu0 %v1351
    %1947 = vmatpush2.bf16.msra.mxu0 %v1350
    %1948 = vmatprep.subr.bf16.mxu0 %v1347
    %1949 = vmatpush2.bf16.msra.mxu0 %v1346
    %1950 = vmatprep.subr.bf16.mxu0 %v1343
    %1951 = vmatpush2.bf16.msra.mxu0 %v1342
    %1952 = vmatprep.mubr.bf16.mxu0 %v1618
    %1953 = vmatmul.mubr.bf16.gmra.mxu0 %v357
    %v1954 = vpop.f32.mrf.mxu0
    %v1955 = vadd.f32 %v1914, %v1954
    %v1956 = vpop.f32.mrf.mxu0
    %v1957 = vadd.f32 %v1916, %v1956
    %v1958 = vpop.f32.mrf.mxu0
    %v1959 = vpop.f32.mrf.mxu0
    %1960 = vdwg.mxu0
    %v1961 = vtanh.pop %v1791
    %v1962 = vtanh.pop %v1793
    %v1963 = vtanh.pop %v1955
    %v1964 = vtanh.pop %v1957
    %v1965 = vpack.c.bf16 %v1961, %v1961
    %v1966 = vpack.c.bf16 %v1962, %v1962
    %v1967 = vpack.c.bf16 %v1963, %v1963
    %v1968 = vpack.c.bf16 %v1964, %v1964
    %v1969 = vld [vmem:[#allocation5] sm:$0xf]
    %v1970 = vld [vmem:[#allocation5 + $0x4] sm:$0xf]
    %v1971 = vld [vmem:[#allocation5 + $0x8] sm:$0xf]
    %v1972 = vld [vmem:[#allocation5 + $0xc] sm:$0xf]
    %v1973 = vld [vmem:[#allocation5 + $0x10] sm:$0xf]
    %v1974 = vld [vmem:[#allocation5 + $0x14] sm:$0xf]
    %v1975 = vld [vmem:[#allocation5 + $0x18] sm:$0xf]
    %v1976 = vld [vmem:[#allocation5 + $0x1c] sm:$0xf]
    %v1977 = vld [vmem:[#allocation5 + $0x20] sm:$0xf]
    %v1978 = vld [vmem:[#allocation5 + $0x24] sm:$0xf]
    %v1979 = vld [vmem:[#allocation5 + $0x28] sm:$0xf]
    %v1980 = vld [vmem:[#allocation5 + $0x2c] sm:$0xf]
    %v1981 = vld [vmem:[#allocation5 + $0x30] sm:$0xf]
    %v1982 = vld [vmem:[#allocation5 + $0x34] sm:$0xf]
    %v1983 = vld [vmem:[#allocation5 + $0x38] sm:$0xf]
    %v1984 = vld [vmem:[#allocation5 + $0x3c] sm:$0xf]
    %v1985 = vld [vmem:[#allocation5 + $0x40] sm:$0xf]
    %v1986 = vld [vmem:[#allocation5 + $0x44] sm:$0xf]
    %v1987 = vld [vmem:[#allocation5 + $0x48] sm:$0xf]
    %v1988 = vld [vmem:[#allocation5 + $0x4c] sm:$0xf]
    %v1989 = vld [vmem:[#allocation5 + $0x50] sm:$0xf]
    %v1990 = vld [vmem:[#allocation5 + $0x54] sm:$0xf]
    %v1991 = vld [vmem:[#allocation5 + $0x58] sm:$0xf]
    %v1992 = vld [vmem:[#allocation5 + $0x5c] sm:$0xf]
    %v1993 = vld [vmem:[#allocation5 + $0x60] sm:$0xf]
    %v1994 = vld [vmem:[#allocation5 + $0x64] sm:$0xf]
    %v1995 = vld [vmem:[#allocation5 + $0x68] sm:$0xf]
    %v1996 = vld [vmem:[#allocation5 + $0x6c] sm:$0xf]
    %v1997 = vld [vmem:[#allocation5 + $0x70] sm:$0xf]
    %v1998 = vld [vmem:[#allocation5 + $0x74] sm:$0xf]
    %v1999 = vld [vmem:[#allocation5 + $0x78] sm:$0xf]
    %v2000 = vld [vmem:[#allocation5 + $0x7c] sm:$0xf]
    %v2001 = vld [vmem:[#allocation5 + $0x80] sm:$0xf]
    %v2002 = vld [vmem:[#allocation5 + $0x84] sm:$0xf]
    %v2003 = vld [vmem:[#allocation5 + $0x88] sm:$0xf]
    %v2004 = vld [vmem:[#allocation5 + $0x8c] sm:$0xf]
    %v2005 = vld [vmem:[#allocation5 + $0x90] sm:$0xf]
    %v2006 = vld [vmem:[#allocation5 + $0x94] sm:$0xf]
    %v2007 = vld [vmem:[#allocation5 + $0x98] sm:$0xf]
    %v2008 = vld [vmem:[#allocation5 + $0x9c] sm:$0xf]
    %v2009 = vld [vmem:[#allocation5 + $0xa0] sm:$0xf]
    %v2010 = vld [vmem:[#allocation5 + $0xa4] sm:$0xf]
    %v2011 = vld [vmem:[#allocation5 + $0xa8] sm:$0xf]
    %v2012 = vld [vmem:[#allocation5 + $0xac] sm:$0xf]
    %v2013 = vld [vmem:[#allocation5 + $0xb0] sm:$0xf]
    %v2014 = vld [vmem:[#allocation5 + $0xb4] sm:$0xf]
    %v2015 = vld [vmem:[#allocation5 + $0xb8] sm:$0xf]
    %v2016 = vld [vmem:[#allocation5 + $0xbc] sm:$0xf]
    %v2017 = vld [vmem:[#allocation5 + $0xc0] sm:$0xf]
    %v2018 = vld [vmem:[#allocation5 + $0xc4] sm:$0xf]
    %v2019 = vld [vmem:[#allocation5 + $0xc8] sm:$0xf]
    %v2020 = vld [vmem:[#allocation5 + $0xcc] sm:$0xf]
    %v2021 = vld [vmem:[#allocation5 + $0xd0] sm:$0xf]
    %v2022 = vld [vmem:[#allocation5 + $0xd4] sm:$0xf]
    %v2023 = vld [vmem:[#allocation5 + $0xd8] sm:$0xf]
    %v2024 = vld [vmem:[#allocation5 + $0xdc] sm:$0xf]
    %v2025 = vld [vmem:[#allocation5 + $0xe0] sm:$0xf]
    %v2026 = vld [vmem:[#allocation5 + $0xe4] sm:$0xf]
    %v2027 = vld [vmem:[#allocation5 + $0xe8] sm:$0xf]
    %v2028 = vld [vmem:[#allocation5 + $0xec] sm:$0xf]
    %v2029 = vld [vmem:[#allocation5 + $0xf0] sm:$0xf]
    %v2030 = vld [vmem:[#allocation5 + $0xf4] sm:$0xf]
    %v2031 = vld [vmem:[#allocation5 + $0xf8] sm:$0xf]
    %v2032 = vld [vmem:[#allocation5 + $0xfc] sm:$0xf]
    %v2033 = vld [vmem:[%s4] sm:$0x1]
    %v2035 = vlaneseq
    %v2036 = vshrl.u32 %v2035, 7
    %v2037 = vsub.s32 0, %v2036
    %v2038 = vrot.slane %v2033, %v2037
    %v2104 = vunpack.c.l.b16 %v1969
    %v2105 = vunpack.c.l.b16 %v1970
    %v2106 = vunpack.c.l.b16 %v1971
    %v2107 = vunpack.c.l.b16 %v1972
    %v2108 = vunpack.c.l.b16 %v1973
    %v2109 = vunpack.c.l.b16 %v1974
    %v2110 = vunpack.c.l.b16 %v1975
    %v2111 = vunpack.c.l.b16 %v1976
    %v2112 = vunpack.c.l.b16 %v1977
    %v2113 = vunpack.c.l.b16 %v1978
    %v2114 = vunpack.c.l.b16 %v1979
    %v2115 = vunpack.c.l.b16 %v1980
    %v2116 = vunpack.c.l.b16 %v1981
    %v2117 = vunpack.c.l.b16 %v1982
    %v2118 = vunpack.c.l.b16 %v1983
    %v2119 = vunpack.c.l.b16 %v1984
    %v2120 = vunpack.c.l.b16 %v1985
    %v2121 = vunpack.c.l.b16 %v1986
    %v2122 = vunpack.c.l.b16 %v1987
    %v2123 = vunpack.c.l.b16 %v1988
    %v2124 = vunpack.c.l.b16 %v1989
    %v2125 = vunpack.c.l.b16 %v1990
    %v2126 = vunpack.c.l.b16 %v1991
    %v2127 = vunpack.c.l.b16 %v1992
    %v2128 = vunpack.c.l.b16 %v1993
    %v2129 = vunpack.c.l.b16 %v1994
    %v2130 = vunpack.c.l.b16 %v1995
    %v2131 = vunpack.c.l.b16 %v1996
    %v2132 = vunpack.c.l.b16 %v1997
    %v2133 = vunpack.c.l.b16 %v1998
    %v2134 = vunpack.c.l.b16 %v1999
    %v2135 = vunpack.c.l.b16 %v2000
    %v2136 = vunpack.c.l.b16 %v2001
    %v2137 = vunpack.c.l.b16 %v2002
    %v2138 = vunpack.c.l.b16 %v2003
    %v2139 = vunpack.c.l.b16 %v2004
    %v2140 = vunpack.c.l.b16 %v2005
    %v2141 = vunpack.c.l.b16 %v2006
    %v2142 = vunpack.c.l.b16 %v2007
    %v2143 = vunpack.c.l.b16 %v2008
    %v2144 = vunpack.c.l.b16 %v2009
    %v2145 = vunpack.c.l.b16 %v2010
    %v2146 = vunpack.c.l.b16 %v2011
    %v2147 = vunpack.c.l.b16 %v2012
    %v2148 = vunpack.c.l.b16 %v2013
    %v2149 = vunpack.c.l.b16 %v2014
    %v2150 = vunpack.c.l.b16 %v2015
    %v2151 = vunpack.c.l.b16 %v2016
    %v2152 = vunpack.c.l.b16 %v2017
    %v2153 = vunpack.c.l.b16 %v2018
    %v2154 = vunpack.c.l.b16 %v2019
    %v2155 = vunpack.c.l.b16 %v2020
    %v2156 = vunpack.c.l.b16 %v2021
    %v2157 = vunpack.c.l.b16 %v2022
    %v2158 = vunpack.c.l.b16 %v2023
    %v2159 = vunpack.c.l.b16 %v2024
    %v2160 = vunpack.c.l.b16 %v2025
    %v2161 = vunpack.c.l.b16 %v2026
    %v2162 = vunpack.c.l.b16 %v2027
    %v2163 = vunpack.c.l.b16 %v2028
    %v2164 = vunpack.c.l.b16 %v2029
    %v2165 = vunpack.c.l.b16 %v2030
    %v2166 = vunpack.c.l.b16 %v2031
    %v2167 = vunpack.c.l.b16 %v2032
    %v2168 = vpack.c.b16 %v2105, %v2104
    %v2169 = vpack.c.b16 %v2107, %v2106
    %v2170 = vpack.c.b16 %v2109, %v2108
    %v2171 = vpack.c.b16 %v2111, %v2110
    %v2172 = vpack.c.b16 %v2113, %v2112
    %v2173 = vpack.c.b16 %v2115, %v2114
    %v2174 = vpack.c.b16 %v2117, %v2116
    %v2175 = vpack.c.b16 %v2119, %v2118
    %v2176 = vpack.c.b16 %v2121, %v2120
    %v2177 = vpack.c.b16 %v2123, %v2122
    %v2178 = vpack.c.b16 %v2125, %v2124
    %v2179 = vpack.c.b16 %v2127, %v2126
    %v2180 = vpack.c.b16 %v2129, %v2128
    %v2181 = vpack.c.b16 %v2131, %v2130
    %v2182 = vpack.c.b16 %v2133, %v2132
    %v2183 = vpack.c.b16 %v2135, %v2134
    %v2184 = vpack.c.b16 %v2137, %v2136
    %v2185 = vpack.c.b16 %v2139, %v2138
    %v2186 = vpack.c.b16 %v2141, %v2140
    %v2187 = vpack.c.b16 %v2143, %v2142
    %v2188 = vpack.c.b16 %v2145, %v2144
    %v2189 = vpack.c.b16 %v2147, %v2146
    %v2190 = vpack.c.b16 %v2149, %v2148
    %v2191 = vpack.c.b16 %v2151, %v2150
    %v2192 = vpack.c.b16 %v2153, %v2152
    %v2193 = vpack.c.b16 %v2155, %v2154
    %v2194 = vpack.c.b16 %v2157, %v2156
    %v2195 = vpack.c.b16 %v2159, %v2158
    %v2196 = vpack.c.b16 %v2161, %v2160
    %v2197 = vpack.c.b16 %v2163, %v2162
    %v2198 = vpack.c.b16 %v2165, %v2164
    %v2199 = vpack.c.b16 %v2167, %v2166
    %2232 = vmatprep.subr.bf16.mxu0 0
    %2233 = vmatpush1.bf16.msra.mxu0 %v2175
    %2234 = vmatprep.subr.bf16.mxu0 0
    %2235 = vmatpush1.bf16.msra.mxu0 %v2174
    %2236 = vmatprep.subr.bf16.mxu0 0
    %2237 = vmatpush1.bf16.msra.mxu0 %v2173
    %2238 = vmatprep.subr.bf16.mxu0 0
    %2239 = vmatpush1.bf16.msra.mxu0 %v2172
    %2240 = vmatprep.subr.bf16.mxu0 0
    %2241 = vmatpush1.bf16.msra.mxu0 %v2171
    %2242 = vmatprep.subr.bf16.mxu0 0
    %2243 = vmatpush1.bf16.msra.mxu0 %v2170
    %2244 = vmatprep.subr.bf16.mxu0 0
    %2245 = vmatpush1.bf16.msra.mxu0 %v2169
    %2246 = vmatprep.subr.bf16.mxu0 0
    %2247 = vmatpush1.bf16.msra.mxu0 %v2168
    %2248 = vmatprep.subr.bf16.mxu0 0
    %2249 = vmatpush2.bf16.msra.mxu0 %v2183
    %2250 = vmatprep.subr.bf16.mxu0 0
    %2251 = vmatpush2.bf16.msra.mxu0 %v2182
    %2252 = vmatprep.subr.bf16.mxu0 0
    %2253 = vmatpush2.bf16.msra.mxu0 %v2181
    %2254 = vmatprep.subr.bf16.mxu0 0
    %2255 = vmatpush2.bf16.msra.mxu0 %v2180
    %2256 = vmatprep.subr.bf16.mxu0 0
    %2257 = vmatpush2.bf16.msra.mxu0 %v2179
    %2258 = vmatprep.subr.bf16.mxu0 0
    %2259 = vmatpush2.bf16.msra.mxu0 %v2178
    %2260 = vmatprep.subr.bf16.mxu0 0
    %2261 = vmatpush2.bf16.msra.mxu0 %v2177
    %2262 = vmatprep.subr.bf16.mxu0 0
    %2263 = vmatpush2.bf16.msra.mxu0 %v2176
    %2264 = vmatprep.mubr.bf16.mxu0 %v1966
    %2265 = vmatmul.mubr.bf16.gmra.mxu0 %v1965
    %v2266 = vpop.f32.mrf.mxu0
    %v2267 = vadd.f32 %v2038, %v2266
    %v2268 = vpop.f32.mrf.mxu0
    %v2269 = vpop.f32.mrf.mxu0
    %v2270 = vpop.f32.mrf.mxu0
    %2271 = vdwg.mxu0
    %2272 = vmatprep.subr.bf16.mxu0 0
    %2273 = vmatpush1.bf16.msra.mxu0 %v2191
    %2274 = vmatprep.subr.bf16.mxu0 0
    %2275 = vmatpush1.bf16.msra.mxu0 %v2190
    %2276 = vmatprep.subr.bf16.mxu0 0
    %2277 = vmatpush1.bf16.msra.mxu0 %v2189
    %2278 = vmatprep.subr.bf16.mxu0 0
    %2279 = vmatpush1.bf16.msra.mxu0 %v2188
    %2280 = vmatprep.subr.bf16.mxu0 0
    %2281 = vmatpush1.bf16.msra.mxu0 %v2187
    %2282 = vmatprep.subr.bf16.mxu0 0
    %2283 = vmatpush1.bf16.msra.mxu0 %v2186
    %2284 = vmatprep.subr.bf16.mxu0 0
    %2285 = vmatpush1.bf16.msra.mxu0 %v2185
    %2286 = vmatprep.subr.bf16.mxu0 0
    %2287 = vmatpush1.bf16.msra.mxu0 %v2184
    %2288 = vmatprep.subr.bf16.mxu0 0
    %2289 = vmatpush2.bf16.msra.mxu0 %v2199
    %2290 = vmatprep.subr.bf16.mxu0 0
    %2291 = vmatpush2.bf16.msra.mxu0 %v2198
    %2292 = vmatprep.subr.bf16.mxu0 0
    %2293 = vmatpush2.bf16.msra.mxu0 %v2197
    %2294 = vmatprep.subr.bf16.mxu0 0
    %2295 = vmatpush2.bf16.msra.mxu0 %v2196
    %2296 = vmatprep.subr.bf16.mxu0 0
    %2297 = vmatpush2.bf16.msra.mxu0 %v2195
    %2298 = vmatprep.subr.bf16.mxu0 0
    %2299 = vmatpush2.bf16.msra.mxu0 %v2194
    %2300 = vmatprep.subr.bf16.mxu0 0
    %2301 = vmatpush2.bf16.msra.mxu0 %v2193
    %2302 = vmatprep.subr.bf16.mxu0 0
    %2303 = vmatpush2.bf16.msra.mxu0 %v2192
    %2304 = vmatprep.mubr.bf16.mxu0 %v1968
    %2305 = vmatmul.mubr.bf16.gmra.mxu0 %v1967
    %v2306 = vpop.f32.mrf.mxu0
    %v2307 = vadd.f32 %v2267, %v2306
    %v2308 = vpop.f32.mrf.mxu0
    %v2309 = vpop.f32.mrf.mxu0
    %v2310 = vpop.f32.mrf.mxu0
    %2311 = vdwg.mxu0
    %v2312 = vtanh.pop %v2307
    %v2313 = vpack.c.bf16 %v2312, %v2312
    %v2314 = vld [vmem:[%s5] sm:$0xf]
    %v2315 = vld [vmem:[%s5 + $0x4] sm:$0xf]
    %v2316 = vld [vmem:[%s5 + $0x8] sm:$0xf]
    %v2317 = vld [vmem:[%s5 + $0xc] sm:$0xf]
    %v2318 = vld [vmem:[%s5 + $0x10] sm:$0xf]
    %v2319 = vld [vmem:[%s5 + $0x14] sm:$0xf]
    %v2320 = vld [vmem:[%s5 + $0x18] sm:$0xf]
    %v2321 = vld [vmem:[%s5 + $0x1c] sm:$0xf]
    %v2322 = vld [vmem:[%s5 + $0x20] sm:$0xf]
    %v2323 = vld [vmem:[%s5 + $0x24] sm:$0xf]
    %v2324 = vld [vmem:[%s5 + $0x28] sm:$0xf]
    %v2325 = vld [vmem:[%s5 + $0x2c] sm:$0xf]
    %v2326 = vld [vmem:[%s5 + $0x30] sm:$0xf]
    %v2327 = vld [vmem:[%s5 + $0x34] sm:$0xf]
    %v2328 = vld [vmem:[%s5 + $0x38] sm:$0xf]
    %v2329 = vld [vmem:[%s5 + $0x3c] sm:$0xf]
    %v2330 = vld [vmem:[%s6] sm:$0x1]
    %v2332 = vlaneseq
    %v2333 = vshrl.u32 %v2332, 7
    %v2334 = vsub.s32 0, %v2333
    %v2335 = vrot.slane %v2330, %v2334
    %v2353 = vunpack.c.l.b16 %v2314
    %v2354 = vunpack.c.l.b16 %v2315
    %v2355 = vunpack.c.l.b16 %v2316
    %v2356 = vunpack.c.l.b16 %v2317
    %v2357 = vunpack.c.l.b16 %v2318
    %v2358 = vunpack.c.l.b16 %v2319
    %v2359 = vunpack.c.l.b16 %v2320
    %v2360 = vunpack.c.l.b16 %v2321
    %v2361 = vunpack.c.l.b16 %v2322
    %v2362 = vunpack.c.l.b16 %v2323
    %v2363 = vunpack.c.l.b16 %v2324
    %v2364 = vunpack.c.l.b16 %v2325
    %v2365 = vunpack.c.l.b16 %v2326
    %v2366 = vunpack.c.l.b16 %v2327
    %v2367 = vunpack.c.l.b16 %v2328
    %v2368 = vunpack.c.l.b16 %v2329
    %v2369 = vpack.c.b16 %v2354, %v2353
    %v2370 = vpack.c.b16 %v2356, %v2355
    %v2371 = vpack.c.b16 %v2358, %v2357
    %v2372 = vpack.c.b16 %v2360, %v2359
    %v2373 = vpack.c.b16 %v2362, %v2361
    %v2374 = vpack.c.b16 %v2364, %v2363
    %v2375 = vpack.c.b16 %v2366, %v2365
    %v2376 = vpack.c.b16 %v2368, %v2367
    %2385 = vmatprep.subr.bf16.mxu0 0
    %2386 = vmatpush1.bf16.msra.mxu0 %v2376
    %2387 = vmatprep.subr.bf16.mxu0 0
    %2388 = vmatpush1.bf16.msra.mxu0 %v2375
    %2389 = vmatprep.subr.bf16.mxu0 0
    %2390 = vmatpush1.bf16.msra.mxu0 %v2374
    %2391 = vmatprep.subr.bf16.mxu0 0
    %2392 = vmatpush1.bf16.msra.mxu0 %v2373
    %2393 = vmatprep.subr.bf16.mxu0 0
    %2394 = vmatpush1.bf16.msra.mxu0 %v2372
    %2395 = vmatprep.subr.bf16.mxu0 0
    %2396 = vmatpush1.bf16.msra.mxu0 %v2371
    %2397 = vmatprep.subr.bf16.mxu0 0
    %2398 = vmatpush1.bf16.msra.mxu0 %v2370
    %2399 = vmatprep.subr.bf16.mxu0 0
    %2400 = vmatpush1.bf16.msra.mxu0 %v2369
    %2401 = vmatprep.subr.bf16.mxu0 0
    %2402 = vmatpush2.bf16.msra.mxu0 0
    %2403 = vmatprep.subr.bf16.mxu0 0
    %2404 = vmatpush2.bf16.msra.mxu0 0
    %2405 = vmatprep.subr.bf16.mxu0 0
    %2406 = vmatpush2.bf16.msra.mxu0 0
    %2407 = vmatprep.subr.bf16.mxu0 0
    %2408 = vmatpush2.bf16.msra.mxu0 0
    %2409 = vmatprep.subr.bf16.mxu0 0
    %2410 = vmatpush2.bf16.msra.mxu0 0
    %2411 = vmatprep.subr.bf16.mxu0 0
    %2412 = vmatpush2.bf16.msra.mxu0 0
    %2413 = vmatprep.subr.bf16.mxu0 0
    %2414 = vmatpush2.bf16.msra.mxu0 0
    %2415 = vmatprep.subr.bf16.mxu0 0
    %2416 = vmatpush2.bf16.msra.mxu0 0
    %2417 = vmatprep.mubr.bf16.mxu0 0
    %2418 = vmatmul.mubr.bf16.gmra.mxu0 %v2313
    %v2419 = vpop.f32.mrf.mxu0
    %v2420 = vadd.f32 %v2335, %v2419
    %v2421 = vpop.f32.mrf.mxu0
    %v2422 = vpop.f32.mrf.mxu0
    %v2423 = vpop.f32.mrf.mxu0
    %2424 = vdwg.mxu0
    %v2425 = vtanh.pop %v2420
    %v2426 = vpack.c.bf16 %v2425, %v2425
    %v2427 = vld [vmem:[%s7] sm:$0xf]
    %v2428 = vld [vmem:[%s7 + $0x4] sm:$0xf]
    %v2429 = vld [vmem:[%s7 + $0x8] sm:$0xf]
    %v2430 = vld [vmem:[%s7 + $0xc] sm:$0xf]
    %v2431 = vld [vmem:[%s7 + $0x10] sm:$0xf]
    %v2432 = vld [vmem:[%s7 + $0x14] sm:$0xf]
    %v2433 = vld [vmem:[%s7 + $0x18] sm:$0xf]
    %v2434 = vld [vmem:[%s7 + $0x1c] sm:$0xf]
    %v2435 = vld [vmem:[#allocation2] sm:$0x1]
    %v2437 = vlaneseq
    %v2438 = vshrl.u32 %v2437, 7
    %v2439 = vsub.s32 0, %v2438
    %v2440 = vrot.slane %v2435, %v2439
    %v2450 = vunpack.c.l.b16 %v2427
    %v2451 = vunpack.c.l.b16 %v2428
    %v2452 = vunpack.c.l.b16 %v2429
    %v2453 = vunpack.c.l.b16 %v2430
    %v2454 = vunpack.c.l.b16 %v2431
    %v2455 = vunpack.c.l.b16 %v2432
    %v2456 = vunpack.c.l.b16 %v2433
    %v2457 = vunpack.c.l.b16 %v2434
    %v2458 = vpack.c.b16 %v2451, %v2450
    %v2459 = vpack.c.b16 %v2453, %v2452
    %v2460 = vpack.c.b16 %v2455, %v2454
    %v2461 = vpack.c.b16 %v2457, %v2456
    %vm2466 = vcmask 523264
    %v2468 = vsel %vm2466, %v2426, 0
    %2470 = vmatprep.subr.bf16.mxu0 0
    %2471 = vmatpush1.bf16.msra.mxu0 0
    %2472 = vmatprep.subr.bf16.mxu0 0
    %2473 = vmatpush1.bf16.msra.mxu0 0
    %2474 = vmatprep.subr.bf16.mxu0 0
    %2475 = vmatpush1.bf16.msra.mxu0 0
    %2476 = vmatprep.subr.bf16.mxu0 0
    %2477 = vmatpush1.bf16.msra.mxu0 0
    %2478 = vmatprep.subr.bf16.mxu0 0
    %2479 = vmatpush1.bf16.msra.mxu0 %v2461
    %2480 = vmatprep.subr.bf16.mxu0 0
    %2481 = vmatpush1.bf16.msra.mxu0 %v2460
    %2482 = vmatprep.subr.bf16.mxu0 0
    %2483 = vmatpush1.bf16.msra.mxu0 %v2459
    %2484 = vmatprep.subr.bf16.mxu0 0
    %2485 = vmatpush1.bf16.msra.mxu0 %v2458
    %2486 = vmatprep.subr.bf16.mxu0 0
    %2487 = vmatpush2.bf16.msra.mxu0 0
    %2488 = vmatprep.subr.bf16.mxu0 0
    %2489 = vmatpush2.bf16.msra.mxu0 0
    %2490 = vmatprep.subr.bf16.mxu0 0
    %2491 = vmatpush2.bf16.msra.mxu0 0
    %2492 = vmatprep.subr.bf16.mxu0 0
    %2493 = vmatpush2.bf16.msra.mxu0 0
    %2494 = vmatprep.subr.bf16.mxu0 0
    %2495 = vmatpush2.bf16.msra.mxu0 0
    %2496 = vmatprep.subr.bf16.mxu0 0
    %2497 = vmatpush2.bf16.msra.mxu0 0
    %2498 = vmatprep.subr.bf16.mxu0 0
    %2499 = vmatpush2.bf16.msra.mxu0 0
    %2500 = vmatprep.subr.bf16.mxu0 0
    %2501 = vmatpush2.bf16.msra.mxu0 0
    %2502 = vmatprep.mubr.bf16.mxu0 0
    %2503 = vmatmul.mubr.bf16.gmra.mxu0 %v2468
    %v2504 = vpop.f32.mrf.mxu0
    %v2505 = vadd.f32 %v2440, %v2504
    %v2506 = vpop.f32.mrf.mxu0
    %v2507 = vpop.f32.mrf.mxu0
    %v2508 = vpop.f32.mrf.mxu0
    %2509 = vdwg.mxu0
    %v2510 = vxor.u32 %v2505, 2147483648
    %v2511 = vmul.f32 %v2510, 1.442695
    %v2512 = vpow.pop %v2511
    %v2513 = vadd.f32 %v2512, 1.0
    %v2514 = vrcp.pop %v2513
    %v2515 = vmul.f32 1.0, %v2514
    %v2516 = vsub.f32 1.0, %v2515
    %vm2517 = vcmask 7168
    %2518 = vst.msk [vmem:[%s9] sm:$0xff] %vm2517, %v2516
    %2520 = vrot.lane.b32.xlu0 %v2515, 1
    %v2521 = vpop.permute.xlu0 %2520
    %vm2523 = vcmask 15368
    %2524 = vst.msk [vmem:[%s9] sm:$0xff] %vm2523, %v2521
    // Predicated region
    $region46: #{tpu_custom_call.1} parent=1 // pred_check
      _
    $region47: #{tpu_custom_call.1} parent=1 // pred_check_branch
      %2526 = sbr.rel (0) target = $region49
    $region48: #{tpu_custom_call.1} parent=1 // pred_region
      _
    $region49: #{tpu_custom_call.1} parent=1 // pred_fallthru
      _
    // Predicated region
    $region50: #{tpu_custom_call.1} parent=1 // pred_check
      _
    $region51: #{tpu_custom_call.1} parent=1 // pred_check_branch
      %2528 = sbr.rel (0) target = $region53
    $region52: #{tpu_custom_call.1} parent=1 // pred_region
      _
    $region53: #{tpu_custom_call.1} parent=1 // pred_fallthru
      _
    %2529 = vsyncpa [#allocation4], 1
    %2530 = vsyncpa [#allocation6], 1

// kernel: tpu_custom_call.1
$region0: #{tpu_custom_call.1}
  #allocation0 [shape = 'u32[]', space=smem, size = 0x4, offset = 0x4, fixed_abs, tag = 'smem constant byte address 0x4 - core index']
  #allocation1 [shape = 'u32[144,128]{1,0:T(1,128)}', space=vmem, size = 0x12000, scoped, tag = 'internal scratch']
  #allocation2 [shape = 'f32[1,1]{1,0:T(1,128)S(1)}', space=vmem, size = 0x200, scoped, tag = 'scoped memory for tpu_custom_call.1']
  %s0 = inlined_call_operand.vmem [shape: bf16[8,1000], index: 0, kind: input, shape index: {}]
  %s1 = inlined_call_operand.hbm [shape: bf16[1000,512], index: 1, kind: input, shape index: {}]
  %s2 = inlined_call_operand.vmem [shape: f32[1,512], index: 2, kind: input, shape index: {}]
  %s3 = inlined_call_operand.hbm [shape: bf16[512,128], index: 3, kind: input, shape index: {}]
  %s4 = inlined_call_operand.vmem [shape: f32[1,128], index: 4, kind: input, shape index: {}]
  %s5 = inlined_call_operand.vmem [shape: bf16[128,64], index: 5, kind: input, shape index: {}]
  %s6 = inlined_call_operand.vmem [shape: f32[1,64], index: 6, kind: input, shape index: {}]
  %s7 = inlined_call_operand.vmem [shape: bf16[64,1], index: 7, kind: input, shape index: {}]
  %s8 = inlined_call_operand.<no memory space> [shape: f32[1,1], index: 8, kind: input, shape index: {}]
  %s9 = inlined_call_operand.vmem [shape: f32[8,2], index: 9, kind: output, shape index: {}]
  %s10 = sld [smem:[#allocation0]]
  $region54: #{tpu_custom_call.1} parent=0
    _
  %s12 = ssub.s32 1, %s10
  %s13 = scalar_select 0, %s12, %s10
  %v14 = vstv %s8
  %15 = vst [vmem:[#allocation2] sm:$0x1] %v14
  $region1: #{tpu_custom_call.1} parent=0
    #allocation3 [shape = 'u8[1024000]{0}', space=vmem, size = 0xfa000, scoped, tag = 'input window, operand 1, single buffered']
    #allocation4 [shape = 's32[1]{0}', space=sflag, size = 0x4, scoped, tag = 'scoped memory for tpu_custom_call.1']
    #allocation5 [shape = 'u8[131072]{0}', space=vmem, size = 0x20000, scoped, tag = 'input window, operand 3, single buffered']
    #allocation6 [shape = 's32[1]{0}', space=sflag, size = 0x4, scoped, tag = 'scoped memory for tpu_custom_call.1']
    %16 = vsyncpa [#allocation4], 0
    %17 = vsyncpa [#allocation6], 0
    // Predicated region
    $region2: #{tpu_custom_call.1} parent=1 // pred_check
      _
    $region3: #{tpu_custom_call.1} parent=1 // pred_check_branch
      %19 = sbr.rel (0) target = $region5
    $region4: #{tpu_custom_call.1} parent=1 // pred_region
      _
    $region5: #{tpu_custom_call.1} parent=1 // pred_fallthru
      _
    // Predicated region
    $region6: #{tpu_custom_call.1} parent=1 // pred_check
      _
    $region7: #{tpu_custom_call.1} parent=1 // pred_check_branch
      %21 = sbr.rel (0) target = $region9
    $region8: #{tpu_custom_call.1} parent=1 // pred_region
      %s23 = ssub.s32 32000, 32000
      %24 = vsyncadd [#allocation4], %s23
      %s25 = sshll.u32 [#allocation3], 4
      %s26 = int_to_ptr.vmem [resolvable:$true] %s25
      %31 = dma.hbm_to_vmem [thread:$0]  %s1, 32000, %s26, [#allocation4], 256, 256, 16
    $region9: #{tpu_custom_call.1} parent=1 // pred_fallthru
      _
    // Predicated region
    $region10: #{tpu_custom_call.1} parent=1 // pred_check
      _
    $region11: #{tpu_custom_call.1} parent=1 // pred_check_branch
      %33 = sbr.rel (0) target = $region13
    $region12: #{tpu_custom_call.1} parent=1 // pred_region
      _
    $region13: #{tpu_custom_call.1} parent=1 // pred_fallthru
      _
    // Predicated region
    $region14: #{tpu_custom_call.1} parent=1 // pred_check
      _
    $region15: #{tpu_custom_call.1} parent=1 // pred_check_branch
      %35 = sbr.rel (0) target = $region17
    $region16: #{tpu_custom_call.1} parent=1 // pred_region
      %s37 = ssub.s32 4096, 4096
      %38 = vsyncadd [#allocation6], %s37
      %s39 = sshll.u32 [#allocation5], 4
      %s40 = int_to_ptr.vmem [resolvable:$true] %s39
      %45 = dma.hbm_to_vmem [thread:$0]  %s3, 4096, %s40, [#allocation6], 64, 64, 4
    $region17: #{tpu_custom_call.1} parent=1 // pred_fallthru
      _
    // Predicated region
    $region18: #{tpu_custom_call.1} parent=1 // pred_check
      _
    $region19: #{tpu_custom_call.1} parent=1 // pred_check_branch
      %47 = sbr.rel (0) target = $region21
    $region20: #{tpu_custom_call.1} parent=1 // pred_region
      _
    $region21: #{tpu_custom_call.1} parent=1 // pred_fallthru
      _
    // Predicated region
    $region22: #{tpu_custom_call.1} parent=1 // pred_check
      _
    $region23: #{tpu_custom_call.1} parent=1 // pred_check_branch
      %49 = sbr.rel (0) target = $region25
    $region24: #{tpu_custom_call.1} parent=1 // pred_region
      _
    $region25: #{tpu_custom_call.1} parent=1 // pred_fallthru
      _
    // Predicated region
    $region26: #{tpu_custom_call.1} parent=1 // pred_check
      _
    $region27: #{tpu_custom_call.1} parent=1 // pred_check_branch
      %51 = sbr.rel (0) target = $region29
    $region28: #{tpu_custom_call.1} parent=1 // pred_region
      _
    $region29: #{tpu_custom_call.1} parent=1 // pred_fallthru
      _
    // Predicated region
    $region30: #{tpu_custom_call.1} parent=1 // pred_check
      _
    $region31: #{tpu_custom_call.1} parent=1 // pred_check_branch
      %53 = sbr.rel (0) target = $region33
    $region32: #{tpu_custom_call.1} parent=1 // pred_region
      _
    $region33: #{tpu_custom_call.1} parent=1 // pred_fallthru
      _
    // Predicated region
    $region34: #{tpu_custom_call.1} parent=1 // pred_check
      _
    $region35: #{tpu_custom_call.1} parent=1 // pred_check_branch
      %55 = sbr.rel (0) target = $region37
    $region36: #{tpu_custom_call.1} parent=1 // pred_region
      _
    $region37: #{tpu_custom_call.1} parent=1 // pred_fallthru
      _
    // Predicated region
    $region38: #{tpu_custom_call.1} parent=1 // pred_check
      _
    $region39: #{tpu_custom_call.1} parent=1 // pred_check_branch
      %57 = sbr.rel (0) target = $region41
    $region40: #{tpu_custom_call.1} parent=1 // pred_region
      %58 = dma.done [#allocation4], 32000
    $region41: #{tpu_custom_call.1} parent=1 // pred_fallthru
      _
    // Predicated region
    $region42: #{tpu_custom_call.1} parent=1 // pred_check
      _
    $region43: #{tpu_custom_call.1} parent=1 // pred_check_branch
      %60 = sbr.rel (0) target = $region45
    $region44: #{tpu_custom_call.1} parent=1 // pred_region
      %61 = dma.done [#allocation6], 4096
    $region45: #{tpu_custom_call.1} parent=1 // pred_fallthru
      _
    %v63 = vld [vmem:[%s0] sm:$0xff]
    %v64 = vld [vmem:[%s0 + $0x8] sm:$0xff]
    %v65 = vld [vmem:[%s0 + $0x10] sm:$0xff]
    %v66 = vld [vmem:[%s0 + $0x18] sm:$0xff]
    %v67 = vld [vmem:[#allocation3] sm:$0xff]
    %v68 = vld [vmem:[#allocation3 + $0x8] sm:$0xff]
    %v69 = vld [vmem:[#allocation3 + $0x10] sm:$0xff]
    %v70 = vld [vmem:[#allocation3 + $0x18] sm:$0xff]
    %v71 = vld [vmem:[#allocation3 + $0x20] sm:$0xff]
    %v72 = vld [vmem:[#allocation3 + $0x28] sm:$0xff]
    %v73 = vld [vmem:[#allocation3 + $0x30] sm:$0xff]
    %v74 = vld [vmem:[#allocation3 + $0x38] sm:$0xff]
    %v75 = vld [vmem:[#allocation3 + $0x40] sm:$0xff]
    %v76 = vld [vmem:[#allocation3 + $0x48] sm:$0xff]
    %v77 = vld [vmem:[#allocation3 + $0x50] sm:$0xff]
    %v78 = vld [vmem:[#allocation3 + $0x58] sm:$0xff]
    %v79 = vld [vmem:[#allocation3 + $0x60] sm:$0xff]
    %v80 = vld [vmem:[#allocation3 + $0x68] sm:$0xff]
    %v81 = vld [vmem:[#allocation3 + $0x70] sm:$0xff]
    %v82 = vld [vmem:[#allocation3 + $0x78] sm:$0xff]
    %v83 = vld [vmem:[#allocation3 + $0x80] sm:$0xff]
    %v84 = vld [vmem:[#allocation3 + $0x88] sm:$0xff]
    %v85 = vld [vmem:[#allocation3 + $0x90] sm:$0xff]
    %v86 = vld [vmem:[#allocation3 + $0x98] sm:$0xff]
    %v87 = vld [vmem:[#allocation3 + $0xa0] sm:$0xff]
    %v88 = vld [vmem:[#allocation3 + $0xa8] sm:$0xff]
    %v89 = vld [vmem:[#allocation3 + $0xb0] sm:$0xff]
    %v90 = vld [vmem:[#allocation3 + $0xb8] sm:$0xff]
    %v91 = vld [vmem:[#allocation3 + $0xc0] sm:$0xff]
    %v92 = vld [vmem:[#allocation3 + $0xc8] sm:$0xff]
    %v93 = vld [vmem:[#allocation3 + $0xd0] sm:$0xff]
    %v94 = vld [vmem:[#allocation3 + $0xd8] sm:$0xff]
    %v95 = vld [vmem:[#allocation3 + $0xe0] sm:$0xff]
    %v96 = vld [vmem:[#allocation3 + $0xe8] sm:$0xff]
    %v97 = vld [vmem:[#allocation3 + $0xf0] sm:$0xff]
    %v98 = vld [vmem:[#allocation3 + $0xf8] sm:$0xff]
    %v99 = vld [vmem:[#allocation3 + $0x100] sm:$0xff]
    %v100 = vld [vmem:[#allocation3 + $0x108] sm:$0xff]
    %v101 = vld [vmem:[#allocation3 + $0x110] sm:$0xff]
    %v102 = vld [vmem:[#allocation3 + $0x118] sm:$0xff]
    %v103 = vld [vmem:[#allocation3 + $0x120] sm:$0xff]
    %v104 = vld [vmem:[#allocation3 + $0x128] sm:$0xff]
    %v105 = vld [vmem:[#allocation3 + $0x130] sm:$0xff]
    %v106 = vld [vmem:[#allocation3 + $0x138] sm:$0xff]
    %v107 = vld [vmem:[#allocation3 + $0x140] sm:$0xff]
    %v108 = vld [vmem:[#allocation3 + $0x148] sm:$0xff]
    %v109 = vld [vmem:[#allocation3 + $0x150] sm:$0xff]
    %v110 = vld [vmem:[#allocation3 + $0x158] sm:$0xff]
    %v111 = vld [vmem:[#allocation3 + $0x160] sm:$0xff]
    %v112 = vld [vmem:[#allocation3 + $0x168] sm:$0xff]
    %v113 = vld [vmem:[#allocation3 + $0x170] sm:$0xff]
    %v114 = vld [vmem:[#allocation3 + $0x178] sm:$0xff]
    %v115 = vld [vmem:[#allocation3 + $0x180] sm:$0xff]
    %v116 = vld [vmem:[#allocation3 + $0x188] sm:$0xff]
    %v117 = vld [vmem:[#allocation3 + $0x190] sm:$0xff]
    %v118 = vld [vmem:[#allocation3 + $0x198] sm:$0xff]
    %v119 = vld [vmem:[#allocation3 + $0x1a0] sm:$0xff]
    %v120 = vld [vmem:[#allocation3 + $0x1a8] sm:$0xff]
    %v121 = vld [vmem:[#allocation3 + $0x1b0] sm:$0xff]
    %v122 = vld [vmem:[#allocation3 + $0x1b8] sm:$0xff]
    %v123 = vld [vmem:[#allocation3 + $0x1c0] sm:$0xff]
    %v124 = vld [vmem:[#allocation3 + $0x1c8] sm:$0xff]
    %v125 = vld [vmem:[#allocation3 + $0x1d0] sm:$0xff]
    %v126 = vld [vmem:[#allocation3 + $0x1d8] sm:$0xff]
    %v127 = vld [vmem:[#allocation3 + $0x1e0] sm:$0xff]
    %v128 = vld [vmem:[#allocation3 + $0x1e8] sm:$0xff]
    %v129 = vld [vmem:[#allocation3 + $0x1f0] sm:$0xff]
    %v130 = vld [vmem:[#allocation3 + $0x1f8] sm:$0xff]
    %v131 = vld [vmem:[#allocation3 + $0x200] sm:$0xff]
    %v132 = vld [vmem:[#allocation3 + $0x208] sm:$0xff]
    %v133 = vld [vmem:[#allocation3 + $0x210] sm:$0xff]
    %v134 = vld [vmem:[#allocation3 + $0x218] sm:$0xff]
    %v135 = vld [vmem:[#allocation3 + $0x220] sm:$0xff]
    %v136 = vld [vmem:[#allocation3 + $0x228] sm:$0xff]
    %v137 = vld [vmem:[#allocation3 + $0x230] sm:$0xff]
    %v138 = vld [vmem:[#allocation3 + $0x238] sm:$0xff]
    %v139 = vld [vmem:[#allocation3 + $0x240] sm:$0xff]
    %v140 = vld [vmem:[#allocation3 + $0x248] sm:$0xff]
    %v141 = vld [vmem:[#allocation3 + $0x250] sm:$0xff]
    %v142 = vld [vmem:[#allocation3 + $0x258] sm:$0xff]
    %v143 = vld [vmem:[#allocation3 + $0x260] sm:$0xff]
    %v144 = vld [vmem:[#allocation3 + $0x268] sm:$0xff]
    %v145 = vld [vmem:[#allocation3 + $0x270] sm:$0xff]
    %v146 = vld [vmem:[#allocation3 + $0x278] sm:$0xff]
    %v147 = vld [vmem:[#allocation3 + $0x280] sm:$0xff]
    %v148 = vld [vmem:[#allocation3 + $0x288] sm:$0xff]
    %v149 = vld [vmem:[#allocation3 + $0x290] sm:$0xff]
    %v150 = vld [vmem:[#allocation3 + $0x298] sm:$0xff]
    %v151 = vld [vmem:[#allocation3 + $0x2a0] sm:$0xff]
    %v152 = vld [vmem:[#allocation3 + $0x2a8] sm:$0xff]
    %v153 = vld [vmem:[#allocation3 + $0x2b0] sm:$0xff]
    %v154 = vld [vmem:[#allocation3 + $0x2b8] sm:$0xff]
    %v155 = vld [vmem:[#allocation3 + $0x2c0] sm:$0xff]
    %v156 = vld [vmem:[#allocation3 + $0x2c8] sm:$0xff]
    %v157 = vld [vmem:[#allocation3 + $0x2d0] sm:$0xff]
    %v158 = vld [vmem:[#allocation3 + $0x2d8] sm:$0xff]
    %v159 = vld [vmem:[#allocation3 + $0x2e0] sm:$0xff]
    %v160 = vld [vmem:[#allocation3 + $0x2e8] sm:$0xff]
    %v161 = vld [vmem:[#allocation3 + $0x2f0] sm:$0xff]
    %v162 = vld [vmem:[#allocation3 + $0x2f8] sm:$0xff]
    %v163 = vld [vmem:[#allocation3 + $0x300] sm:$0xff]
    %v164 = vld [vmem:[#allocation3 + $0x308] sm:$0xff]
    %v165 = vld [vmem:[#allocation3 + $0x310] sm:$0xff]
    %v166 = vld [vmem:[#allocation3 + $0x318] sm:$0xff]
    %v167 = vld [vmem:[#allocation3 + $0x320] sm:$0xff]
    %v168 = vld [vmem:[#allocation3 + $0x328] sm:$0xff]
    %v169 = vld [vmem:[#allocation3 + $0x330] sm:$0xff]
    %v170 = vld [vmem:[#allocation3 + $0x338] sm:$0xff]
    %v171 = vld [vmem:[#allocation3 + $0x340] sm:$0xff]
    %v172 = vld [vmem:[#allocation3 + $0x348] sm:$0xff]
    %v173 = vld [vmem:[#allocation3 + $0x350] sm:$0xff]
    %v174 = vld [vmem:[#allocation3 + $0x358] sm:$0xff]
    %v175 = vld [vmem:[#allocation3 + $0x360] sm:$0xff]
    %v176 = vld [vmem:[#allocation3 + $0x368] sm:$0xff]
    %v177 = vld [vmem:[#allocation3 + $0x370] sm:$0xff]
    %v178 = vld [vmem:[#allocation3 + $0x378] sm:$0xff]
    %v179 = vld [vmem:[#allocation3 + $0x380] sm:$0xff]
    %v180 = vld [vmem:[#allocation3 + $0x388] sm:$0xff]
    %v181 = vld [vmem:[#allocation3 + $0x390] sm:$0xff]
    %v182 = vld [vmem:[#allocation3 + $0x398] sm:$0xff]
    %v183 = vld [vmem:[#allocation3 + $0x3a0] sm:$0xff]
    %v184 = vld [vmem:[#allocation3 + $0x3a8] sm:$0xff]
    %v185 = vld [vmem:[#allocation3 + $0x3b0] sm:$0xff]
    %v186 = vld [vmem:[#allocation3 + $0x3b8] sm:$0xff]
    %v187 = vld [vmem:[#allocation3 + $0x3c0] sm:$0xff]
    %v188 = vld [vmem:[#allocation3 + $0x3c8] sm:$0xff]
    %v189 = vld [vmem:[#allocation3 + $0x3d0] sm:$0xff]
    %v190 = vld [vmem:[#allocation3 + $0x3d8] sm:$0xff]
    %v191 = vld [vmem:[#allocation3 + $0x3e0] sm:$0xff]
    %v192 = vld [vmem:[#allocation3 + $0x3e8] sm:$0xff]
    %v193 = vld [vmem:[#allocation3 + $0x3f0] sm:$0xff]
    %v194 = vld [vmem:[#allocation3 + $0x3f8] sm:$0xff]
    %v195 = vld [vmem:[#allocation3 + $0x400] sm:$0xff]
    %v196 = vld [vmem:[#allocation3 + $0x408] sm:$0xff]
    %v197 = vld [vmem:[#allocation3 + $0x410] sm:$0xff]
    %v198 = vld [vmem:[#allocation3 + $0x418] sm:$0xff]
    %v199 = vld [vmem:[#allocation3 + $0x420] sm:$0xff]
    %v200 = vld [vmem:[#allocation3 + $0x428] sm:$0xff]
    %v201 = vld [vmem:[#allocation3 + $0x430] sm:$0xff]
    %v202 = vld [vmem:[#allocation3 + $0x438] sm:$0xff]
    %v203 = vld [vmem:[#allocation3 + $0x440] sm:$0xff]
    %v204 = vld [vmem:[#allocation3 + $0x448] sm:$0xff]
    %v205 = vld [vmem:[#allocation3 + $0x450] sm:$0xff]
    %v206 = vld [vmem:[#allocation3 + $0x458] sm:$0xff]
    %v207 = vld [vmem:[#allocation3 + $0x460] sm:$0xff]
    %v208 = vld [vmem:[#allocation3 + $0x468] sm:$0xff]
    %v209 = vld [vmem:[#allocation3 + $0x470] sm:$0xff]
    %v210 = vld [vmem:[#allocation3 + $0x478] sm:$0xff]
    %v211 = vld [vmem:[#allocation3 + $0x480] sm:$0xff]
    %v212 = vld [vmem:[#allocation3 + $0x488] sm:$0xff]
    %v213 = vld [vmem:[#allocation3 + $0x490] sm:$0xff]
    %v214 = vld [vmem:[#allocation3 + $0x498] sm:$0xff]
    %v215 = vld [vmem:[#allocation3 + $0x4a0] sm:$0xff]
    %v216 = vld [vmem:[#allocation3 + $0x4a8] sm:$0xff]
    %v217 = vld [vmem:[#allocation3 + $0x4b0] sm:$0xff]
    %v218 = vld [vmem:[#allocation3 + $0x4b8] sm:$0xff]
    %v219 = vld [vmem:[#allocation3 + $0x4c0] sm:$0xff]
    %v220 = vld [vmem:[#allocation3 + $0x4c8] sm:$0xff]
    %v221 = vld [vmem:[#allocation3 + $0x4d0] sm:$0xff]
    %v222 = vld [vmem:[#allocation3 + $0x4d8] sm:$0xff]
    %v223 = vld [vmem:[#allocation3 + $0x4e0] sm:$0xff]
    %v224 = vld [vmem:[#allocation3 + $0x4e8] sm:$0xff]
    %v225 = vld [vmem:[#allocation3 + $0x4f0] sm:$0xff]
    %v226 = vld [vmem:[#allocation3 + $0x4f8] sm:$0xff]
    %v227 = vld [vmem:[#allocation3 + $0x500] sm:$0xff]
    %v228 = vld [vmem:[#allocation3 + $0x508] sm:$0xff]
    %v229 = vld [vmem:[#allocation3 + $0x510] sm:$0xff]
    %v230 = vld [vmem:[#allocation3 + $0x518] sm:$0xff]
    %v231 = vld [vmem:[#allocation3 + $0x520] sm:$0xff]
    %v232 = vld [vmem:[#allocation3 + $0x528] sm:$0xff]
    %v233 = vld [vmem:[#allocation3 + $0x530] sm:$0xff]
    %v234 = vld [vmem:[#allocation3 + $0x538] sm:$0xff]
    %v235 = vld [vmem:[#allocation3 + $0x540] sm:$0xff]
    %v236 = vld [vmem:[#allocation3 + $0x548] sm:$0xff]
    %v237 = vld [vmem:[#allocation3 + $0x550] sm:$0xff]
    %v238 = vld [vmem:[#allocation3 + $0x558] sm:$0xff]
    %v239 = vld [vmem:[#allocation3 + $0x560] sm:$0xff]
    %v240 = vld [vmem:[#allocation3 + $0x568] sm:$0xff]
    %v241 = vld [vmem:[#allocation3 + $0x570] sm:$0xff]
    %v242 = vld [vmem:[#allocation3 + $0x578] sm:$0xff]
    %v243 = vld [vmem:[#allocation3 + $0x580] sm:$0xff]
    %v244 = vld [vmem:[#allocation3 + $0x588] sm:$0xff]
    %v245 = vld [vmem:[#allocation3 + $0x590] sm:$0xff]
    %v246 = vld [vmem:[#allocation3 + $0x598] sm:$0xff]
    %v247 = vld [vmem:[#allocation3 + $0x5a0] sm:$0xff]
    %v248 = vld [vmem:[#allocation3 + $0x5a8] sm:$0xff]
    %v249 = vld [vmem:[#allocation3 + $0x5b0] sm:$0xff]
    %v250 = vld [vmem:[#allocation3 + $0x5b8] sm:$0xff]
    %v251 = vld [vmem:[#allocation3 + $0x5c0] sm:$0xff]
    %v252 = vld [vmem:[#allocation3 + $0x5c8] sm:$0xff]
    %v253 = vld [vmem:[#allocation3 + $0x5d0] sm:$0xff]
    %v254 = vld [vmem:[#allocation3 + $0x5d8] sm:$0xff]
    %v255 = vld [vmem:[#allocation3 + $0x5e0] sm:$0xff]
    %v256 = vld [vmem:[#allocation3 + $0x5e8] sm:$0xff]
    %v257 = vld [vmem:[#allocation3 + $0x5f0] sm:$0xff]
    %v258 = vld [vmem:[#allocation3 + $0x5f8] sm:$0xff]
    %v259 = vld [vmem:[#allocation3 + $0x600] sm:$0xff]
    %v260 = vld [vmem:[#allocation3 + $0x608] sm:$0xff]
    %v261 = vld [vmem:[#allocation3 + $0x610] sm:$0xff]
    %v262 = vld [vmem:[#allocation3 + $0x618] sm:$0xff]
    %v263 = vld [vmem:[#allocation3 + $0x620] sm:$0xff]
    %v264 = vld [vmem:[#allocation3 + $0x628] sm:$0xff]
    %v265 = vld [vmem:[#allocation3 + $0x630] sm:$0xff]
    %v266 = vld [vmem:[#allocation3 + $0x638] sm:$0xff]
    %v267 = vld [vmem:[#allocation3 + $0x640] sm:$0xff]
    %v268 = vld [vmem:[#allocation3 + $0x648] sm:$0xff]
    %v269 = vld [vmem:[#allocation3 + $0x650] sm:$0xff]
    %v270 = vld [vmem:[#allocation3 + $0x658] sm:$0xff]
    %v271 = vld [vmem:[#allocation3 + $0x660] sm:$0xff]
    %v272 = vld [vmem:[#allocation3 + $0x668] sm:$0xff]
    %v273 = vld [vmem:[#allocation3 + $0x670] sm:$0xff]
    %v274 = vld [vmem:[#allocation3 + $0x678] sm:$0xff]
    %v275 = vld [vmem:[#allocation3 + $0x680] sm:$0xff]
    %v276 = vld [vmem:[#allocation3 + $0x688] sm:$0xff]
    %v277 = vld [vmem:[#allocation3 + $0x690] sm:$0xff]
    %v278 = vld [vmem:[#allocation3 + $0x698] sm:$0xff]
    %v279 = vld [vmem:[#allocation3 + $0x6a0] sm:$0xff]
    %v280 = vld [vmem:[#allocation3 + $0x6a8] sm:$0xff]
    %v281 = vld [vmem:[#allocation3 + $0x6b0] sm:$0xff]
    %v282 = vld [vmem:[#allocation3 + $0x6b8] sm:$0xff]
    %v283 = vld [vmem:[#allocation3 + $0x6c0] sm:$0xff]
    %v284 = vld [vmem:[#allocation3 + $0x6c8] sm:$0xff]
    %v285 = vld [vmem:[#allocation3 + $0x6d0] sm:$0xff]
    %v286 = vld [vmem:[#allocation3 + $0x6d8] sm:$0xff]
    %v287 = vld [vmem:[#allocation3 + $0x6e0] sm:$0xff]
    %v288 = vld [vmem:[#allocation3 + $0x6e8] sm:$0xff]
    %v289 = vld [vmem:[#allocation3 + $0x6f0] sm:$0xff]
    %v290 = vld [vmem:[#allocation3 + $0x6f8] sm:$0xff]
    %v291 = vld [vmem:[#allocation3 + $0x700] sm:$0xff]
    %v292 = vld [vmem:[#allocation3 + $0x708] sm:$0xff]
    %v293 = vld [vmem:[#allocation3 + $0x710] sm:$0xff]
    %v294 = vld [vmem:[#allocation3 + $0x718] sm:$0xff]
    %v295 = vld [vmem:[#allocation3 + $0x720] sm:$0xff]
    %v296 = vld [vmem:[#allocation3 + $0x728] sm:$0xff]
    %v297 = vld [vmem:[#allocation3 + $0x730] sm:$0xff]
    %v298 = vld [vmem:[#allocation3 + $0x738] sm:$0xff]
    %v299 = vld [vmem:[#allocation3 + $0x740] sm:$0xff]
    %v300 = vld [vmem:[#allocation3 + $0x748] sm:$0xff]
    %v301 = vld [vmem:[#allocation3 + $0x750] sm:$0xff]
    %v302 = vld [vmem:[#allocation3 + $0x758] sm:$0xff]
    %v303 = vld [vmem:[#allocation3 + $0x760] sm:$0xff]
    %v304 = vld [vmem:[#allocation3 + $0x768] sm:$0xff]
    %v305 = vld [vmem:[#allocation3 + $0x770] sm:$0xff]
    %v306 = vld [vmem:[#allocation3 + $0x778] sm:$0xff]
    %v307 = vld [vmem:[#allocation3 + $0x780] sm:$0xff]
    %v308 = vld [vmem:[#allocation3 + $0x788] sm:$0xff]
    %v309 = vld [vmem:[#allocation3 + $0x790] sm:$0xff]
    %v310 = vld [vmem:[#allocation3 + $0x798] sm:$0xff]
    %v311 = vld [vmem:[#allocation3 + $0x7a0] sm:$0xff]
    %v312 = vld [vmem:[#allocation3 + $0x7a8] sm:$0xff]
    %v313 = vld [vmem:[#allocation3 + $0x7b0] sm:$0xff]
    %v314 = vld [vmem:[#allocation3 + $0x7b8] sm:$0xff]
    %v315 = vld [vmem:[#allocation3 + $0x7c0] sm:$0xff]
    %v316 = vld [vmem:[#allocation3 + $0x7c8] sm:$0xff]
    %v317 = vld [vmem:[%s2] sm:$0xf]
    %v319 = vlaneseq
    %v320 = vshrl.u32 %v319, 7
    %v321 = vsub.s32 0, %v320
    %v322 = vrot.slane %v317, %v321
    %v323 = vlaneseq
    %v324 = vshrl.u32 %v323, 7
    %v325 = vsub.s32 1, %v324
    %v326 = vrot.slane %v317, %v325
    %v327 = vlaneseq
    %v328 = vshrl.u32 %v327, 7
    %v329 = vsub.s32 2, %v328
    %v330 = vrot.slane %v317, %v329
    %v331 = vlaneseq
    %v332 = vshrl.u32 %v331, 7
    %v333 = vsub.s32 3, %v332
    %v334 = vrot.slane %v317, %v333
    %v343 = vunpack.c.l.b16 %v63
    %v344 = vunpack.c.h.b16 %v63
    %v345 = vunpack.c.l.b16 %v64
    %v346 = vunpack.c.h.b16 %v64
    %v347 = vunpack.c.l.b16 %v65
    %v348 = vunpack.c.h.b16 %v65
    %v349 = vunpack.c.l.b16 %v66
    %v350 = vunpack.c.h.b16 %v66
    %v351 = vpack.c.b16 %v343, %v343
    %v352 = vpack.c.b16 %v344, %v344
    %v353 = vpack.c.b16 %v345, %v345
    %v354 = vpack.c.b16 %v346, %v346
    %v355 = vpack.c.b16 %v347, %v347
    %v356 = vpack.c.b16 %v348, %v348
    %v357 = vpack.c.b16 %v349, %v349
    %v358 = vpack.c.b16 %v350, %v350
    %v616 = vunpack.c.l.b16 %v67
    %v617 = vunpack.c.h.b16 %v67
    %v618 = vunpack.c.l.b16 %v68
    %v619 = vunpack.c.h.b16 %v68
    %v620 = vunpack.c.l.b16 %v69
    %v621 = vunpack.c.h.b16 %v69
    %v622 = vunpack.c.l.b16 %v70
    %v623 = vunpack.c.h.b16 %v70
    %v624 = vunpack.c.l.b16 %v71
    %v625 = vunpack.c.h.b16 %v71
    %v626 = vunpack.c.l.b16 %v72
    %v627 = vunpack.c.h.b16 %v72
    %v628 = vunpack.c.l.b16 %v73
    %v629 = vunpack.c.h.b16 %v73
    %v630 = vunpack.c.l.b16 %v74
    %v631 = vunpack.c.h.b16 %v74
    %v632 = vunpack.c.l.b16 %v75
    %v633 = vunpack.c.h.b16 %v75
    %v634 = vunpack.c.l.b16 %v76
    %v635 = vunpack.c.h.b16 %v76
    %v636 = vunpack.c.l.b16 %v77
    %v637 = vunpack.c.h.b16 %v77
    %v638 = vunpack.c.l.b16 %v78
    %v639 = vunpack.c.h.b16 %v78
    %v640 = vunpack.c.l.b16 %v79
    %v641 = vunpack.c.h.b16 %v79
    %v642 = vunpack.c.l.b16 %v80
    %v643 = vunpack.c.h.b16 %v80
    %v644 = vunpack.c.l.b16 %v81
    %v645 = vunpack.c.h.b16 %v81
    %v646 = vunpack.c.l.b16 %v82
    %v647 = vunpack.c.h.b16 %v82
    %v648 = vunpack.c.l.b16 %v83
    %v649 = vunpack.c.h.b16 %v83
    %v650 = vunpack.c.l.b16 %v84
    %v651 = vunpack.c.h.b16 %v84
    %v652 = vunpack.c.l.b16 %v85
    %v653 = vunpack.c.h.b16 %v85
    %v654 = vunpack.c.l.b16 %v86
    %v655 = vunpack.c.h.b16 %v86
    %v656 = vunpack.c.l.b16 %v87
    %v657 = vunpack.c.h.b16 %v87
    %v658 = vunpack.c.l.b16 %v88
    %v659 = vunpack.c.h.b16 %v88
    %v660 = vunpack.c.l.b16 %v89
    %v661 = vunpack.c.h.b16 %v89
    %v662 = vunpack.c.l.b16 %v90
    %v663 = vunpack.c.h.b16 %v90
    %v664 = vunpack.c.l.b16 %v91
    %v665 = vunpack.c.h.b16 %v91
    %v666 = vunpack.c.l.b16 %v92
    %v667 = vunpack.c.h.b16 %v92
    %v668 = vunpack.c.l.b16 %v93
    %v669 = vunpack.c.h.b16 %v93
    %v670 = vunpack.c.l.b16 %v94
    %v671 = vunpack.c.h.b16 %v94
    %v672 = vunpack.c.l.b16 %v95
    %v673 = vunpack.c.h.b16 %v95
    %v674 = vunpack.c.l.b16 %v96
    %v675 = vunpack.c.h.b16 %v96
    %v676 = vunpack.c.l.b16 %v97
    %v677 = vunpack.c.h.b16 %v97
    %v678 = vunpack.c.l.b16 %v98
    %v679 = vunpack.c.h.b16 %v98
    %v680 = vunpack.c.l.b16 %v99
    %v681 = vunpack.c.h.b16 %v99
    %v682 = vunpack.c.l.b16 %v100
    %v683 = vunpack.c.h.b16 %v100
    %v684 = vunpack.c.l.b16 %v101
    %v685 = vunpack.c.h.b16 %v101
    %v686 = vunpack.c.l.b16 %v102
    %v687 = vunpack.c.h.b16 %v102
    %v688 = vunpack.c.l.b16 %v103
    %v689 = vunpack.c.h.b16 %v103
    %v690 = vunpack.c.l.b16 %v104
    %v691 = vunpack.c.h.b16 %v104
    %v692 = vunpack.c.l.b16 %v105
    %v693 = vunpack.c.h.b16 %v105
    %v694 = vunpack.c.l.b16 %v106
    %v695 = vunpack.c.h.b16 %v106
    %v696 = vunpack.c.l.b16 %v107
    %v697 = vunpack.c.h.b16 %v107
    %v698 = vunpack.c.l.b16 %v108
    %v699 = vunpack.c.h.b16 %v108
    %v700 = vunpack.c.l.b16 %v109
    %v701 = vunpack.c.h.b16 %v109
    %v702 = vunpack.c.l.b16 %v110
    %v703 = vunpack.c.h.b16 %v110
    %v704 = vunpack.c.l.b16 %v111
    %v705 = vunpack.c.h.b16 %v111
    %v706 = vunpack.c.l.b16 %v112
    %v707 = vunpack.c.h.b16 %v112
    %v708 = vunpack.c.l.b16 %v113
    %v709 = vunpack.c.h.b16 %v113
    %v710 = vunpack.c.l.b16 %v114
    %v711 = vunpack.c.h.b16 %v114
    %v712 = vunpack.c.l.b16 %v115
    %v713 = vunpack.c.h.b16 %v115
    %v714 = vunpack.c.l.b16 %v116
    %v715 = vunpack.c.h.b16 %v116
    %v716 = vunpack.c.l.b16 %v117
    %v717 = vunpack.c.h.b16 %v117
    %v718 = vunpack.c.l.b16 %v118
    %v719 = vunpack.c.h.b16 %v118
    %v720 = vunpack.c.l.b16 %v119
    %v721 = vunpack.c.h.b16 %v119
    %v722 = vunpack.c.l.b16 %v120
    %v723 = vunpack.c.h.b16 %v120
    %v724 = vunpack.c.l.b16 %v121
    %v725 = vunpack.c.h.b16 %v121
    %v726 = vunpack.c.l.b16 %v122
    %v727 = vunpack.c.h.b16 %v122
    %v728 = vunpack.c.l.b16 %v123
    %v729 = vunpack.c.h.b16 %v123
    %v730 = vunpack.c.l.b16 %v124
    %v731 = vunpack.c.h.b16 %v124
    %v732 = vunpack.c.l.b16 %v125
    %v733 = vunpack.c.h.b16 %v125
    %v734 = vunpack.c.l.b16 %v126
    %v735 = vunpack.c.h.b16 %v126
    %v736 = vunpack.c.l.b16 %v127
    %v737 = vunpack.c.h.b16 %v127
    %v738 = vunpack.c.l.b16 %v128
    %v739 = vunpack.c.h.b16 %v128
    %v740 = vunpack.c.l.b16 %v129
    %v741 = vunpack.c.h.b16 %v129
    %v742 = vunpack.c.l.b16 %v130
    %v743 = vunpack.c.h.b16 %v130
    %v744 = vunpack.c.l.b16 %v131
    %v745 = vunpack.c.h.b16 %v131
    %v746 = vunpack.c.l.b16 %v132
    %v747 = vunpack.c.h.b16 %v132
    %v748 = vunpack.c.l.b16 %v133
    %v749 = vunpack.c.h.b16 %v133
    %v750 = vunpack.c.l.b16 %v134
    %v751 = vunpack.c.h.b16 %v134
    %v752 = vunpack.c.l.b16 %v135
    %v753 = vunpack.c.h.b16 %v135
    %v754 = vunpack.c.l.b16 %v136
    %v755 = vunpack.c.h.b16 %v136
    %v756 = vunpack.c.l.b16 %v137
    %v757 = vunpack.c.h.b16 %v137
    %v758 = vunpack.c.l.b16 %v138
    %v759 = vunpack.c.h.b16 %v138
    %v760 = vunpack.c.l.b16 %v139
    %v761 = vunpack.c.h.b16 %v139
    %v762 = vunpack.c.l.b16 %v140
    %v763 = vunpack.c.h.b16 %v140
    %v764 = vunpack.c.l.b16 %v141
    %v765 = vunpack.c.h.b16 %v141
    %v766 = vunpack.c.l.b16 %v142
    %v767 = vunpack.c.h.b16 %v142
    %v768 = vunpack.c.l.b16 %v143
    %v769 = vunpack.c.h.b16 %v143
    %v770 = vunpack.c.l.b16 %v144
    %v771 = vunpack.c.h.b16 %v144
    %v772 = vunpack.c.l.b16 %v145
    %v773 = vunpack.c.h.b16 %v145
    %v774 = vunpack.c.l.b16 %v146
    %v775 = vunpack.c.h.b16 %v146
    %v776 = vunpack.c.l.b16 %v147
    %v777 = vunpack.c.h.b16 %v147
    %v778 = vunpack.c.l.b16 %v148
    %v779 = vunpack.c.h.b16 %v148
    %v780 = vunpack.c.l.b16 %v149
    %v781 = vunpack.c.h.b16 %v149
    %v782 = vunpack.c.l.b16 %v150
    %v783 = vunpack.c.h.b16 %v150
    %v784 = vunpack.c.l.b16 %v151
    %v785 = vunpack.c.h.b16 %v151
    %v786 = vunpack.c.l.b16 %v152
    %v787 = vunpack.c.h.b16 %v152
    %v788 = vunpack.c.l.b16 %v153
    %v789 = vunpack.c.h.b16 %v153
    %v790 = vunpack.c.l.b16 %v154
    %v791 = vunpack.c.h.b16 %v154
    %v792 = vunpack.c.l.b16 %v155
    %v793 = vunpack.c.h.b16 %v155
    %v794 = vunpack.c.l.b16 %v156
    %v795 = vunpack.c.h.b16 %v156
    %v796 = vunpack.c.l.b16 %v157
    %v797 = vunpack.c.h.b16 %v157
    %v798 = vunpack.c.l.b16 %v158
    %v799 = vunpack.c.h.b16 %v158
    %v800 = vunpack.c.l.b16 %v159
    %v801 = vunpack.c.h.b16 %v159
    %v802 = vunpack.c.l.b16 %v160
    %v803 = vunpack.c.h.b16 %v160
    %v804 = vunpack.c.l.b16 %v161
    %v805 = vunpack.c.h.b16 %v161
    %v806 = vunpack.c.l.b16 %v162
    %v807 = vunpack.c.h.b16 %v162
    %v808 = vunpack.c.l.b16 %v163
    %v809 = vunpack.c.h.b16 %v163
    %v810 = vunpack.c.l.b16 %v164
    %v811 = vunpack.c.h.b16 %v164
    %v812 = vunpack.c.l.b16 %v165
    %v813 = vunpack.c.h.b16 %v165
    %v814 = vunpack.c.l.b16 %v166
    %v815 = vunpack.c.h.b16 %v166
    %v816 = vunpack.c.l.b16 %v167
    %v817 = vunpack.c.h.b16 %v167
    %v818 = vunpack.c.l.b16 %v168
    %v819 = vunpack.c.h.b16 %v168
    %v820 = vunpack.c.l.b16 %v169
    %v821 = vunpack.c.h.b16 %v169
    %v822 = vunpack.c.l.b16 %v170
    %v823 = vunpack.c.h.b16 %v170
    %v824 = vunpack.c.l.b16 %v171
    %v825 = vunpack.c.h.b16 %v171
    %v826 = vunpack.c.l.b16 %v172
    %v827 = vunpack.c.h.b16 %v172
    %v828 = vunpack.c.l.b16 %v173
    %v829 = vunpack.c.h.b16 %v173
    %v830 = vunpack.c.l.b16 %v174
    %v831 = vunpack.c.h.b16 %v174
    %v832 = vunpack.c.l.b16 %v175
    %v833 = vunpack.c.h.b16 %v175
    %v834 = vunpack.c.l.b16 %v176
    %v835 = vunpack.c.h.b16 %v176
    %v836 = vunpack.c.l.b16 %v177
    %v837 = vunpack.c.h.b16 %v177
    %v838 = vunpack.c.l.b16 %v178
    %v839 = vunpack.c.h.b16 %v178
    %v840 = vunpack.c.l.b16 %v179
    %v841 = vunpack.c.h.b16 %v179
    %v842 = vunpack.c.l.b16 %v180
    %v843 = vunpack.c.h.b16 %v180
    %v844 = vunpack.c.l.b16 %v181
    %v845 = vunpack.c.h.b16 %v181
    %v846 = vunpack.c.l.b16 %v182
    %v847 = vunpack.c.h.b16 %v182
    %v848 = vunpack.c.l.b16 %v183
    %v849 = vunpack.c.h.b16 %v183
    %v850 = vunpack.c.l.b16 %v184
    %v851 = vunpack.c.h.b16 %v184
    %v852 = vunpack.c.l.b16 %v185
    %v853 = vunpack.c.h.b16 %v185
    %v854 = vunpack.c.l.b16 %v186
    %v855 = vunpack.c.h.b16 %v186
    %v856 = vunpack.c.l.b16 %v187
    %v857 = vunpack.c.h.b16 %v187
    %v858 = vunpack.c.l.b16 %v188
    %v859 = vunpack.c.h.b16 %v188
    %v860 = vunpack.c.l.b16 %v189
    %v861 = vunpack.c.h.b16 %v189
    %v862 = vunpack.c.l.b16 %v190
    %v863 = vunpack.c.h.b16 %v190
    %v864 = vunpack.c.l.b16 %v191
    %v865 = vunpack.c.h.b16 %v191
    %v866 = vunpack.c.l.b16 %v192
    %v867 = vunpack.c.h.b16 %v192
    %v868 = vunpack.c.l.b16 %v193
    %v869 = vunpack.c.h.b16 %v193
    %v870 = vunpack.c.l.b16 %v194
    %v871 = vunpack.c.h.b16 %v194
    %v872 = vunpack.c.l.b16 %v195
    %v873 = vunpack.c.h.b16 %v195
    %v874 = vunpack.c.l.b16 %v196
    %v875 = vunpack.c.h.b16 %v196
    %v876 = vunpack.c.l.b16 %v197
    %v877 = vunpack.c.h.b16 %v197
    %v878 = vunpack.c.l.b16 %v198
    %v879 = vunpack.c.h.b16 %v198
    %v880 = vunpack.c.l.b16 %v199
    %v881 = vunpack.c.h.b16 %v199
    %v882 = vunpack.c.l.b16 %v200
    %v883 = vunpack.c.h.b16 %v200
    %v884 = vunpack.c.l.b16 %v201
    %v885 = vunpack.c.h.b16 %v201
    %v886 = vunpack.c.l.b16 %v202
    %v887 = vunpack.c.h.b16 %v202
    %v888 = vunpack.c.l.b16 %v203
    %v889 = vunpack.c.h.b16 %v203
    %v890 = vunpack.c.l.b16 %v204
    %v891 = vunpack.c.h.b16 %v204
    %v892 = vunpack.c.l.b16 %v205
    %v893 = vunpack.c.h.b16 %v205
    %v894 = vunpack.c.l.b16 %v206
    %v895 = vunpack.c.h.b16 %v206
    %v896 = vunpack.c.l.b16 %v207
    %v897 = vunpack.c.h.b16 %v207
    %v898 = vunpack.c.l.b16 %v208
    %v899 = vunpack.c.h.b16 %v208
    %v900 = vunpack.c.l.b16 %v209
    %v901 = vunpack.c.h.b16 %v209
    %v902 = vunpack.c.l.b16 %v210
    %v903 = vunpack.c.h.b16 %v210
    %v904 = vunpack.c.l.b16 %v211
    %v905 = vunpack.c.h.b16 %v211
    %v906 = vunpack.c.l.b16 %v212
    %v907 = vunpack.c.h.b16 %v212
    %v908 = vunpack.c.l.b16 %v213
    %v909 = vunpack.c.h.b16 %v213
    %v910 = vunpack.c.l.b16 %v214
    %v911 = vunpack.c.h.b16 %v214
    %v912 = vunpack.c.l.b16 %v215
    %v913 = vunpack.c.h.b16 %v215
    %v914 = vunpack.c.l.b16 %v216
    %v915 = vunpack.c.h.b16 %v216
    %v916 = vunpack.c.l.b16 %v217
    %v917 = vunpack.c.h.b16 %v217
    %v918 = vunpack.c.l.b16 %v218
    %v919 = vunpack.c.h.b16 %v218
    %v920 = vunpack.c.l.b16 %v219
    %v921 = vunpack.c.h.b16 %v219
    %v922 = vunpack.c.l.b16 %v220
    %v923 = vunpack.c.h.b16 %v220
    %v924 = vunpack.c.l.b16 %v221
    %v925 = vunpack.c.h.b16 %v221
    %v926 = vunpack.c.l.b16 %v222
    %v927 = vunpack.c.h.b16 %v222
    %v928 = vunpack.c.l.b16 %v223
    %v929 = vunpack.c.h.b16 %v223
    %v930 = vunpack.c.l.b16 %v224
    %v931 = vunpack.c.h.b16 %v224
    %v932 = vunpack.c.l.b16 %v225
    %v933 = vunpack.c.h.b16 %v225
    %v934 = vunpack.c.l.b16 %v226
    %v935 = vunpack.c.h.b16 %v226
    %v936 = vunpack.c.l.b16 %v227
    %v937 = vunpack.c.h.b16 %v227
    %v938 = vunpack.c.l.b16 %v228
    %v939 = vunpack.c.h.b16 %v228
    %v940 = vunpack.c.l.b16 %v229
    %v941 = vunpack.c.h.b16 %v229
    %v942 = vunpack.c.l.b16 %v230
    %v943 = vunpack.c.h.b16 %v230
    %v944 = vunpack.c.l.b16 %v231
    %v945 = vunpack.c.h.b16 %v231
    %v946 = vunpack.c.l.b16 %v232
    %v947 = vunpack.c.h.b16 %v232
    %v948 = vunpack.c.l.b16 %v233
    %v949 = vunpack.c.h.b16 %v233
    %v950 = vunpack.c.l.b16 %v234
    %v951 = vunpack.c.h.b16 %v234
    %v952 = vunpack.c.l.b16 %v235
    %v953 = vunpack.c.h.b16 %v235
    %v954 = vunpack.c.l.b16 %v236
    %v955 = vunpack.c.h.b16 %v236
    %v956 = vunpack.c.l.b16 %v237
    %v957 = vunpack.c.h.b16 %v237
    %v958 = vunpack.c.l.b16 %v238
    %v959 = vunpack.c.h.b16 %v238
    %v960 = vunpack.c.l.b16 %v239
    %v961 = vunpack.c.h.b16 %v239
    %v962 = vunpack.c.l.b16 %v240
    %v963 = vunpack.c.h.b16 %v240
    %v964 = vunpack.c.l.b16 %v241
    %v965 = vunpack.c.h.b16 %v241
    %v966 = vunpack.c.l.b16 %v242
    %v967 = vunpack.c.h.b16 %v242
    %v968 = vunpack.c.l.b16 %v243
    %v969 = vunpack.c.h.b16 %v243
    %v970 = vunpack.c.l.b16 %v244
    %v971 = vunpack.c.h.b16 %v244
    %v972 = vunpack.c.l.b16 %v245
    %v973 = vunpack.c.h.b16 %v245
    %v974 = vunpack.c.l.b16 %v246
    %v975 = vunpack.c.h.b16 %v246
    %v976 = vunpack.c.l.b16 %v247
    %v977 = vunpack.c.h.b16 %v247
    %v978 = vunpack.c.l.b16 %v248
    %v979 = vunpack.c.h.b16 %v248
    %v980 = vunpack.c.l.b16 %v249
    %v981 = vunpack.c.h.b16 %v249
    %v982 = vunpack.c.l.b16 %v250
    %v983 = vunpack.c.h.b16 %v250
    %v984 = vunpack.c.l.b16 %v251
    %v985 = vunpack.c.h.b16 %v251
    %v986 = vunpack.c.l.b16 %v252
    %v987 = vunpack.c.h.b16 %v252
    %v988 = vunpack.c.l.b16 %v253
    %v989 = vunpack.c.h.b16 %v253
    %v990 = vunpack.c.l.b16 %v254
    %v991 = vunpack.c.h.b16 %v254
    %v992 = vunpack.c.l.b16 %v255
    %v993 = vunpack.c.h.b16 %v255
    %v994 = vunpack.c.l.b16 %v256
    %v995 = vunpack.c.h.b16 %v256
    %v996 = vunpack.c.l.b16 %v257
    %v997 = vunpack.c.h.b16 %v257
    %v998 = vunpack.c.l.b16 %v258
    %v999 = vunpack.c.h.b16 %v258
    %v1000 = vunpack.c.l.b16 %v259
    %v1001 = vunpack.c.h.b16 %v259
    %v1002 = vunpack.c.l.b16 %v260
    %v1003 = vunpack.c.h.b16 %v260
    %v1004 = vunpack.c.l.b16 %v261
    %v1005 = vunpack.c.h.b16 %v261
    %v1006 = vunpack.c.l.b16 %v262
    %v1007 = vunpack.c.h.b16 %v262
    %v1008 = vunpack.c.l.b16 %v263
    %v1009 = vunpack.c.h.b16 %v263
    %v1010 = vunpack.c.l.b16 %v264
    %v1011 = vunpack.c.h.b16 %v264
    %v1012 = vunpack.c.l.b16 %v265
    %v1013 = vunpack.c.h.b16 %v265
    %v1014 = vunpack.c.l.b16 %v266
    %v1015 = vunpack.c.h.b16 %v266
    %v1016 = vunpack.c.l.b16 %v267
    %v1017 = vunpack.c.h.b16 %v267
    %v1018 = vunpack.c.l.b16 %v268
    %v1019 = vunpack.c.h.b16 %v268
    %v1020 = vunpack.c.l.b16 %v269
    %v1021 = vunpack.c.h.b16 %v269
    %v1022 = vunpack.c.l.b16 %v270
    %v1023 = vunpack.c.h.b16 %v270
    %v1024 = vunpack.c.l.b16 %v271
    %v1025 = vunpack.c.h.b16 %v271
    %v1026 = vunpack.c.l.b16 %v272
    %v1027 = vunpack.c.h.b16 %v272
    %v1028 = vunpack.c.l.b16 %v273
    %v1029 = vunpack.c.h.b16 %v273
    %v1030 = vunpack.c.l.b16 %v274
    %v1031 = vunpack.c.h.b16 %v274
    %v1032 = vunpack.c.l.b16 %v275
    %v1033 = vunpack.c.h.b16 %v275
    %v1034 = vunpack.c.l.b16 %v276
    %v1035 = vunpack.c.h.b16 %v276
    %v1036 = vunpack.c.l.b16 %v277
    %v1037 = vunpack.c.h.b16 %v277
    %v1038 = vunpack.c.l.b16 %v278
    %v1039 = vunpack.c.h.b16 %v278
    %v1040 = vunpack.c.l.b16 %v279
    %v1041 = vunpack.c.h.b16 %v279
    %v1042 = vunpack.c.l.b16 %v280
    %v1043 = vunpack.c.h.b16 %v280
    %v1044 = vunpack.c.l.b16 %v281
    %v1045 = vunpack.c.h.b16 %v281
    %v1046 = vunpack.c.l.b16 %v282
    %v1047 = vunpack.c.h.b16 %v282
    %v1048 = vunpack.c.l.b16 %v283
    %v1049 = vunpack.c.h.b16 %v283
    %v1050 = vunpack.c.l.b16 %v284
    %v1051 = vunpack.c.h.b16 %v284
    %v1052 = vunpack.c.l.b16 %v285
    %v1053 = vunpack.c.h.b16 %v285
    %v1054 = vunpack.c.l.b16 %v286
    %v1055 = vunpack.c.h.b16 %v286
    %v1056 = vunpack.c.l.b16 %v287
    %v1057 = vunpack.c.h.b16 %v287
    %v1058 = vunpack.c.l.b16 %v288
    %v1059 = vunpack.c.h.b16 %v288
    %v1060 = vunpack.c.l.b16 %v289
    %v1061 = vunpack.c.h.b16 %v289
    %v1062 = vunpack.c.l.b16 %v290
    %v1063 = vunpack.c.h.b16 %v290
    %v1064 = vunpack.c.l.b16 %v291
    %v1065 = vunpack.c.h.b16 %v291
    %v1066 = vunpack.c.l.b16 %v292
    %v1067 = vunpack.c.h.b16 %v292
    %v1068 = vunpack.c.l.b16 %v293
    %v1069 = vunpack.c.h.b16 %v293
    %v1070 = vunpack.c.l.b16 %v294
    %v1071 = vunpack.c.h.b16 %v294
    %v1072 = vunpack.c.l.b16 %v295
    %v1073 = vunpack.c.h.b16 %v295
    %v1074 = vunpack.c.l.b16 %v296
    %v1075 = vunpack.c.h.b16 %v296
    %v1076 = vunpack.c.l.b16 %v297
    %v1077 = vunpack.c.h.b16 %v297
    %v1078 = vunpack.c.l.b16 %v298
    %v1079 = vunpack.c.h.b16 %v298
    %v1080 = vunpack.c.l.b16 %v299
    %v1081 = vunpack.c.h.b16 %v299
    %v1082 = vunpack.c.l.b16 %v300
    %v1083 = vunpack.c.h.b16 %v300
    %v1084 = vunpack.c.l.b16 %v301
    %v1085 = vunpack.c.h.b16 %v301
    %v1086 = vunpack.c.l.b16 %v302
    %v1087 = vunpack.c.h.b16 %v302
    %v1088 = vunpack.c.l.b16 %v303
    %v1089 = vunpack.c.h.b16 %v303
    %v1090 = vunpack.c.l.b16 %v304
    %v1091 = vunpack.c.h.b16 %v304
    %v1092 = vunpack.c.l.b16 %v305
    %v1093 = vunpack.c.h.b16 %v305
    %v1094 = vunpack.c.l.b16 %v306
    %v1095 = vunpack.c.h.b16 %v306
    %v1096 = vunpack.c.l.b16 %v307
    %v1097 = vunpack.c.h.b16 %v307
    %v1098 = vunpack.c.l.b16 %v308
    %v1099 = vunpack.c.h.b16 %v308
    %v1100 = vunpack.c.l.b16 %v309
    %v1101 = vunpack.c.h.b16 %v309
    %v1102 = vunpack.c.l.b16 %v310
    %v1103 = vunpack.c.h.b16 %v310
    %v1104 = vunpack.c.l.b16 %v311
    %v1105 = vunpack.c.h.b16 %v311
    %v1106 = vunpack.c.l.b16 %v312
    %v1107 = vunpack.c.h.b16 %v312
    %v1108 = vunpack.c.l.b16 %v313
    %v1109 = vunpack.c.h.b16 %v313
    %v1110 = vunpack.c.l.b16 %v314
    %v1111 = vunpack.c.h.b16 %v314
    %v1112 = vunpack.c.l.b16 %v315
    %v1113 = vunpack.c.h.b16 %v315
    %v1114 = vunpack.c.l.b16 %v316
    %v1115 = vunpack.c.h.b16 %v316
    %v1116 = vpack.c.b16 %v620, %v616
    %v1117 = vpack.c.b16 %v621, %v617
    %v1118 = vpack.c.b16 %v622, %v618
    %v1119 = vpack.c.b16 %v623, %v619
    %v1120 = vpack.c.b16 %v628, %v624
    %v1121 = vpack.c.b16 %v629, %v625
    %v1122 = vpack.c.b16 %v630, %v626
    %v1123 = vpack.c.b16 %v631, %v627
    %v1124 = vpack.c.b16 %v636, %v632
    %v1125 = vpack.c.b16 %v637, %v633
    %v1126 = vpack.c.b16 %v638, %v634
    %v1127 = vpack.c.b16 %v639, %v635
    %v1128 = vpack.c.b16 %v644, %v640
    %v1129 = vpack.c.b16 %v645, %v641
    %v1130 = vpack.c.b16 %v646, %v642
    %v1131 = vpack.c.b16 %v647, %v643
    %v1132 = vpack.c.b16 %v652, %v648
    %v1133 = vpack.c.b16 %v653, %v649
    %v1134 = vpack.c.b16 %v654, %v650
    %v1135 = vpack.c.b16 %v655, %v651
    %v1136 = vpack.c.b16 %v660, %v656
    %v1137 = vpack.c.b16 %v661, %v657
    %v1138 = vpack.c.b16 %v662, %v658
    %v1139 = vpack.c.b16 %v663, %v659
    %v1140 = vpack.c.b16 %v668, %v664
    %v1141 = vpack.c.b16 %v669, %v665
    %v1142 = vpack.c.b16 %v670, %v666
    %v1143 = vpack.c.b16 %v671, %v667
    %v1144 = vpack.c.b16 %v676, %v672
    %v1145 = vpack.c.b16 %v677, %v673
    %v1146 = vpack.c.b16 %v678, %v674
    %v1147 = vpack.c.b16 %v679, %v675
    %v1148 = vpack.c.b16 %v684, %v680
    %v1149 = vpack.c.b16 %v685, %v681
    %v1150 = vpack.c.b16 %v686, %v682
    %v1151 = vpack.c.b16 %v687, %v683
    %v1152 = vpack.c.b16 %v692, %v688
    %v1153 = vpack.c.b16 %v693, %v689
    %v1154 = vpack.c.b16 %v694, %v690
    %v1155 = vpack.c.b16 %v695, %v691
    %v1156 = vpack.c.b16 %v700, %v696
    %v1157 = vpack.c.b16 %v701, %v697
    %v1158 = vpack.c.b16 %v702, %v698
    %v1159 = vpack.c.b16 %v703, %v699
    %v1160 = vpack.c.b16 %v708, %v704
    %v1161 = vpack.c.b16 %v709, %v705
    %v1162 = vpack.c.b16 %v710, %v706
    %v1163 = vpack.c.b16 %v711, %v707
    %v1164 = vpack.c.b16 %v716, %v712
    %v1165 = vpack.c.b16 %v717, %v713
    %v1166 = vpack.c.b16 %v718, %v714
    %v1167 = vpack.c.b16 %v719, %v715
    %v1168 = vpack.c.b16 %v724, %v720
    %v1169 = vpack.c.b16 %v725, %v721
    %v1170 = vpack.c.b16 %v726, %v722
    %v1171 = vpack.c.b16 %v727, %v723
    %v1172 = vpack.c.b16 %v732, %v728
    %v1173 = vpack.c.b16 %v733, %v729
    %v1174 = vpack.c.b16 %v734, %v730
    %v1175 = vpack.c.b16 %v735, %v731
    %v1176 = vpack.c.b16 %v740, %v736
    %v1177 = vpack.c.b16 %v741, %v737
    %v1178 = vpack.c.b16 %v742, %v738
    %v1179 = vpack.c.b16 %v743, %v739
    %v1180 = vpack.c.b16 %v748, %v744
    %v1181 = vpack.c.b16 %v749, %v745
    %v1182 = vpack.c.b16 %v750, %v746
    %v1183 = vpack.c.b16 %v751, %v747
    %v1184 = vpack.c.b16 %v756, %v752
    %v1185 = vpack.c.b16 %v757, %v753
    %v1186 = vpack.c.b16 %v758, %v754
    %v1187 = vpack.c.b16 %v759, %v755
    %v1188 = vpack.c.b16 %v764, %v760
    %v1189 = vpack.c.b16 %v765, %v761
    %v1190 = vpack.c.b16 %v766, %v762
    %v1191 = vpack.c.b16 %v767, %v763
    %v1192 = vpack.c.b16 %v772, %v768
    %v1193 = vpack.c.b16 %v773, %v769
    %v1194 = vpack.c.b16 %v774, %v770
    %v1195 = vpack.c.b16 %v775, %v771
    %v1196 = vpack.c.b16 %v780, %v776
    %v1197 = vpack.c.b16 %v781, %v777
    %v1198 = vpack.c.b16 %v782, %v778
    %v1199 = vpack.c.b16 %v783, %v779
    %v1200 = vpack.c.b16 %v788, %v784
    %v1201 = vpack.c.b16 %v789, %v785
    %v1202 = vpack.c.b16 %v790, %v786
    %v1203 = vpack.c.b16 %v791, %v787
    %v1204 = vpack.c.b16 %v796, %v792
    %v1205 = vpack.c.b16 %v797, %v793
    %v1206 = vpack.c.b16 %v798, %v794
    %v1207 = vpack.c.b16 %v799, %v795
    %v1208 = vpack.c.b16 %v804, %v800
    %v1209 = vpack.c.b16 %v805, %v801
    %v1210 = vpack.c.b16 %v806, %v802
    %v1211 = vpack.c.b16 %v807, %v803
    %v1212 = vpack.c.b16 %v812, %v808
    %v1213 = vpack.c.b16 %v813, %v809
    %v1214 = vpack.c.b16 %v814, %v810
    %v1215 = vpack.c.b16 %v815, %v811
    %v1216 = vpack.c.b16 %v820, %v816
    %v1217 = vpack.c.b16 %v821, %v817
    %v1218 = vpack.c.b16 %v822, %v818
    %v1219 = vpack.c.b16 %v823, %v819
    %v1220 = vpack.c.b16 %v828, %v824
    %v1221 = vpack.c.b16 %v829, %v825
    %v1222 = vpack.c.b16 %v830, %v826
    %v1223 = vpack.c.b16 %v831, %v827
    %v1224 = vpack.c.b16 %v836, %v832
    %v1225 = vpack.c.b16 %v837, %v833
    %v1226 = vpack.c.b16 %v838, %v834
    %v1227 = vpack.c.b16 %v839, %v835
    %v1228 = vpack.c.b16 %v844, %v840
    %v1229 = vpack.c.b16 %v845, %v841
    %v1230 = vpack.c.b16 %v846, %v842
    %v1231 = vpack.c.b16 %v847, %v843
    %v1232 = vpack.c.b16 %v852, %v848
    %v1233 = vpack.c.b16 %v853, %v849
    %v1234 = vpack.c.b16 %v854, %v850
    %v1235 = vpack.c.b16 %v855, %v851
    %v1236 = vpack.c.b16 %v860, %v856
    %v1237 = vpack.c.b16 %v861, %v857
    %v1238 = vpack.c.b16 %v862, %v858
    %v1239 = vpack.c.b16 %v863, %v859
    %v1240 = vpack.c.b16 %v868, %v864
    %v1241 = vpack.c.b16 %v869, %v865
    %v1242 = vpack.c.b16 %v870, %v866
    %v1243 = vpack.c.b16 %v871, %v867
    %v1244 = vpack.c.b16 %v876, %v872
    %v1245 = vpack.c.b16 %v877, %v873
    %v1246 = vpack.c.b16 %v878, %v874
    %v1247 = vpack.c.b16 %v879, %v875
    %v1248 = vpack.c.b16 %v884, %v880
    %v1249 = vpack.c.b16 %v885, %v881
    %v1250 = vpack.c.b16 %v886, %v882
    %v1251 = vpack.c.b16 %v887, %v883
    %v1252 = vpack.c.b16 %v892, %v888
    %v1253 = vpack.c.b16 %v893, %v889
    %v1254 = vpack.c.b16 %v894, %v890
    %v1255 = vpack.c.b16 %v895, %v891
    %v1256 = vpack.c.b16 %v900, %v896
    %v1257 = vpack.c.b16 %v901, %v897
    %v1258 = vpack.c.b16 %v902, %v898
    %v1259 = vpack.c.b16 %v903, %v899
    %v1260 = vpack.c.b16 %v908, %v904
    %v1261 = vpack.c.b16 %v909, %v905
    %v1262 = vpack.c.b16 %v910, %v906
    %v1263 = vpack.c.b16 %v911, %v907
    %v1264 = vpack.c.b16 %v916, %v912
    %v1265 = vpack.c.b16 %v917, %v913
    %v1266 = vpack.c.b16 %v918, %v914
    %v1267 = vpack.c.b16 %v919, %v915
    %v1268 = vpack.c.b16 %v924, %v920
    %v1269 = vpack.c.b16 %v925, %v921
    %v1270 = vpack.c.b16 %v926, %v922
    %v1271 = vpack.c.b16 %v927, %v923
    %v1272 = vpack.c.b16 %v932, %v928
    %v1273 = vpack.c.b16 %v933, %v929
    %v1274 = vpack.c.b16 %v934, %v930
    %v1275 = vpack.c.b16 %v935, %v931
    %v1276 = vpack.c.b16 %v940, %v936
    %v1277 = vpack.c.b16 %v941, %v937
    %v1278 = vpack.c.b16 %v942, %v938
    %v1279 = vpack.c.b16 %v943, %v939
    %v1280 = vpack.c.b16 %v948, %v944
    %v1281 = vpack.c.b16 %v949, %v945
    %v1282 = vpack.c.b16 %v950, %v946
    %v1283 = vpack.c.b16 %v951, %v947
    %v1284 = vpack.c.b16 %v956, %v952
    %v1285 = vpack.c.b16 %v957, %v953
    %v1286 = vpack.c.b16 %v958, %v954
    %v1287 = vpack.c.b16 %v959, %v955
    %v1288 = vpack.c.b16 %v964, %v960
    %v1289 = vpack.c.b16 %v965, %v961
    %v1290 = vpack.c.b16 %v966, %v962
    %v1291 = vpack.c.b16 %v967, %v963
    %v1292 = vpack.c.b16 %v972, %v968
    %v1293 = vpack.c.b16 %v973, %v969
    %v1294 = vpack.c.b16 %v974, %v970
    %v1295 = vpack.c.b16 %v975, %v971
    %v1296 = vpack.c.b16 %v980, %v976
    %v1297 = vpack.c.b16 %v981, %v977
    %v1298 = vpack.c.b16 %v982, %v978
    %v1299 = vpack.c.b16 %v983, %v979
    %v1300 = vpack.c.b16 %v988, %v984
    %v1301 = vpack.c.b16 %v989, %v985
    %v1302 = vpack.c.b16 %v990, %v986
    %v1303 = vpack.c.b16 %v991, %v987
    %v1304 = vpack.c.b16 %v996, %v992
    %v1305 = vpack.c.b16 %v997, %v993
    %v1306 = vpack.c.b16 %v998, %v994
    %v1307 = vpack.c.b16 %v999, %v995
    %v1308 = vpack.c.b16 %v1004, %v1000
    %v1309 = vpack.c.b16 %v1005, %v1001
    %v1310 = vpack.c.b16 %v1006, %v1002
    %v1311 = vpack.c.b16 %v1007, %v1003
    %v1312 = vpack.c.b16 %v1012, %v1008
    %v1313 = vpack.c.b16 %v1013, %v1009
    %v1314 = vpack.c.b16 %v1014, %v1010
    %v1315 = vpack.c.b16 %v1015, %v1011
    %v1316 = vpack.c.b16 %v1020, %v1016
    %v1317 = vpack.c.b16 %v1021, %v1017
    %v1318 = vpack.c.b16 %v1022, %v1018
    %v1319 = vpack.c.b16 %v1023, %v1019
    %v1320 = vpack.c.b16 %v1028, %v1024
    %v1321 = vpack.c.b16 %v1029, %v1025
    %v1322 = vpack.c.b16 %v1030, %v1026
    %v1323 = vpack.c.b16 %v1031, %v1027
    %v1324 = vpack.c.b16 %v1036, %v1032
    %v1325 = vpack.c.b16 %v1037, %v1033
    %v1326 = vpack.c.b16 %v1038, %v1034
    %v1327 = vpack.c.b16 %v1039, %v1035
    %v1328 = vpack.c.b16 %v1044, %v1040
    %v1329 = vpack.c.b16 %v1045, %v1041
    %v1330 = vpack.c.b16 %v1046, %v1042
    %v1331 = vpack.c.b16 %v1047, %v1043
    %v1332 = vpack.c.b16 %v1052, %v1048
    %v1333 = vpack.c.b16 %v1053, %v1049
    %v1334 = vpack.c.b16 %v1054, %v1050
    %v1335 = vpack.c.b16 %v1055, %v1051
    %v1336 = vpack.c.b16 %v1060, %v1056
    %v1337 = vpack.c.b16 %v1061, %v1057
    %v1338 = vpack.c.b16 %v1062, %v1058
    %v1339 = vpack.c.b16 %v1063, %v1059
    %v1340 = vpack.c.b16 %v1068, %v1064
    %v1341 = vpack.c.b16 %v1069, %v1065
    %v1342 = vpack.c.b16 %v1070, %v1066
    %v1343 = vpack.c.b16 %v1071, %v1067
    %v1344 = vpack.c.b16 %v1076, %v1072
    %v1345 = vpack.c.b16 %v1077, %v1073
    %v1346 = vpack.c.b16 %v1078, %v1074
    %v1347 = vpack.c.b16 %v1079, %v1075
    %v1348 = vpack.c.b16 %v1084, %v1080
    %v1349 = vpack.c.b16 %v1085, %v1081
    %v1350 = vpack.c.b16 %v1086, %v1082
    %v1351 = vpack.c.b16 %v1087, %v1083
    %v1352 = vpack.c.b16 %v1092, %v1088
    %v1353 = vpack.c.b16 %v1093, %v1089
    %v1354 = vpack.c.b16 %v1094, %v1090
    %v1355 = vpack.c.b16 %v1095, %v1091
    %v1356 = vpack.c.b16 %v1100, %v1096
    %v1357 = vpack.c.b16 %v1101, %v1097
    %v1358 = vpack.c.b16 %v1102, %v1098
    %v1359 = vpack.c.b16 %v1103, %v1099
    %v1360 = vpack.c.b16 %v1108, %v1104
    %v1361 = vpack.c.b16 %v1109, %v1105
    %v1362 = vpack.c.b16 %v1110, %v1106
    %v1363 = vpack.c.b16 %v1111, %v1107
    %v1364 = vpack.c.b16 %v1112, %v1112
    %v1365 = vpack.c.b16 %v1113, %v1113
    %v1366 = vpack.c.b16 %v1114, %v1114
    %v1367 = vpack.c.b16 %v1115, %v1115
    %vm1616 = vcmask 850944
    %v1618 = vsel %vm1616, %v358, 0
    %vm1620 = vcmask 1043456
    %v1622 = vsel %vm1620, %v1364, 0
    %v1625 = vsel %vm1620, %v1365, 0
    %v1628 = vsel %vm1620, %v1366, 0
    %v1631 = vsel %vm1620, %v1367, 0
    %1633 = vmatprep.subr.bf16.mxu0 %v1145
    %1634 = vmatpush1.bf16.msra.mxu0 %v1144
    %1635 = vmatprep.subr.bf16.mxu0 %v1141
    %1636 = vmatpush1.bf16.msra.mxu0 %v1140
    %1637 = vmatprep.subr.bf16.mxu0 %v1137
    %1638 = vmatpush1.bf16.msra.mxu0 %v1136
    %1639 = vmatprep.subr.bf16.mxu0 %v1133
    %1640 = vmatpush1.bf16.msra.mxu0 %v1132
    %1641 = vmatprep.subr.bf16.mxu0 %v1129
    %1642 = vmatpush1.bf16.msra.mxu0 %v1128
    %1643 = vmatprep.subr.bf16.mxu0 %v1125
    %1644 = vmatpush1.bf16.msra.mxu0 %v1124
    %1645 = vmatprep.subr.bf16.mxu0 %v1121
    %1646 = vmatpush1.bf16.msra.mxu0 %v1120
    %1647 = vmatprep.subr.bf16.mxu0 %v1117
    %1648 = vmatpush1.bf16.msra.mxu0 %v1116
    %1649 = vmatprep.subr.bf16.mxu0 %v1177
    %1650 = vmatpush2.bf16.msra.mxu0 %v1176
    %1651 = vmatprep.subr.bf16.mxu0 %v1173
    %1652 = vmatpush2.bf16.msra.mxu0 %v1172
    %1653 = vmatprep.subr.bf16.mxu0 %v1169
    %1654 = vmatpush2.bf16.msra.mxu0 %v1168
    %1655 = vmatprep.subr.bf16.mxu0 %v1165
    %1656 = vmatpush2.bf16.msra.mxu0 %v1164
    %1657 = vmatprep.subr.bf16.mxu0 %v1161
    %1658 = vmatpush2.bf16.msra.mxu0 %v1160
    %1659 = vmatprep.subr.bf16.mxu0 %v1157
    %1660 = vmatpush2.bf16.msra.mxu0 %v1156
    %1661 = vmatprep.subr.bf16.mxu0 %v1153
    %1662 = vmatpush2.bf16.msra.mxu0 %v1152
    %1663 = vmatprep.subr.bf16.mxu0 %v1149
    %1664 = vmatpush2.bf16.msra.mxu0 %v1148
    %1665 = vmatprep.mubr.bf16.mxu0 %v352
    %1666 = vmatmul.mubr.bf16.gmra.mxu0 %v351
    %v1667 = vpop.f32.mrf.mxu0
    %v1668 = vadd.f32 %v322, %v1667
    %v1669 = vpop.f32.mrf.mxu0
    %v1670 = vadd.f32 %v326, %v1669
    %v1671 = vpop.f32.mrf.mxu0
    %v1672 = vpop.f32.mrf.mxu0
    %1673 = vdwg.mxu0
    %1674 = vmatprep.subr.bf16.mxu0 %v1209
    %1675 = vmatpush1.bf16.msra.mxu0 %v1208
    %1676 = vmatprep.subr.bf16.mxu0 %v1205
    %1677 = vmatpush1.bf16.msra.mxu0 %v1204
    %1678 = vmatprep.subr.bf16.mxu0 %v1201
    %1679 = vmatpush1.bf16.msra.mxu0 %v1200
    %1680 = vmatprep.subr.bf16.mxu0 %v1197
    %1681 = vmatpush1.bf16.msra.mxu0 %v1196
    %1682 = vmatprep.subr.bf16.mxu0 %v1193
    %1683 = vmatpush1.bf16.msra.mxu0 %v1192
    %1684 = vmatprep.subr.bf16.mxu0 %v1189
    %1685 = vmatpush1.bf16.msra.mxu0 %v1188
    %1686 = vmatprep.subr.bf16.mxu0 %v1185
    %1687 = vmatpush1.bf16.msra.mxu0 %v1184
    %1688 = vmatprep.subr.bf16.mxu0 %v1181
    %1689 = vmatpush1.bf16.msra.mxu0 %v1180
    %1690 = vmatprep.subr.bf16.mxu0 %v1241
    %1691 = vmatpush2.bf16.msra.mxu0 %v1240
    %1692 = vmatprep.subr.bf16.mxu0 %v1237
    %1693 = vmatpush2.bf16.msra.mxu0 %v1236
    %1694 = vmatprep.subr.bf16.mxu0 %v1233
    %1695 = vmatpush2.bf16.msra.mxu0 %v1232
    %1696 = vmatprep.subr.bf16.mxu0 %v1229
    %1697 = vmatpush2.bf16.msra.mxu0 %v1228
    %1698 = vmatprep.subr.bf16.mxu0 %v1225
    %1699 = vmatpush2.bf16.msra.mxu0 %v1224
    %1700 = vmatprep.subr.bf16.mxu0 %v1221
    %1701 = vmatpush2.bf16.msra.mxu0 %v1220
    %1702 = vmatprep.subr.bf16.mxu0 %v1217
    %1703 = vmatpush2.bf16.msra.mxu0 %v1216
    %1704 = vmatprep.subr.bf16.mxu0 %v1213
    %1705 = vmatpush2.bf16.msra.mxu0 %v1212
    %1706 = vmatprep.mubr.bf16.mxu0 %v354
    %1707 = vmatmul.mubr.bf16.gmra.mxu0 %v353
    %v1708 = vpop.f32.mrf.mxu0
    %v1709 = vadd.f32 %v1668, %v1708
    %v1710 = vpop.f32.mrf.mxu0
    %v1711 = vadd.f32 %v1670, %v1710
    %v1712 = vpop.f32.mrf.mxu0
    %v1713 = vpop.f32.mrf.mxu0
    %1714 = vdwg.mxu0
    %1715 = vmatprep.subr.bf16.mxu0 %v1273
    %1716 = vmatpush1.bf16.msra.mxu0 %v1272
    %1717 = vmatprep.subr.bf16.mxu0 %v1269
    %1718 = vmatpush1.bf16.msra.mxu0 %v1268
    %1719 = vmatprep.subr.bf16.mxu0 %v1265
    %1720 = vmatpush1.bf16.msra.mxu0 %v1264
    %1721 = vmatprep.subr.bf16.mxu0 %v1261
    %1722 = vmatpush1.bf16.msra.mxu0 %v1260
    %1723 = vmatprep.subr.bf16.mxu0 %v1257
    %1724 = vmatpush1.bf16.msra.mxu0 %v1256
    %1725 = vmatprep.subr.bf16.mxu0 %v1253
    %1726 = vmatpush1.bf16.msra.mxu0 %v1252
    %1727 = vmatprep.subr.bf16.mxu0 %v1249
    %1728 = vmatpush1.bf16.msra.mxu0 %v1248
    %1729 = vmatprep.subr.bf16.mxu0 %v1245
    %1730 = vmatpush1.bf16.msra.mxu0 %v1244
    %1731 = vmatprep.subr.bf16.mxu0 %v1305
    %1732 = vmatpush2.bf16.msra.mxu0 %v1304
    %1733 = vmatprep.subr.bf16.mxu0 %v1301
    %1734 = vmatpush2.bf16.msra.mxu0 %v1300
    %1735 = vmatprep.subr.bf16.mxu0 %v1297
    %1736 = vmatpush2.bf16.msra.mxu0 %v1296
    %1737 = vmatprep.subr.bf16.mxu0 %v1293
    %1738 = vmatpush2.bf16.msra.mxu0 %v1292
    %1739 = vmatprep.subr.bf16.mxu0 %v1289
    %1740 = vmatpush2.bf16.msra.mxu0 %v1288
    %1741 = vmatprep.subr.bf16.mxu0 %v1285
    %1742 = vmatpush2.bf16.msra.mxu0 %v1284
    %1743 = vmatprep.subr.bf16.mxu0 %v1281
    %1744 = vmatpush2.bf16.msra.mxu0 %v1280
    %1745 = vmatprep.subr.bf16.mxu0 %v1277
    %1746 = vmatpush2.bf16.msra.mxu0 %v1276
    %1747 = vmatprep.mubr.bf16.mxu0 %v356
    %1748 = vmatmul.mubr.bf16.gmra.mxu0 %v355
    %v1749 = vpop.f32.mrf.mxu0
    %v1750 = vadd.f32 %v1709, %v1749
    %v1751 = vpop.f32.mrf.mxu0
    %v1752 = vadd.f32 %v1711, %v1751
    %v1753 = vpop.f32.mrf.mxu0
    %v1754 = vpop.f32.mrf.mxu0
    %1755 = vdwg.mxu0
    %1756 = vmatprep.subr.bf16.mxu0 %v1337
    %1757 = vmatpush1.bf16.msra.mxu0 %v1336
    %1758 = vmatprep.subr.bf16.mxu0 %v1333
    %1759 = vmatpush1.bf16.msra.mxu0 %v1332
    %1760 = vmatprep.subr.bf16.mxu0 %v1329
    %1761 = vmatpush1.bf16.msra.mxu0 %v1328
    %1762 = vmatprep.subr.bf16.mxu0 %v1325
    %1763 = vmatpush1.bf16.msra.mxu0 %v1324
    %1764 = vmatprep.subr.bf16.mxu0 %v1321
    %1765 = vmatpush1.bf16.msra.mxu0 %v1320
    %1766 = vmatprep.subr.bf16.mxu0 %v1317
    %1767 = vmatpush1.bf16.msra.mxu0 %v1316
    %1768 = vmatprep.subr.bf16.mxu0 %v1313
    %1769 = vmatpush1.bf16.msra.mxu0 %v1312
    %1770 = vmatprep.subr.bf16.mxu0 %v1309
    %1771 = vmatpush1.bf16.msra.mxu0 %v1308
    %1772 = vmatprep.subr.bf16.mxu0 0
    %1773 = vmatpush2.bf16.msra.mxu0 0
    %1774 = vmatprep.subr.bf16.mxu0 %v1625
    %1775 = vmatpush2.bf16.msra.mxu0 %v1622
    %1776 = vmatprep.subr.bf16.mxu0 %v1361
    %1777 = vmatpush2.bf16.msra.mxu0 %v1360
    %1778 = vmatprep.subr.bf16.mxu0 %v1357
    %1779 = vmatpush2.bf16.msra.mxu0 %v1356
    %1780 = vmatprep.subr.bf16.mxu0 %v1353
    %1781 = vmatpush2.bf16.msra.mxu0 %v1352
    %1782 = vmatprep.subr.bf16.mxu0 %v1349
    %1783 = vmatpush2.bf16.msra.mxu0 %v1348
    %1784 = vmatprep.subr.bf16.mxu0 %v1345
    %1785 = vmatpush2.bf16.msra.mxu0 %v1344
    %1786 = vmatprep.subr.bf16.mxu0 %v1341
    %1787 = vmatpush2.bf16.msra.mxu0 %v1340
    %1788 = vmatprep.mubr.bf16.mxu0 %v1618
    %1789 = vmatmul.mubr.bf16.gmra.mxu0 %v357
    %v1790 = vpop.f32.mrf.mxu0
    %v1791 = vadd.f32 %v1750, %v1790
    %v1792 = vpop.f32.mrf.mxu0
    %v1793 = vadd.f32 %v1752, %v1792
    %v1794 = vpop.f32.mrf.mxu0
    %v1795 = vpop.f32.mrf.mxu0
    %1796 = vdwg.mxu0
    %1797 = vmatprep.subr.bf16.mxu0 %v1147
    %1798 = vmatpush1.bf16.msra.mxu0 %v1146
    %1799 = vmatprep.subr.bf16.mxu0 %v1143
    %1800 = vmatpush1.bf16.msra.mxu0 %v1142
    %1801 = vmatprep.subr.bf16.mxu0 %v1139
    %1802 = vmatpush1.bf16.msra.mxu0 %v1138
    %1803 = vmatprep.subr.bf16.mxu0 %v1135
    %1804 = vmatpush1.bf16.msra.mxu0 %v1134
    %1805 = vmatprep.subr.bf16.mxu0 %v1131
    %1806 = vmatpush1.bf16.msra.mxu0 %v1130
    %1807 = vmatprep.subr.bf16.mxu0 %v1127
    %1808 = vmatpush1.bf16.msra.mxu0 %v1126
    %1809 = vmatprep.subr.bf16.mxu0 %v1123
    %1810 = vmatpush1.bf16.msra.mxu0 %v1122
    %1811 = vmatprep.subr.bf16.mxu0 %v1119
    %1812 = vmatpush1.bf16.msra.mxu0 %v1118
    %1813 = vmatprep.subr.bf16.mxu0 %v1179
    %1814 = vmatpush2.bf16.msra.mxu0 %v1178
    %1815 = vmatprep.subr.bf16.mxu0 %v1175
    %1816 = vmatpush2.bf16.msra.mxu0 %v1174
    %1817 = vmatprep.subr.bf16.mxu0 %v1171
    %1818 = vmatpush2.bf16.msra.mxu0 %v1170
    %1819 = vmatprep.subr.bf16.mxu0 %v1167
    %1820 = vmatpush2.bf16.msra.mxu0 %v1166
    %1821 = vmatprep.subr.bf16.mxu0 %v1163
    %1822 = vmatpush2.bf16.msra.mxu0 %v1162
    %1823 = vmatprep.subr.bf16.mxu0 %v1159
    %1824 = vmatpush2.bf16.msra.mxu0 %v1158
    %1825 = vmatprep.subr.bf16.mxu0 %v1155
    %1826 = vmatpush2.bf16.msra.mxu0 %v1154
    %1827 = vmatprep.subr.bf16.mxu0 %v1151
    %1828 = vmatpush2.bf16.msra.mxu0 %v1150
    %1829 = vmatprep.mubr.bf16.mxu0 %v352
    %1830 = vmatmul.mubr.bf16.gmra.mxu0 %v351
    %v1831 = vpop.f32.mrf.mxu0
    %v1832 = vadd.f32 %v330, %v1831
    %v1833 = vpop.f32.mrf.mxu0
    %v1834 = vadd.f32 %v334, %v1833
    %v1835 = vpop.f32.mrf.mxu0
    %v1836 = vpop.f32.mrf.mxu0
    %1837 = vdwg.mxu0
    %1838 = vmatprep.subr.bf16.mxu0 %v1211
    %1839 = vmatpush1.bf16.msra.mxu0 %v1210
    %1840 = vmatprep.subr.bf16.mxu0 %v1207
    %1841 = vmatpush1.bf16.msra.mxu0 %v1206
    %1842 = vmatprep.subr.bf16.mxu0 %v1203
    %1843 = vmatpush1.bf16.msra.mxu0 %v1202
    %1844 = vmatprep.subr.bf16.mxu0 %v1199
    %1845 = vmatpush1.bf16.msra.mxu0 %v1198
    %1846 = vmatprep.subr.bf16.mxu0 %v1195
    %1847 = vmatpush1.bf16.msra.mxu0 %v1194
    %1848 = vmatprep.subr.bf16.mxu0 %v1191
    %1849 = vmatpush1.bf16.msra.mxu0 %v1190
    %1850 = vmatprep.subr.bf16.mxu0 %v1187
    %1851 = vmatpush1.bf16.msra.mxu0 %v1186
    %1852 = vmatprep.subr.bf16.mxu0 %v1183
    %1853 = vmatpush1.bf16.msra.mxu0 %v1182
    %1854 = vmatprep.subr.bf16.mxu0 %v1243
    %1855 = vmatpush2.bf16.msra.mxu0 %v1242
    %1856 = vmatprep.subr.bf16.mxu0 %v1239
    %1857 = vmatpush2.bf16.msra.mxu0 %v1238
    %1858 = vmatprep.subr.bf16.mxu0 %v1235
    %1859 = vmatpush2.bf16.msra.mxu0 %v1234
    %1860 = vmatprep.subr.bf16.mxu0 %v1231
    %1861 = vmatpush2.bf16.msra.mxu0 %v1230
    %1862 = vmatprep.subr.bf16.mxu0 %v1227
    %1863 = vmatpush2.bf16.msra.mxu0 %v1226
    %1864 = vmatprep.subr.bf16.mxu0 %v1223
    %1865 = vmatpush2.bf16.msra.mxu0 %v1222
    %1866 = vmatprep.subr.bf16.mxu0 %v1219
    %1867 = vmatpush2.bf16.msra.mxu0 %v1218
    %1868 = vmatprep.subr.bf16.mxu0 %v1215
    %1869 = vmatpush2.bf16.msra.mxu0 %v1214
    %1870 = vmatprep.mubr.bf16.mxu0 %v354
    %1871 = vmatmul.mubr.bf16.gmra.mxu0 %v353
    %v1872 = vpop.f32.mrf.mxu0
    %v1873 = vadd.f32 %v1832, %v1872
    %v1874 = vpop.f32.mrf.mxu0
    %v1875 = vadd.f32 %v1834, %v1874
    %v1876 = vpop.f32.mrf.mxu0
    %v1877 = vpop.f32.mrf.mxu0
    %1878 = vdwg.mxu0
    %1879 = vmatprep.subr.bf16.mxu0 %v1275
    %1880 = vmatpush1.bf16.msra.mxu0 %v1274
    %1881 = vmatprep.subr.bf16.mxu0 %v1271
    %1882 = vmatpush1.bf16.msra.mxu0 %v1270
    %1883 = vmatprep.subr.bf16.mxu0 %v1267
    %1884 = vmatpush1.bf16.msra.mxu0 %v1266
    %1885 = vmatprep.subr.bf16.mxu0 %v1263
    %1886 = vmatpush1.bf16.msra.mxu0 %v1262
    %1887 = vmatprep.subr.bf16.mxu0 %v1259
    %1888 = vmatpush1.bf16.msra.mxu0 %v1258
    %1889 = vmatprep.subr.bf16.mxu0 %v1255
    %1890 = vmatpush1.bf16.msra.mxu0 %v1254
    %1891 = vmatprep.subr.bf16.mxu0 %v1251
    %1892 = vmatpush1.bf16.msra.mxu0 %v1250
    %1893 = vmatprep.subr.bf16.mxu0 %v1247
    %1894 = vmatpush1.bf16.msra.mxu0 %v1246
    %1895 = vmatprep.subr.bf16.mxu0 %v1307
    %1896 = vmatpush2.bf16.msra.mxu0 %v1306
    %1897 = vmatprep.subr.bf16.mxu0 %v1303
    %1898 = vmatpush2.bf16.msra.mxu0 %v1302
    %1899 = vmatprep.subr.bf16.mxu0 %v1299
    %1900 = vmatpush2.bf16.msra.mxu0 %v1298
    %1901 = vmatprep.subr.bf16.mxu0 %v1295
    %1902 = vmatpush2.bf16.msra.mxu0 %v1294
    %1903 = vmatprep.subr.bf16.mxu0 %v1291
    %1904 = vmatpush2.bf16.msra.mxu0 %v1290
    %1905 = vmatprep.subr.bf16.mxu0 %v1287
    %1906 = vmatpush2.bf16.msra.mxu0 %v1286
    %1907 = vmatprep.subr.bf16.mxu0 %v1283
    %1908 = vmatpush2.bf16.msra.mxu0 %v1282
    %1909 = vmatprep.subr.bf16.mxu0 %v1279
    %1910 = vmatpush2.bf16.msra.mxu0 %v1278
    %1911 = vmatprep.mubr.bf16.mxu0 %v356
    %1912 = vmatmul.mubr.bf16.gmra.mxu0 %v355
    %v1913 = vpop.f32.mrf.mxu0
    %v1914 = vadd.f32 %v1873, %v1913
    %v1915 = vpop.f32.mrf.mxu0
    %v1916 = vadd.f32 %v1875, %v1915
    %v1917 = vpop.f32.mrf.mxu0
    %v1918 = vpop.f32.mrf.mxu0
    %1919 = vdwg.mxu0
    %1920 = vmatprep.subr.bf16.mxu0 %v1339
    %1921 = vmatpush1.bf16.msra.mxu0 %v1338
    %1922 = vmatprep.subr.bf16.mxu0 %v1335
    %1923 = vmatpush1.bf16.msra.mxu0 %v1334
    %1924 = vmatprep.subr.bf16.mxu0 %v1331
    %1925 = vmatpush1.bf16.msra.mxu0 %v1330
    %1926 = vmatprep.subr.bf16.mxu0 %v1327
    %1927 = vmatpush1.bf16.msra.mxu0 %v1326
    %1928 = vmatprep.subr.bf16.mxu0 %v1323
    %1929 = vmatpush1.bf16.msra.mxu0 %v1322
    %1930 = vmatprep.subr.bf16.mxu0 %v1319
    %1931 = vmatpush1.bf16.msra.mxu0 %v1318
    %1932 = vmatprep.subr.bf16.mxu0 %v1315
    %1933 = vmatpush1.bf16.msra.mxu0 %v1314
    %1934 = vmatprep.subr.bf16.mxu0 %v1311
    %1935 = vmatpush1.bf16.msra.mxu0 %v1310
    %1936 = vmatprep.subr.bf16.mxu0 0
    %1937 = vmatpush2.bf16.msra.mxu0 0
    %1938 = vmatprep.subr.bf16.mxu0 %v1631
    %1939 = vmatpush2.bf16.msra.mxu0 %v1628
    %1940 = vmatprep.subr.bf16.mxu0 %v1363
    %1941 = vmatpush2.bf16.msra.mxu0 %v1362
    %1942 = vmatprep.subr.bf16.mxu0 %v1359
    %1943 = vmatpush2.bf16.msra.mxu0 %v1358
    %1944 = vmatprep.subr.bf16.mxu0 %v1355
    %1945 = vmatpush2.bf16.msra.mxu0 %v1354
    %1946 = vmatprep.subr.bf16.mxu0 %v1351
    %1947 = vmatpush2.bf16.msra.mxu0 %v1350
    %1948 = vmatprep.subr.bf16.mxu0 %v1347
    %1949 = vmatpush2.bf16.msra.mxu0 %v1346
    %1950 = vmatprep.subr.bf16.mxu0 %v1343
    %1951 = vmatpush2.bf16.msra.mxu0 %v1342
    %1952 = vmatprep.mubr.bf16.mxu0 %v1618
    %1953 = vmatmul.mubr.bf16.gmra.mxu0 %v357
    %v1954 = vpop.f32.mrf.mxu0
    %v1955 = vadd.f32 %v1914, %v1954
    %v1956 = vpop.f32.mrf.mxu0
    %v1957 = vadd.f32 %v1916, %v1956
    %v1958 = vpop.f32.mrf.mxu0
    %v1959 = vpop.f32.mrf.mxu0
    %1960 = vdwg.mxu0
    %v1961 = vtanh.pop %v1791
    %v1962 = vtanh.pop %v1793
    %v1963 = vtanh.pop %v1955
    %v1964 = vtanh.pop %v1957
    %v1965 = vpack.c.bf16 %v1961, %v1961
    %v1966 = vpack.c.bf16 %v1962, %v1962
    %v1967 = vpack.c.bf16 %v1963, %v1963
    %v1968 = vpack.c.bf16 %v1964, %v1964
    %v1969 = vld [vmem:[#allocation5] sm:$0xf]
    %v1970 = vld [vmem:[#allocation5 + $0x4] sm:$0xf]
    %v1971 = vld [vmem:[#allocation5 + $0x8] sm:$0xf]
    %v1972 = vld [vmem:[#allocation5 + $0xc] sm:$0xf]
    %v1973 = vld [vmem:[#allocation5 + $0x10] sm:$0xf]
    %v1974 = vld [vmem:[#allocation5 + $0x14] sm:$0xf]
    %v1975 = vld [vmem:[#allocation5 + $0x18] sm:$0xf]
    %v1976 = vld [vmem:[#allocation5 + $0x1c] sm:$0xf]
    %v1977 = vld [vmem:[#allocation5 + $0x20] sm:$0xf]
    %v1978 = vld [vmem:[#allocation5 + $0x24] sm:$0xf]
    %v1979 = vld [vmem:[#allocation5 + $0x28] sm:$0xf]
    %v1980 = vld [vmem:[#allocation5 + $0x2c] sm:$0xf]
    %v1981 = vld [vmem:[#allocation5 + $0x30] sm:$0xf]
    %v1982 = vld [vmem:[#allocation5 + $0x34] sm:$0xf]
    %v1983 = vld [vmem:[#allocation5 + $0x38] sm:$0xf]
    %v1984 = vld [vmem:[#allocation5 + $0x3c] sm:$0xf]
    %v1985 = vld [vmem:[#allocation5 + $0x40] sm:$0xf]
    %v1986 = vld [vmem:[#allocation5 + $0x44] sm:$0xf]
    %v1987 = vld [vmem:[#allocation5 + $0x48] sm:$0xf]
    %v1988 = vld [vmem:[#allocation5 + $0x4c] sm:$0xf]
    %v1989 = vld [vmem:[#allocation5 + $0x50] sm:$0xf]
    %v1990 = vld [vmem:[#allocation5 + $0x54] sm:$0xf]
    %v1991 = vld [vmem:[#allocation5 + $0x58] sm:$0xf]
    %v1992 = vld [vmem:[#allocation5 + $0x5c] sm:$0xf]
    %v1993 = vld [vmem:[#allocation5 + $0x60] sm:$0xf]
    %v1994 = vld [vmem:[#allocation5 + $0x64] sm:$0xf]
    %v1995 = vld [vmem:[#allocation5 + $0x68] sm:$0xf]
    %v1996 = vld [vmem:[#allocation5 + $0x6c] sm:$0xf]
    %v1997 = vld [vmem:[#allocation5 + $0x70] sm:$0xf]
    %v1998 = vld [vmem:[#allocation5 + $0x74] sm:$0xf]
    %v1999 = vld [vmem:[#allocation5 + $0x78] sm:$0xf]
    %v2000 = vld [vmem:[#allocation5 + $0x7c] sm:$0xf]
    %v2001 = vld [vmem:[#allocation5 + $0x80] sm:$0xf]
    %v2002 = vld [vmem:[#allocation5 + $0x84] sm:$0xf]
    %v2003 = vld [vmem:[#allocation5 + $0x88] sm:$0xf]
    %v2004 = vld [vmem:[#allocation5 + $0x8c] sm:$0xf]
    %v2005 = vld [vmem:[#allocation5 + $0x90] sm:$0xf]
    %v2006 = vld [vmem:[#allocation5 + $0x94] sm:$0xf]
    %v2007 = vld [vmem:[#allocation5 + $0x98] sm:$0xf]
    %v2008 = vld [vmem:[#allocation5 + $0x9c] sm:$0xf]
    %v2009 = vld [vmem:[#allocation5 + $0xa0] sm:$0xf]
    %v2010 = vld [vmem:[#allocation5 + $0xa4] sm:$0xf]
    %v2011 = vld [vmem:[#allocation5 + $0xa8] sm:$0xf]
    %v2012 = vld [vmem:[#allocation5 + $0xac] sm:$0xf]
    %v2013 = vld [vmem:[#allocation5 + $0xb0] sm:$0xf]
    %v2014 = vld [vmem:[#allocation5 + $0xb4] sm:$0xf]
    %v2015 = vld [vmem:[#allocation5 + $0xb8] sm:$0xf]
    %v2016 = vld [vmem:[#allocation5 + $0xbc] sm:$0xf]
    %v2017 = vld [vmem:[#allocation5 + $0xc0] sm:$0xf]
    %v2018 = vld [vmem:[#allocation5 + $0xc4] sm:$0xf]
    %v2019 = vld [vmem:[#allocation5 + $0xc8] sm:$0xf]
    %v2020 = vld [vmem:[#allocation5 + $0xcc] sm:$0xf]
    %v2021 = vld [vmem:[#allocation5 + $0xd0] sm:$0xf]
    %v2022 = vld [vmem:[#allocation5 + $0xd4] sm:$0xf]
    %v2023 = vld [vmem:[#allocation5 + $0xd8] sm:$0xf]
    %v2024 = vld [vmem:[#allocation5 + $0xdc] sm:$0xf]
    %v2025 = vld [vmem:[#allocation5 + $0xe0] sm:$0xf]
    %v2026 = vld [vmem:[#allocation5 + $0xe4] sm:$0xf]
    %v2027 = vld [vmem:[#allocation5 + $0xe8] sm:$0xf]
    %v2028 = vld [vmem:[#allocation5 + $0xec] sm:$0xf]
    %v2029 = vld [vmem:[#allocation5 + $0xf0] sm:$0xf]
    %v2030 = vld [vmem:[#allocation5 + $0xf4] sm:$0xf]
    %v2031 = vld [vmem:[#allocation5 + $0xf8] sm:$0xf]
    %v2032 = vld [vmem:[#allocation5 + $0xfc] sm:$0xf]
    %v2033 = vld [vmem:[%s4] sm:$0x1]
    %v2035 = vlaneseq
    %v2036 = vshrl.u32 %v2035, 7
    %v2037 = vsub.s32 0, %v2036
    %v2038 = vrot.slane %v2033, %v2037
    %v2104 = vunpack.c.l.b16 %v1969
    %v2105 = vunpack.c.l.b16 %v1970
    %v2106 = vunpack.c.l.b16 %v1971
    %v2107 = vunpack.c.l.b16 %v1972
    %v2108 = vunpack.c.l.b16 %v1973
    %v2109 = vunpack.c.l.b16 %v1974
    %v2110 = vunpack.c.l.b16 %v1975
    %v2111 = vunpack.c.l.b16 %v1976
    %v2112 = vunpack.c.l.b16 %v1977
    %v2113 = vunpack.c.l.b16 %v1978
    %v2114 = vunpack.c.l.b16 %v1979
    %v2115 = vunpack.c.l.b16 %v1980
    %v2116 = vunpack.c.l.b16 %v1981
    %v2117 = vunpack.c.l.b16 %v1982
    %v2118 = vunpack.c.l.b16 %v1983
    %v2119 = vunpack.c.l.b16 %v1984
    %v2120 = vunpack.c.l.b16 %v1985
    %v2121 = vunpack.c.l.b16 %v1986
    %v2122 = vunpack.c.l.b16 %v1987
    %v2123 = vunpack.c.l.b16 %v1988
    %v2124 = vunpack.c.l.b16 %v1989
    %v2125 = vunpack.c.l.b16 %v1990
    %v2126 = vunpack.c.l.b16 %v1991
    %v2127 = vunpack.c.l.b16 %v1992
    %v2128 = vunpack.c.l.b16 %v1993
    %v2129 = vunpack.c.l.b16 %v1994
    %v2130 = vunpack.c.l.b16 %v1995
    %v2131 = vunpack.c.l.b16 %v1996
    %v2132 = vunpack.c.l.b16 %v1997
    %v2133 = vunpack.c.l.b16 %v1998
    %v2134 = vunpack.c.l.b16 %v1999
    %v2135 = vunpack.c.l.b16 %v2000
    %v2136 = vunpack.c.l.b16 %v2001
    %v2137 = vunpack.c.l.b16 %v2002
    %v2138 = vunpack.c.l.b16 %v2003
    %v2139 = vunpack.c.l.b16 %v2004
    %v2140 = vunpack.c.l.b16 %v2005
    %v2141 = vunpack.c.l.b16 %v2006
    %v2142 = vunpack.c.l.b16 %v2007
    %v2143 = vunpack.c.l.b16 %v2008
    %v2144 = vunpack.c.l.b16 %v2009
    %v2145 = vunpack.c.l.b16 %v2010
    %v2146 = vunpack.c.l.b16 %v2011
    %v2147 = vunpack.c.l.b16 %v2012
    %v2148 = vunpack.c.l.b16 %v2013
    %v2149 = vunpack.c.l.b16 %v2014
    %v2150 = vunpack.c.l.b16 %v2015
    %v2151 = vunpack.c.l.b16 %v2016
    %v2152 = vunpack.c.l.b16 %v2017
    %v2153 = vunpack.c.l.b16 %v2018
    %v2154 = vunpack.c.l.b16 %v2019
    %v2155 = vunpack.c.l.b16 %v2020
    %v2156 = vunpack.c.l.b16 %v2021
    %v2157 = vunpack.c.l.b16 %v2022
    %v2158 = vunpack.c.l.b16 %v2023
    %v2159 = vunpack.c.l.b16 %v2024
    %v2160 = vunpack.c.l.b16 %v2025
    %v2161 = vunpack.c.l.b16 %v2026
    %v2162 = vunpack.c.l.b16 %v2027
    %v2163 = vunpack.c.l.b16 %v2028
    %v2164 = vunpack.c.l.b16 %v2029
    %v2165 = vunpack.c.l.b16 %v2030
    %v2166 = vunpack.c.l.b16 %v2031
    %v2167 = vunpack.c.l.b16 %v2032
    %v2168 = vpack.c.b16 %v2105, %v2104
    %v2169 = vpack.c.b16 %v2107, %v2106
    %v2170 = vpack.c.b16 %v2109, %v2108
    %v2171 = vpack.c.b16 %v2111, %v2110
    %v2172 = vpack.c.b16 %v2113, %v2112
    %v2173 = vpack.c.b16 %v2115, %v2114
    %v2174 = vpack.c.b16 %v2117, %v2116
    %v2175 = vpack.c.b16 %v2119, %v2118
    %v2176 = vpack.c.b16 %v2121, %v2120
    %v2177 = vpack.c.b16 %v2123, %v2122
    %v2178 = vpack.c.b16 %v2125, %v2124
    %v2179 = vpack.c.b16 %v2127, %v2126
    %v2180 = vpack.c.b16 %v2129, %v2128
    %v2181 = vpack.c.b16 %v2131, %v2130
    %v2182 = vpack.c.b16 %v2133, %v2132
    %v2183 = vpack.c.b16 %v2135, %v2134
    %v2184 = vpack.c.b16 %v2137, %v2136
    %v2185 = vpack.c.b16 %v2139, %v2138
    %v2186 = vpack.c.b16 %v2141, %v2140
    %v2187 = vpack.c.b16 %v2143, %v2142
    %v2188 = vpack.c.b16 %v2145, %v2144
    %v2189 = vpack.c.b16 %v2147, %v2146
    %v2190 = vpack.c.b16 %v2149, %v2148
    %v2191 = vpack.c.b16 %v2151, %v2150
    %v2192 = vpack.c.b16 %v2153, %v2152
    %v2193 = vpack.c.b16 %v2155, %v2154
    %v2194 = vpack.c.b16 %v2157, %v2156
    %v2195 = vpack.c.b16 %v2159, %v2158
    %v2196 = vpack.c.b16 %v2161, %v2160
    %v2197 = vpack.c.b16 %v2163, %v2162
    %v2198 = vpack.c.b16 %v2165, %v2164
    %v2199 = vpack.c.b16 %v2167, %v2166
    %2232 = vmatprep.subr.bf16.mxu0 0
    %2233 = vmatpush1.bf16.msra.mxu0 %v2175
    %2234 = vmatprep.subr.bf16.mxu0 0
    %2235 = vmatpush1.bf16.msra.mxu0 %v2174
    %2236 = vmatprep.subr.bf16.mxu0 0
    %2237 = vmatpush1.bf16.msra.mxu0 %v2173
    %2238 = vmatprep.subr.bf16.mxu0 0
    %2239 = vmatpush1.bf16.msra.mxu0 %v2172
    %2240 = vmatprep.subr.bf16.mxu0 0
    %2241 = vmatpush1.bf16.msra.mxu0 %v2171
    %2242 = vmatprep.subr.bf16.mxu0 0
    %2243 = vmatpush1.bf16.msra.mxu0 %v2170
    %2244 = vmatprep.subr.bf16.mxu0 0
    %2245 = vmatpush1.bf16.msra.mxu0 %v2169
    %2246 = vmatprep.subr.bf16.mxu0 0
    %2247 = vmatpush1.bf16.msra.mxu0 %v2168
    %2248 = vmatprep.subr.bf16.mxu0 0
    %2249 = vmatpush2.bf16.msra.mxu0 %v2183
    %2250 = vmatprep.subr.bf16.mxu0 0
    %2251 = vmatpush2.bf16.msra.mxu0 %v2182
    %2252 = vmatprep.subr.bf16.mxu0 0
    %2253 = vmatpush2.bf16.msra.mxu0 %v2181
    %2254 = vmatprep.subr.bf16.mxu0 0
    %2255 = vmatpush2.bf16.msra.mxu0 %v2180
    %2256 = vmatprep.subr.bf16.mxu0 0
    %2257 = vmatpush2.bf16.msra.mxu0 %v2179
    %2258 = vmatprep.subr.bf16.mxu0 0
    %2259 = vmatpush2.bf16.msra.mxu0 %v2178
    %2260 = vmatprep.subr.bf16.mxu0 0
    %2261 = vmatpush2.bf16.msra.mxu0 %v2177
    %2262 = vmatprep.subr.bf16.mxu0 0
    %2263 = vmatpush2.bf16.msra.mxu0 %v2176
    %2264 = vmatprep.mubr.bf16.mxu0 %v1966
    %2265 = vmatmul.mubr.bf16.gmra.mxu0 %v1965
    %v2266 = vpop.f32.mrf.mxu0
    %v2267 = vadd.f32 %v2038, %v2266
    %v2268 = vpop.f32.mrf.mxu0
    %v2269 = vpop.f32.mrf.mxu0
    %v2270 = vpop.f32.mrf.mxu0
    %2271 = vdwg.mxu0
    %2272 = vmatprep.subr.bf16.mxu0 0
    %2273 = vmatpush1.bf16.msra.mxu0 %v2191
    %2274 = vmatprep.subr.bf16.mxu0 0
    %2275 = vmatpush1.bf16.msra.mxu0 %v2190
    %2276 = vmatprep.subr.bf16.mxu0 0
    %2277 = vmatpush1.bf16.msra.mxu0 %v2189
    %2278 = vmatprep.subr.bf16.mxu0 0
    %2279 = vmatpush1.bf16.msra.mxu0 %v2188
    %2280 = vmatprep.subr.bf16.mxu0 0
    %2281 = vmatpush1.bf16.msra.mxu0 %v2187
    %2282 = vmatprep.subr.bf16.mxu0 0
    %2283 = vmatpush1.bf16.msra.mxu0 %v2186
    %2284 = vmatprep.subr.bf16.mxu0 0
    %2285 = vmatpush1.bf16.msra.mxu0 %v2185
    %2286 = vmatprep.subr.bf16.mxu0 0
    %2287 = vmatpush1.bf16.msra.mxu0 %v2184
    %2288 = vmatprep.subr.bf16.mxu0 0
    %2289 = vmatpush2.bf16.msra.mxu0 %v2199
    %2290 = vmatprep.subr.bf16.mxu0 0
    %2291 = vmatpush2.bf16.msra.mxu0 %v2198
    %2292 = vmatprep.subr.bf16.mxu0 0
    %2293 = vmatpush2.bf16.msra.mxu0 %v2197
    %2294 = vmatprep.subr.bf16.mxu0 0
    %2295 = vmatpush2.bf16.msra.mxu0 %v2196
    %2296 = vmatprep.subr.bf16.mxu0 0
    %2297 = vmatpush2.bf16.msra.mxu0 %v2195
    %2298 = vmatprep.subr.bf16.mxu0 0
    %2299 = vmatpush2.bf16.msra.mxu0 %v2194
    %2300 = vmatprep.subr.bf16.mxu0 0
    %2301 = vmatpush2.bf16.msra.mxu0 %v2193
    %2302 = vmatprep.subr.bf16.mxu0 0
    %2303 = vmatpush2.bf16.msra.mxu0 %v2192
    %2304 = vmatprep.mubr.bf16.mxu0 %v1968
    %2305 = vmatmul.mubr.bf16.gmra.mxu0 %v1967
    %v2306 = vpop.f32.mrf.mxu0
    %v2307 = vadd.f32 %v2267, %v2306
    %v2308 = vpop.f32.mrf.mxu0
    %v2309 = vpop.f32.mrf.mxu0
    %v2310 = vpop.f32.mrf.mxu0
    %2311 = vdwg.mxu0
    %v2312 = vtanh.pop %v2307
    %v2313 = vpack.c.bf16 %v2312, %v2312
    %v2314 = vld [vmem:[%s5] sm:$0xf]
    %v2315 = vld [vmem:[%s5 + $0x4] sm:$0xf]
    %v2316 = vld [vmem:[%s5 + $0x8] sm:$0xf]
    %v2317 = vld [vmem:[%s5 + $0xc] sm:$0xf]
    %v2318 = vld [vmem:[%s5 + $0x10] sm:$0xf]
    %v2319 = vld [vmem:[%s5 + $0x14] sm:$0xf]
    %v2320 = vld [vmem:[%s5 + $0x18] sm:$0xf]
    %v2321 = vld [vmem:[%s5 + $0x1c] sm:$0xf]
    %v2322 = vld [vmem:[%s5 + $0x20] sm:$0xf]
    %v2323 = vld [vmem:[%s5 + $0x24] sm:$0xf]
    %v2324 = vld [vmem:[%s5 + $0x28] sm:$0xf]
    %v2325 = vld [vmem:[%s5 + $0x2c] sm:$0xf]
    %v2326 = vld [vmem:[%s5 + $0x30] sm:$0xf]
    %v2327 = vld [vmem:[%s5 + $0x34] sm:$0xf]
    %v2328 = vld [vmem:[%s5 + $0x38] sm:$0xf]
    %v2329 = vld [vmem:[%s5 + $0x3c] sm:$0xf]
    %v2330 = vld [vmem:[%s6] sm:$0x1]
    %v2332 = vlaneseq
    %v2333 = vshrl.u32 %v2332, 7
    %v2334 = vsub.s32 0, %v2333
    %v2335 = vrot.slane %v2330, %v2334
    %v2353 = vunpack.c.l.b16 %v2314
    %v2354 = vunpack.c.l.b16 %v2315
    %v2355 = vunpack.c.l.b16 %v2316
    %v2356 = vunpack.c.l.b16 %v2317
    %v2357 = vunpack.c.l.b16 %v2318
    %v2358 = vunpack.c.l.b16 %v2319
    %v2359 = vunpack.c.l.b16 %v2320
    %v2360 = vunpack.c.l.b16 %v2321
    %v2361 = vunpack.c.l.b16 %v2322
    %v2362 = vunpack.c.l.b16 %v2323
    %v2363 = vunpack.c.l.b16 %v2324
    %v2364 = vunpack.c.l.b16 %v2325
    %v2365 = vunpack.c.l.b16 %v2326
    %v2366 = vunpack.c.l.b16 %v2327
    %v2367 = vunpack.c.l.b16 %v2328
    %v2368 = vunpack.c.l.b16 %v2329
    %v2369 = vpack.c.b16 %v2354, %v2353
    %v2370 = vpack.c.b16 %v2356, %v2355
    %v2371 = vpack.c.b16 %v2358, %v2357
    %v2372 = vpack.c.b16 %v2360, %v2359
    %v2373 = vpack.c.b16 %v2362, %v2361
    %v2374 = vpack.c.b16 %v2364, %v2363
    %v2375 = vpack.c.b16 %v2366, %v2365
    %v2376 = vpack.c.b16 %v2368, %v2367
    %2385 = vmatprep.subr.bf16.mxu0 0
    %2386 = vmatpush1.bf16.msra.mxu0 %v2376
    %2387 = vmatprep.subr.bf16.mxu0 0
    %2388 = vmatpush1.bf16.msra.mxu0 %v2375
    %2389 = vmatprep.subr.bf16.mxu0 0
    %2390 = vmatpush1.bf16.msra.mxu0 %v2374
    %2391 = vmatprep.subr.bf16.mxu0 0
    %2392 = vmatpush1.bf16.msra.mxu0 %v2373
    %2393 = vmatprep.subr.bf16.mxu0 0
    %2394 = vmatpush1.bf16.msra.mxu0 %v2372
    %2395 = vmatprep.subr.bf16.mxu0 0
    %2396 = vmatpush1.bf16.msra.mxu0 %v2371
    %2397 = vmatprep.subr.bf16.mxu0 0
    %2398 = vmatpush1.bf16.msra.mxu0 %v2370
    %2399 = vmatprep.subr.bf16.mxu0 0
    %2400 = vmatpush1.bf16.msra.mxu0 %v2369
    %2401 = vmatprep.subr.bf16.mxu0 0
    %2402 = vmatpush2.bf16.msra.mxu0 0
    %2403 = vmatprep.subr.bf16.mxu0 0
    %2404 = vmatpush2.bf16.msra.mxu0 0
    %2405 = vmatprep.subr.bf16.mxu0 0
    %2406 = vmatpush2.bf16.msra.mxu0 0
    %2407 = vmatprep.subr.bf16.mxu0 0
    %2408 = vmatpush2.bf16.msra.mxu0 0
    %2409 = vmatprep.subr.bf16.mxu0 0
    %2410 = vmatpush2.bf16.msra.mxu0 0
    %2411 = vmatprep.subr.bf16.mxu0 0
    %2412 = vmatpush2.bf16.msra.mxu0 0
    %2413 = vmatprep.subr.bf16.mxu0 0
    %2414 = vmatpush2.bf16.msra.mxu0 0
    %2415 = vmatprep.subr.bf16.mxu0 0
    %2416 = vmatpush2.bf16.msra.mxu0 0
    %2417 = vmatprep.mubr.bf16.mxu0 0
    %2418 = vmatmul.mubr.bf16.gmra.mxu0 %v2313
    %v2419 = vpop.f32.mrf.mxu0
    %v2420 = vadd.f32 %v2335, %v2419
    %v2421 = vpop.f32.mrf.mxu0
    %v2422 = vpop.f32.mrf.mxu0
    %v2423 = vpop.f32.mrf.mxu0
    %2424 = vdwg.mxu0
    %v2425 = vtanh.pop %v2420
    %v2426 = vpack.c.bf16 %v2425, %v2425
    %v2427 = vld [vmem:[%s7] sm:$0xf]
    %v2428 = vld [vmem:[%s7 + $0x4] sm:$0xf]
    %v2429 = vld [vmem:[%s7 + $0x8] sm:$0xf]
    %v2430 = vld [vmem:[%s7 + $0xc] sm:$0xf]
    %v2431 = vld [vmem:[%s7 + $0x10] sm:$0xf]
    %v2432 = vld [vmem:[%s7 + $0x14] sm:$0xf]
    %v2433 = vld [vmem:[%s7 + $0x18] sm:$0xf]
    %v2434 = vld [vmem:[%s7 + $0x1c] sm:$0xf]
    %v2435 = vld [vmem:[#allocation2] sm:$0x1]
    %v2437 = vlaneseq
    %v2438 = vshrl.u32 %v2437, 7
    %v2439 = vsub.s32 0, %v2438
    %v2440 = vrot.slane %v2435, %v2439
    %v2450 = vunpack.c.l.b16 %v2427
    %v2451 = vunpack.c.l.b16 %v2428
    %v2452 = vunpack.c.l.b16 %v2429
    %v2453 = vunpack.c.l.b16 %v2430
    %v2454 = vunpack.c.l.b16 %v2431
    %v2455 = vunpack.c.l.b16 %v2432
    %v2456 = vunpack.c.l.b16 %v2433
    %v2457 = vunpack.c.l.b16 %v2434
    %v2458 = vpack.c.b16 %v2451, %v2450
    %v2459 = vpack.c.b16 %v2453, %v2452
    %v2460 = vpack.c.b16 %v2455, %v2454
    %v2461 = vpack.c.b16 %v2457, %v2456
    %vm2466 = vcmask 523264
    %v2468 = vsel %vm2466, %v2426, 0
    %2470 = vmatprep.subr.bf16.mxu0 0
    %2471 = vmatpush1.bf16.msra.mxu0 0
    %2472 = vmatprep.subr.bf16.mxu0 0
    %2473 = vmatpush1.bf16.msra.mxu0 0
    %2474 = vmatprep.subr.bf16.mxu0 0
    %2475 = vmatpush1.bf16.msra.mxu0 0
    %2476 = vmatprep.subr.bf16.mxu0 0
    %2477 = vmatpush1.bf16.msra.mxu0 0
    %2478 = vmatprep.subr.bf16.mxu0 0
    %2479 = vmatpush1.bf16.msra.mxu0 %v2461
    %2480 = vmatprep.subr.bf16.mxu0 0
    %2481 = vmatpush1.bf16.msra.mxu0 %v2460
    %2482 = vmatprep.subr.bf16.mxu0 0
    %2483 = vmatpush1.bf16.msra.mxu0 %v2459
    %2484 = vmatprep.subr.bf16.mxu0 0
    %2485 = vmatpush1.bf16.msra.mxu0 %v2458
    %2486 = vmatprep.subr.bf16.mxu0 0
    %2487 = vmatpush2.bf16.msra.mxu0 0
    %2488 = vmatprep.subr.bf16.mxu0 0
    %2489 = vmatpush2.bf16.msra.mxu0 0
    %2490 = vmatprep.subr.bf16.mxu0 0
    %2491 = vmatpush2.bf16.msra.mxu0 0
    %2492 = vmatprep.subr.bf16.mxu0 0
    %2493 = vmatpush2.bf16.msra.mxu0 0
    %2494 = vmatprep.subr.bf16.mxu0 0
    %2495 = vmatpush2.bf16.msra.mxu0 0
    %2496 = vmatprep.subr.bf16.mxu0 0
    %2497 = vmatpush2.bf16.msra.mxu0 0
    %2498 = vmatprep.subr.bf16.mxu0 0
    %2499 = vmatpush2.bf16.msra.mxu0 0
    %2500 = vmatprep.subr.bf16.mxu0 0
    %2501 = vmatpush2.bf16.msra.mxu0 0
    %2502 = vmatprep.mubr.bf16.mxu0 0
    %2503 = vmatmul.mubr.bf16.gmra.mxu0 %v2468
    %v2504 = vpop.f32.mrf.mxu0
    %v2505 = vadd.f32 %v2440, %v2504
    %v2506 = vpop.f32.mrf.mxu0
    %v2507 = vpop.f32.mrf.mxu0
    %v2508 = vpop.f32.mrf.mxu0
    %2509 = vdwg.mxu0
    %v2510 = vxor.u32 %v2505, 2147483648
    %v2511 = vmul.f32 %v2510, 1.442695
    %v2512 = vpow.pop %v2511
    %v2513 = vadd.f32 %v2512, 1.0
    %v2514 = vrcp.pop %v2513
    %v2515 = vmul.f32 1.0, %v2514
    %v2516 = vsub.f32 1.0, %v2515
    %vm2517 = vcmask 7168
    %2518 = vst.msk [vmem:[%s9] sm:$0xff] %vm2517, %v2516
    %2520 = vrot.lane.b32.xlu0 %v2515, 1
    %v2521 = vpop.permute.xlu0 %2520
    %vm2523 = vcmask 15368
    %2524 = vst.msk [vmem:[%s9] sm:$0xff] %vm2523, %v2521
    // Predicated region
    $region46: #{tpu_custom_call.1} parent=1 // pred_check
      _
    $region47: #{tpu_custom_call.1} parent=1 // pred_check_branch
      %2526 = sbr.rel (0) target = $region49
    $region48: #{tpu_custom_call.1} parent=1 // pred_region
      _
    $region49: #{tpu_custom_call.1} parent=1 // pred_fallthru
      _
    // Predicated region
    $region50: #{tpu_custom_call.1} parent=1 // pred_check
      _
    $region51: #{tpu_custom_call.1} parent=1 // pred_check_branch
      %2528 = sbr.rel (0) target = $region53
    $region52: #{tpu_custom_call.1} parent=1 // pred_region
      _
    $region53: #{tpu_custom_call.1} parent=1 // pred_fallthru
      _
    %2529 = vsyncpa [#allocation4], 1
    %2530 = vsyncpa [#allocation6], 1

</llo_original>
